<compile_context>
chip_gen: v7x
topology: tpu7x:2x2x1
jax: 0.10.0
libtpu: 0.0.40
codegen_flags: <defaults>
</compile_context>

<pallas_src>
import jax
import jax.numpy as jnp
from jax.experimental import pallas as pl
from jax.experimental.pallas import tpu as pltpu

TB = 16  # images per grid step (sublane dim of every in-kernel tensor)


# ----------------------------------------------------------------------------- kernel

def _lenet_fused_kernel(x_ref, t1_ref, b1_ref, t2_ref, b2_ref,
                        w1_ref, bf1_ref, w2_ref, bf2_ref, o_ref):
    """Fused LeNet forward for TB images.

    x_ref : (4, 9, TB, 28) bf16   H-mod-4 polyphase image rows (batch in sublanes)
    t1_ref: (140, 240)    bf16    conv1 lane-Toeplitz matrix, cols = (d1, pw, c)
    b1_ref: (1, 1, 120)   f32     conv1 bias tiled over pw
    t2_ref: (600, 160)    bf16    conv2 lane-Toeplitz matrix, cols = (e1, qw, c2)
    b2_ref: (1, 1, 80)    f32     conv2 bias tiled over qw
    w1_ref: (320, 50)     bf16    fc1 weight, rows permuted to (qh, qw, c2)
    bf1_ref:(1, 50)       f32
    w2_ref: (50, C)       bf16    fc2 weight
    bf2_ref:(1, C)        f32
    o_ref : (TB, C)       f32
    """
    f32 = jnp.float32
    bf16 = jnp.bfloat16

    x = x_ref[...]                                            # (4, 9, TB, 28) bf16
    # 8 row-band slices: xs[t][u, b, iw] = image[b, 4u + t, iw]
    xs = [x[t % 4, t // 4: t // 4 + 8] for t in range(8)]     # each (8, TB, 28)

    # ---- conv1 + maxpool(2) + relu -------------------------------------------------
    # one stacked matmul over the 4 bases beta = 2*(row parity) + (H pool shift)
    lhs1 = jnp.stack(
        [jnp.concatenate([xs[beta + kh] for kh in range(5)], axis=-1)   # (8, TB, 140)
         for beta in range(4)],
        axis=0)                                                         # (4, 8, TB, 140)
    z1 = jnp.dot(lhs1.reshape(4 * 8 * TB, 140), t1_ref[...],
                 preferred_element_type=f32)                            # (512, 240)
    z1 = z1.reshape(4, 8, TB, 240)
    zw = jnp.maximum(z1[..., :120], z1[..., 120:])          # max over W pool shift d1
    b1v = b1_ref[...]                                        # (1, 1, 120)
    # max over H pool shift d0, then bias + relu; r = output-row parity
    a1 = [jnp.maximum(jnp.maximum(zw[2 * r], zw[2 * r + 1]) + b1v, 0.0)  # (8, TB, 120)
          for r in range(2)]
    # pad the pooled-row dim so the level-2 slices stay in range (padded rows are
    # garbage/zero and never reach valid outputs)
    zpad = jnp.zeros((8, TB, 120), f32)
    a1 = [jnp.concatenate([a, zpad], axis=0) for a in a1]                # (16, TB, 120)

    # ---- conv2 + (dropout2d = identity) + maxpool(2) + relu --------------------------
    asl = [a1[m % 2][m // 2: m // 2 + 8] for m in range(6)]              # (8, TB, 120)
    lhs2 = jnp.stack(
        [jnp.concatenate([asl[e0 + kh] for kh in range(5)], axis=-1)     # (8, TB, 600)
         for e0 in range(2)],
        axis=0)                                                          # (2, 8, TB, 600)
    z2 = jnp.dot(lhs2.reshape(2 * 8 * TB, 600).astype(bf16), t2_ref[...],
                 preferred_element_type=f32)                             # (256, 160)
    z2 = z2.reshape(2, 8, TB, 160)
    q = jnp.maximum(z2[..., :80], z2[..., 80:])              # max over W pool shift e1
    act2 = jnp.maximum(jnp.maximum(q[0], q[1]) + b2_ref[...], 0.0)       # (8, TB, 80)

    # ---- flatten (qh, qw, c2) -> 320 lanes, fc1 + relu, fc2 --------------------------
    feat = jnp.concatenate([act2[qh] for qh in range(4)], axis=-1)       # (TB, 320)
    h = jnp.dot(feat.astype(bf16), w1_ref[...],
                preferred_element_type=f32) + bf1_ref[...]               # (TB, 50)
    h = jnp.maximum(h, 0.0)
    # TODO(synk): F.dropout / nn.Dropout2d implemented for eval mode only (identity).
    out = jnp.dot(h.astype(bf16), w2_ref[...],
                  preferred_element_type=f32) + bf2_ref[...]             # (TB, C)
    o_ref[...] = out.astype(o_ref.dtype)


# ----------------------------------------------------------------------------- wrapper

def lenet_forward(params, x_nchw):
    B = x_nchw.shape[0]
    C = params["fc2_w"].shape[0]
    bp = -(-B // TB) * TB  # batch padded to a multiple of TB

    # -- input: H-mod-4 polyphase layout, batch in the sublane dim --------------------
    x = x_nchw.reshape(B, 28, 28).astype(jnp.float32)
    x = jnp.pad(x, ((0, bp - B), (0, 8), (0, 0)))                 # (bp, 36, 28)
    x_h4 = x.reshape(bp, 9, 4, 28).transpose(2, 1, 0, 3)          # (4, 9, bp, 28)
    x_h4 = x_h4.astype(jnp.bfloat16)

    # -- conv1 as a lane-Toeplitz matrix:  T1[kh*28+iw, d1*120+pw*10+c] ----------------
    w1k = params["conv1_w"].reshape(10, 5, 5).transpose(1, 2, 0)  # (kh, kw, c)
    iw = jnp.arange(28)
    d1 = jnp.arange(2)
    pw = jnp.arange(12)
    kwi = iw[:, None, None] - 2 * pw[None, None, :] - d1[None, :, None]   # (28, 2, 12)
    m1 = (kwi >= 0) & (kwi < 5)
    t1 = jnp.where(m1[None, :, :, :, None], w1k[:, jnp.clip(kwi, 0, 4), :], 0.0)
    t1 = t1.reshape(140, 240).astype(jnp.bfloat16)

    # -- conv2 as a lane-Toeplitz matrix:  T2[kh*120+pw*10+c, e1*80+qw*20+c2] ----------
    w2k = params["conv2_w"].transpose(2, 3, 1, 0)                 # (kh, kw, c, c2)
    pw2 = jnp.arange(12)
    e1 = jnp.arange(2)
    qw = jnp.arange(4)
    kwi2 = pw2[:, None, None] - 2 * qw[None, None, :] - e1[None, :, None]  # (12, 2, 4)
    m2 = (kwi2 >= 0) & (kwi2 < 5)
    t2 = jnp.where(m2[None, :, :, :, None, None],
                   w2k[:, jnp.clip(kwi2, 0, 4), :, :], 0.0)       # (5,12,2,4,10,20)
    t2 = t2.transpose(0, 1, 4, 2, 3, 5).reshape(600, 160).astype(jnp.bfloat16)

    b1r = jnp.tile(params["conv1_b"], 12).reshape(1, 1, 120).astype(jnp.float32)
    b2r = jnp.tile(params["conv2_b"], 4).reshape(1, 1, 80).astype(jnp.float32)

    # -- fc weights: fold the PyTorch (C,H,W) flatten into a (qh, qw, c2) row order ----
    w1p = params["fc1_w"].reshape(50, 20, 4, 4).transpose(2, 3, 1, 0).reshape(320, 50)
    w1p = w1p.astype(jnp.bfloat16)
    bf1 = params["fc1_b"].reshape(1, 50).astype(jnp.float32)
    w2p = params["fc2_w"].T.astype(jnp.bfloat16)                  # (50, C)
    bf2 = params["fc2_b"].reshape(1, C).astype(jnp.float32)

    out = pl.pallas_call(
        _lenet_fused_kernel,
        out_shape=jax.ShapeDtypeStruct((bp, C), jnp.float32),
        grid=(bp // TB,),
        in_specs=[
            pl.BlockSpec((4, 9, TB, 28), lambda i: (0, 0, i, 0)),
            pl.BlockSpec((140, 240), lambda i: (0, 0)),
            pl.BlockSpec((1, 1, 120), lambda i: (0, 0, 0)),
            pl.BlockSpec((600, 160), lambda i: (0, 0)),
            pl.BlockSpec((1, 1, 80), lambda i: (0, 0, 0)),
            pl.BlockSpec((320, 50), lambda i: (0, 0)),
            pl.BlockSpec((1, 50), lambda i: (0, 0)),
            pl.BlockSpec((50, C), lambda i: (0, 0)),
            pl.BlockSpec((1, C), lambda i: (0, 0)),
        ],
        out_specs=pl.BlockSpec((TB, C), lambda i: (i, 0)),
        compiler_params=pltpu.CompilerParams(dimension_semantics=("parallel",)),
    )(x_h4, t1, b1r, t2, b2r, w1p, bf1, w2p, bf2)
    return out[:B]


# ----------------------------------------------------------------------------- reference

def lenet_reference(params, x_nchw):
    """Pure-JAX (f32) reference mirroring the PyTorch forward (dropout = identity)."""
    dn = ("NCHW", "OIHW", "NCHW")
    y = jax.lax.conv_general_dilated(x_nchw, params["conv1_w"], (1, 1), "VALID",
                                     dimension_numbers=dn)
    y = y + params["conv1_b"][None, :, None, None]
    y = jax.lax.reduce_window(y, -jnp.inf, jax.lax.max, (1, 1, 2, 2), (1, 1, 2, 2),
                              "VALID")
    y = jnp.maximum(y, 0.0)
    y = jax.lax.conv_general_dilated(y, params["conv2_w"], (1, 1), "VALID",
                                     dimension_numbers=dn)
    y = y + params["conv2_b"][None, :, None, None]
    y = jax.lax.reduce_window(y, -jnp.inf, jax.lax.max, (1, 1, 2, 2), (1, 1, 2, 2),
                              "VALID")
    y = jnp.maximum(y, 0.0)
    f = y.reshape(y.shape[0], 320)
    h = jnp.maximum(f @ params["fc1_w"].T + params["fc1_b"], 0.0)
    return h @ params["fc2_w"].T + params["fc2_b"]


def init_lenet_params(key, num_classes):
    """Deterministic init mirroring PyTorch defaults (uniform +/- 1/sqrt(fan_in))."""
    k = jax.random.split(key, 8)

    def u(kk, shape, fan_in):
        bound = 1.0 / jnp.sqrt(float(fan_in))
        return jax.random.uniform(kk, shape, jnp.float32, -bound, bound)

    return {
        "conv1_w": u(k[0], (10, 1, 5, 5), 1 * 5 * 5),
        "conv1_b": u(k[1], (10,), 1 * 5 * 5),
        "conv2_w": u(k[2], (20, 10, 5, 5), 10 * 5 * 5),
        "conv2_b": u(k[3], (20,), 10 * 5 * 5),
        "fc1_w": u(k[4], (50, 320), 320),
        "fc1_b": u(k[5], (50,), 320),
        "fc2_w": u(k[6], (num_classes, 50), 50),
        "fc2_b": u(k[7], (num_classes,), 50),
    }


if __name__ == "__main__":
    key = jax.random.PRNGKey(0)
    pkey, xkey = jax.random.split(key)

    num_classes = 10
    params = init_lenet_params(pkey, num_classes)
    # LeNet's view(-1, 320) implies 28x28 single-channel inputs; small batch.
    x = jax.random.normal(xkey, (2, 1, 28, 28), jnp.float32)

    out = jax.jit(lenet_forward)(params, x)
    jax.block_until_ready(out)

    assert out.shape == (2, num_classes), out.shape
    assert jnp.all(jnp.isfinite(out))

    ref = lenet_reference(params, x)
    err = float(jnp.max(jnp.abs(out - ref)))
    assert err < 5e-2, f"mismatch vs reference: max abs err = {err}"

    print("KERNEL_OK")
</pallas_src>

<mosaic_0001>
module attributes {stable_mosaic.version = 11 : i64} {
  func.func @_lenet_fused_kernel(%arg0: i32, %arg1: memref<4x9x16x28xbf16, #tpu.memory_space<vmem>>, %arg2: memref<140x240xbf16, #tpu.memory_space<vmem>>, %arg3: memref<1x1x120xf32, #tpu.memory_space<vmem>>, %arg4: memref<600x160xbf16, #tpu.memory_space<vmem>>, %arg5: memref<1x1x80xf32, #tpu.memory_space<vmem>>, %arg6: memref<320x50xbf16, #tpu.memory_space<vmem>>, %arg7: memref<1x50xf32, #tpu.memory_space<vmem>>, %arg8: memref<50x10xbf16, #tpu.memory_space<vmem>>, %arg9: memref<1x10xf32, #tpu.memory_space<vmem>>, %arg10: memref<16x10xf32, #tpu.memory_space<vmem>>) attributes {dimension_semantics = [#tpu.dimension_semantics<parallel>], iteration_bounds = array<i64: 1>, scalar_prefetch = 0 : i64, scratch_operands = 0 : i64, tpu.core_type = #tpu.core_type<tc>, window_params = [{transform_indices = @transform_0, window_bounds = array<i64: 4, 9, 16, 28>}, {pipeline_mode = #tpu.pipeline_mode<synchronous>, transform_indices = @transform_1, window_bounds = array<i64: 140, 240>}, {pipeline_mode = #tpu.pipeline_mode<synchronous>, transform_indices = @transform_2, window_bounds = array<i64: 1, 1, 120>}, {pipeline_mode = #tpu.pipeline_mode<synchronous>, transform_indices = @transform_3, window_bounds = array<i64: 600, 160>}, {pipeline_mode = #tpu.pipeline_mode<synchronous>, transform_indices = @transform_4, window_bounds = array<i64: 1, 1, 80>}, {pipeline_mode = #tpu.pipeline_mode<synchronous>, transform_indices = @transform_5, window_bounds = array<i64: 320, 50>}, {pipeline_mode = #tpu.pipeline_mode<synchronous>, transform_indices = @transform_6, window_bounds = array<i64: 1, 50>}, {pipeline_mode = #tpu.pipeline_mode<synchronous>, transform_indices = @transform_7, window_bounds = array<i64: 50, 10>}, {pipeline_mode = #tpu.pipeline_mode<synchronous>, transform_indices = @transform_8, window_bounds = array<i64: 1, 10>}, {transform_indices = @transform_9, window_bounds = array<i64: 16, 10>}]} {
    %c0 = arith.constant 0 : index
    %c0_0 = arith.constant 0 : index
    %c0_1 = arith.constant 0 : index
    %c0_2 = arith.constant 0 : index
    %0 = vector.load %arg1[%c0, %c0_0, %c0_1, %c0_2] : memref<4x9x16x28xbf16, #tpu.memory_space<vmem>>, vector<4x9x16x28xbf16>
    %1 = vector.extract_strided_slice %0 {offsets = [0, 0, 0, 0], sizes = [1, 8, 16, 28], strides = [1, 1, 1, 1]} : vector<4x9x16x28xbf16> to vector<1x8x16x28xbf16>
    %2 = vector.shape_cast %1 : vector<1x8x16x28xbf16> to vector<8x16x28xbf16>
    %3 = vector.extract_strided_slice %0 {offsets = [1, 0, 0, 0], sizes = [1, 8, 16, 28], strides = [1, 1, 1, 1]} : vector<4x9x16x28xbf16> to vector<1x8x16x28xbf16>
    %4 = vector.shape_cast %3 : vector<1x8x16x28xbf16> to vector<8x16x28xbf16>
    %5 = vector.extract_strided_slice %0 {offsets = [2, 0, 0, 0], sizes = [1, 8, 16, 28], strides = [1, 1, 1, 1]} : vector<4x9x16x28xbf16> to vector<1x8x16x28xbf16>
    %6 = vector.shape_cast %5 : vector<1x8x16x28xbf16> to vector<8x16x28xbf16>
    %7 = vector.extract_strided_slice %0 {offsets = [3, 0, 0, 0], sizes = [1, 8, 16, 28], strides = [1, 1, 1, 1]} : vector<4x9x16x28xbf16> to vector<1x8x16x28xbf16>
    %8 = vector.shape_cast %7 : vector<1x8x16x28xbf16> to vector<8x16x28xbf16>
    %9 = vector.extract_strided_slice %0 {offsets = [0, 1, 0, 0], sizes = [1, 8, 16, 28], strides = [1, 1, 1, 1]} : vector<4x9x16x28xbf16> to vector<1x8x16x28xbf16>
    %10 = vector.shape_cast %9 : vector<1x8x16x28xbf16> to vector<8x16x28xbf16>
    %11 = vector.extract_strided_slice %0 {offsets = [1, 1, 0, 0], sizes = [1, 8, 16, 28], strides = [1, 1, 1, 1]} : vector<4x9x16x28xbf16> to vector<1x8x16x28xbf16>
    %12 = vector.shape_cast %11 : vector<1x8x16x28xbf16> to vector<8x16x28xbf16>
    %13 = vector.extract_strided_slice %0 {offsets = [2, 1, 0, 0], sizes = [1, 8, 16, 28], strides = [1, 1, 1, 1]} : vector<4x9x16x28xbf16> to vector<1x8x16x28xbf16>
    %14 = vector.shape_cast %13 : vector<1x8x16x28xbf16> to vector<8x16x28xbf16>
    %15 = vector.extract_strided_slice %0 {offsets = [3, 1, 0, 0], sizes = [1, 8, 16, 28], strides = [1, 1, 1, 1]} : vector<4x9x16x28xbf16> to vector<1x8x16x28xbf16>
    %16 = vector.shape_cast %15 : vector<1x8x16x28xbf16> to vector<8x16x28xbf16>
    %17 = tpu.concatenate %2, %4, %6, %8, %10 in 2 : vector<8x16x28xbf16>, vector<8x16x28xbf16>, vector<8x16x28xbf16>, vector<8x16x28xbf16>, vector<8x16x28xbf16> -> vector<8x16x140xbf16>
    %18 = tpu.concatenate %4, %6, %8, %10, %12 in 2 : vector<8x16x28xbf16>, vector<8x16x28xbf16>, vector<8x16x28xbf16>, vector<8x16x28xbf16>, vector<8x16x28xbf16> -> vector<8x16x140xbf16>
    %19 = tpu.concatenate %6, %8, %10, %12, %14 in 2 : vector<8x16x28xbf16>, vector<8x16x28xbf16>, vector<8x16x28xbf16>, vector<8x16x28xbf16>, vector<8x16x28xbf16> -> vector<8x16x140xbf16>
    %20 = tpu.concatenate %8, %10, %12, %14, %16 in 2 : vector<8x16x28xbf16>, vector<8x16x28xbf16>, vector<8x16x28xbf16>, vector<8x16x28xbf16>, vector<8x16x28xbf16> -> vector<8x16x140xbf16>
    %21 = vector.shape_cast %17 : vector<8x16x140xbf16> to vector<1x8x16x140xbf16>
    %22 = vector.shape_cast %18 : vector<8x16x140xbf16> to vector<1x8x16x140xbf16>
    %23 = vector.shape_cast %19 : vector<8x16x140xbf16> to vector<1x8x16x140xbf16>
    %24 = vector.shape_cast %20 : vector<8x16x140xbf16> to vector<1x8x16x140xbf16>
    %25 = tpu.concatenate %21, %22, %23, %24 in 0 : vector<1x8x16x140xbf16>, vector<1x8x16x140xbf16>, vector<1x8x16x140xbf16>, vector<1x8x16x140xbf16> -> vector<4x8x16x140xbf16>
    %26 = vector.shape_cast %25 : vector<4x8x16x140xbf16> to vector<512x140xbf16>
    %c0_3 = arith.constant 0 : index
    %c0_4 = arith.constant 0 : index
    %27 = vector.load %arg2[%c0_3, %c0_4] : memref<140x240xbf16, #tpu.memory_space<vmem>>, vector<140x240xbf16>
    %cst = arith.constant dense<0.000000e+00> : vector<512x240xf32>
    %28 = tpu.matmul %26, %27, %cst {dimension_numbers = #tpu.dot_dimension_numbers<[1], [0], [0], [1], [0, 0, 1, 1], [], []>} : vector<512x140xbf16>, vector<140x240xbf16>, vector<512x240xf32> -> vector<512x240xf32>
    %29 = vector.shape_cast %28 : vector<512x240xf32> to vector<4x8x16x240xf32>
    %30 = vector.extract_strided_slice %29 {offsets = [0, 0, 0, 0], sizes = [4, 8, 16, 120], strides = [1, 1, 1, 1]} : vector<4x8x16x240xf32> to vector<4x8x16x120xf32>
    %31 = vector.extract_strided_slice %29 {offsets = [0, 0, 0, 120], sizes = [4, 8, 16, 120], strides = [1, 1, 1, 1]} : vector<4x8x16x240xf32> to vector<4x8x16x120xf32>
    %32 = arith.maximumf %30, %31 : vector<4x8x16x120xf32>
    %c0_5 = arith.constant 0 : index
    %c0_6 = arith.constant 0 : index
    %c0_7 = arith.constant 0 : index
    %33 = vector.load %arg3[%c0_5, %c0_6, %c0_7] : memref<1x1x120xf32, #tpu.memory_space<vmem>>, vector<1x1x120xf32>
    %34 = vector.extract_strided_slice %32 {offsets = [0, 0, 0, 0], sizes = [1, 8, 16, 120], strides = [1, 1, 1, 1]} : vector<4x8x16x120xf32> to vector<1x8x16x120xf32>
    %35 = vector.shape_cast %34 : vector<1x8x16x120xf32> to vector<8x16x120xf32>
    %36 = vector.extract_strided_slice %32 {offsets = [1, 0, 0, 0], sizes = [1, 8, 16, 120], strides = [1, 1, 1, 1]} : vector<4x8x16x120xf32> to vector<1x8x16x120xf32>
    %37 = vector.shape_cast %36 : vector<1x8x16x120xf32> to vector<8x16x120xf32>
    %38 = arith.maximumf %35, %37 : vector<8x16x120xf32>
    %39 = vector.broadcast %33 : vector<1x1x120xf32> to vector<8x16x120xf32>
    %40 = arith.addf %38, %39 : vector<8x16x120xf32>
    %cst_8 = arith.constant 0.000000e+00 : f32
    %41 = vector.broadcast %cst_8 : f32 to vector<8x16x120xf32>
    %42 = arith.maximumf %40, %41 : vector<8x16x120xf32>
    %43 = vector.extract_strided_slice %32 {offsets = [2, 0, 0, 0], sizes = [1, 8, 16, 120], strides = [1, 1, 1, 1]} : vector<4x8x16x120xf32> to vector<1x8x16x120xf32>
    %44 = vector.shape_cast %43 : vector<1x8x16x120xf32> to vector<8x16x120xf32>
    %45 = vector.extract_strided_slice %32 {offsets = [3, 0, 0, 0], sizes = [1, 8, 16, 120], strides = [1, 1, 1, 1]} : vector<4x8x16x120xf32> to vector<1x8x16x120xf32>
    %46 = vector.shape_cast %45 : vector<1x8x16x120xf32> to vector<8x16x120xf32>
    %47 = arith.maximumf %44, %46 : vector<8x16x120xf32>
    %48 = vector.broadcast %33 : vector<1x1x120xf32> to vector<8x16x120xf32>
    %49 = arith.addf %47, %48 : vector<8x16x120xf32>
    %cst_9 = arith.constant 0.000000e+00 : f32
    %50 = vector.broadcast %cst_9 : f32 to vector<8x16x120xf32>
    %51 = arith.maximumf %49, %50 : vector<8x16x120xf32>
    %cst_10 = arith.constant 0.000000e+00 : f32
    %52 = vector.broadcast %cst_10 : f32 to vector<8x16x120xf32>
    %53 = tpu.concatenate %42, %52 in 0 : vector<8x16x120xf32>, vector<8x16x120xf32> -> vector<16x16x120xf32>
    %54 = tpu.concatenate %51, %52 in 0 : vector<8x16x120xf32>, vector<8x16x120xf32> -> vector<16x16x120xf32>
    %55 = vector.extract_strided_slice %53 {offsets = [0, 0, 0], sizes = [8, 16, 120], strides = [1, 1, 1]} : vector<16x16x120xf32> to vector<8x16x120xf32>
    %56 = vector.extract_strided_slice %54 {offsets = [0, 0, 0], sizes = [8, 16, 120], strides = [1, 1, 1]} : vector<16x16x120xf32> to vector<8x16x120xf32>
    %57 = vector.extract_strided_slice %53 {offsets = [1, 0, 0], sizes = [8, 16, 120], strides = [1, 1, 1]} : vector<16x16x120xf32> to vector<8x16x120xf32>
    %58 = vector.extract_strided_slice %54 {offsets = [1, 0, 0], sizes = [8, 16, 120], strides = [1, 1, 1]} : vector<16x16x120xf32> to vector<8x16x120xf32>
    %59 = vector.extract_strided_slice %53 {offsets = [2, 0, 0], sizes = [8, 16, 120], strides = [1, 1, 1]} : vector<16x16x120xf32> to vector<8x16x120xf32>
    %60 = vector.extract_strided_slice %54 {offsets = [2, 0, 0], sizes = [8, 16, 120], strides = [1, 1, 1]} : vector<16x16x120xf32> to vector<8x16x120xf32>
    %61 = tpu.concatenate %55, %56, %57, %58, %59 in 2 : vector<8x16x120xf32>, vector<8x16x120xf32>, vector<8x16x120xf32>, vector<8x16x120xf32>, vector<8x16x120xf32> -> vector<8x16x600xf32>
    %62 = tpu.concatenate %56, %57, %58, %59, %60 in 2 : vector<8x16x120xf32>, vector<8x16x120xf32>, vector<8x16x120xf32>, vector<8x16x120xf32>, vector<8x16x120xf32> -> vector<8x16x600xf32>
    %63 = vector.shape_cast %61 : vector<8x16x600xf32> to vector<1x8x16x600xf32>
    %64 = vector.shape_cast %62 : vector<8x16x600xf32> to vector<1x8x16x600xf32>
    %65 = tpu.concatenate %63, %64 in 0 : vector<1x8x16x600xf32>, vector<1x8x16x600xf32> -> vector<2x8x16x600xf32>
    %66 = vector.shape_cast %65 : vector<2x8x16x600xf32> to vector<256x600xf32>
    %67 = arith.truncf %66 : vector<256x600xf32> to vector<256x600xbf16>
    %c0_11 = arith.constant 0 : index
    %c0_12 = arith.constant 0 : index
    %68 = vector.load %arg4[%c0_11, %c0_12] : memref<600x160xbf16, #tpu.memory_space<vmem>>, vector<600x160xbf16>
    %cst_13 = arith.constant dense<0.000000e+00> : vector<256x160xf32>
    %69 = tpu.matmul %67, %68, %cst_13 {dimension_numbers = #tpu.dot_dimension_numbers<[1], [0], [0], [1], [0, 0, 1, 1], [], []>} : vector<256x600xbf16>, vector<600x160xbf16>, vector<256x160xf32> -> vector<256x160xf32>
    %70 = vector.shape_cast %69 : vector<256x160xf32> to vector<2x8x16x160xf32>
    %71 = vector.extract_strided_slice %70 {offsets = [0, 0, 0, 0], sizes = [2, 8, 16, 80], strides = [1, 1, 1, 1]} : vector<2x8x16x160xf32> to vector<2x8x16x80xf32>
    %72 = vector.extract_strided_slice %70 {offsets = [0, 0, 0, 80], sizes = [2, 8, 16, 80], strides = [1, 1, 1, 1]} : vector<2x8x16x160xf32> to vector<2x8x16x80xf32>
    %73 = arith.maximumf %71, %72 : vector<2x8x16x80xf32>
    %74 = vector.extract_strided_slice %73 {offsets = [0, 0, 0, 0], sizes = [1, 8, 16, 80], strides = [1, 1, 1, 1]} : vector<2x8x16x80xf32> to vector<1x8x16x80xf32>
    %75 = vector.shape_cast %74 : vector<1x8x16x80xf32> to vector<8x16x80xf32>
    %76 = vector.extract_strided_slice %73 {offsets = [1, 0, 0, 0], sizes = [1, 8, 16, 80], strides = [1, 1, 1, 1]} : vector<2x8x16x80xf32> to vector<1x8x16x80xf32>
    %77 = vector.shape_cast %76 : vector<1x8x16x80xf32> to vector<8x16x80xf32>
    %78 = arith.maximumf %75, %77 : vector<8x16x80xf32>
    %c0_14 = arith.constant 0 : index
    %c0_15 = arith.constant 0 : index
    %c0_16 = arith.constant 0 : index
    %79 = vector.load %arg5[%c0_14, %c0_15, %c0_16] : memref<1x1x80xf32, #tpu.memory_space<vmem>>, vector<1x1x80xf32>
    %80 = vector.broadcast %79 : vector<1x1x80xf32> to vector<8x16x80xf32>
    %81 = arith.addf %78, %80 : vector<8x16x80xf32>
    %cst_17 = arith.constant 0.000000e+00 : f32
    %82 = vector.broadcast %cst_17 : f32 to vector<8x16x80xf32>
    %83 = arith.maximumf %81, %82 : vector<8x16x80xf32>
    %84 = vector.extract_strided_slice %83 {offsets = [0, 0, 0], sizes = [1, 16, 80], strides = [1, 1, 1]} : vector<8x16x80xf32> to vector<1x16x80xf32>
    %85 = vector.shape_cast %84 : vector<1x16x80xf32> to vector<16x80xf32>
    %86 = vector.extract_strided_slice %83 {offsets = [1, 0, 0], sizes = [1, 16, 80], strides = [1, 1, 1]} : vector<8x16x80xf32> to vector<1x16x80xf32>
    %87 = vector.shape_cast %86 : vector<1x16x80xf32> to vector<16x80xf32>
    %88 = vector.extract_strided_slice %83 {offsets = [2, 0, 0], sizes = [1, 16, 80], strides = [1, 1, 1]} : vector<8x16x80xf32> to vector<1x16x80xf32>
    %89 = vector.shape_cast %88 : vector<1x16x80xf32> to vector<16x80xf32>
    %90 = vector.extract_strided_slice %83 {offsets = [3, 0, 0], sizes = [1, 16, 80], strides = [1, 1, 1]} : vector<8x16x80xf32> to vector<1x16x80xf32>
    %91 = vector.shape_cast %90 : vector<1x16x80xf32> to vector<16x80xf32>
    %92 = tpu.concatenate %85, %87, %89, %91 in 1 : vector<16x80xf32>, vector<16x80xf32>, vector<16x80xf32>, vector<16x80xf32> -> vector<16x320xf32>
    %93 = arith.truncf %92 : vector<16x320xf32> to vector<16x320xbf16>
    %c0_18 = arith.constant 0 : index
    %c0_19 = arith.constant 0 : index
    %94 = vector.load %arg6[%c0_18, %c0_19] : memref<320x50xbf16, #tpu.memory_space<vmem>>, vector<320x50xbf16>
    %cst_20 = arith.constant dense<0.000000e+00> : vector<16x50xf32>
    %95 = tpu.matmul %93, %94, %cst_20 {dimension_numbers = #tpu.dot_dimension_numbers<[1], [0], [0], [1], [0, 0, 1, 1], [], []>} : vector<16x320xbf16>, vector<320x50xbf16>, vector<16x50xf32> -> vector<16x50xf32>
    %c0_21 = arith.constant 0 : index
    %c0_22 = arith.constant 0 : index
    %96 = vector.load %arg7[%c0_21, %c0_22] : memref<1x50xf32, #tpu.memory_space<vmem>>, vector<1x50xf32>
    %97 = vector.broadcast %96 : vector<1x50xf32> to vector<16x50xf32>
    %98 = arith.addf %95, %97 : vector<16x50xf32>
    %cst_23 = arith.constant 0.000000e+00 : f32
    %99 = vector.broadcast %cst_23 : f32 to vector<16x50xf32>
    %100 = arith.maximumf %98, %99 : vector<16x50xf32>
    %101 = arith.truncf %100 : vector<16x50xf32> to vector<16x50xbf16>
    %c0_24 = arith.constant 0 : index
    %c0_25 = arith.constant 0 : index
    %102 = vector.load %arg8[%c0_24, %c0_25] : memref<50x10xbf16, #tpu.memory_space<vmem>>, vector<50x10xbf16>
    %cst_26 = arith.constant dense<0.000000e+00> : vector<16x10xf32>
    %103 = tpu.matmul %101, %102, %cst_26 {dimension_numbers = #tpu.dot_dimension_numbers<[1], [0], [0], [1], [0, 0, 1, 1], [], []>} : vector<16x50xbf16>, vector<50x10xbf16>, vector<16x10xf32> -> vector<16x10xf32>
    %c0_27 = arith.constant 0 : index
    %c0_28 = arith.constant 0 : index
    %104 = vector.load %arg9[%c0_27, %c0_28] : memref<1x10xf32, #tpu.memory_space<vmem>>, vector<1x10xf32>
    %105 = vector.broadcast %104 : vector<1x10xf32> to vector<16x10xf32>
    %106 = arith.addf %103, %105 : vector<16x10xf32>
    %c0_29 = arith.constant 0 : index
    %c0_30 = arith.constant 0 : index
    %107 = vector.load %arg10[%c0_29, %c0_30] : memref<16x10xf32, #tpu.memory_space<vmem>>, vector<16x10xf32>
    tpu.vector_store %arg10[%c0_29, %c0_30], %106 {strides = array<i32>} : memref<16x10xf32, #tpu.memory_space<vmem>>, vector<16x10xf32>,
    return
  }
  func.func @transform_0(%arg0: i32) -> (i32, i32, i32, i32) {
    %c0_i32 = arith.constant 0 : i32
    %c0_i32_0 = arith.constant 0 : i32
    %c0_i32_1 = arith.constant 0 : i32
    %c0_i32_2 = arith.constant 0 : i32
    return %c0_i32, %c0_i32_0, %arg0, %c0_i32_1 : i32, i32, i32, i32
  }
  func.func @transform_1(%arg0: i32) -> (i32, i32) {
    %c0_i32 = arith.constant 0 : i32
    %c0_i32_0 = arith.constant 0 : i32
    %c0_i32_1 = arith.constant 0 : i32
    return %c0_i32, %c0_i32_0 : i32, i32
  }
  func.func @transform_2(%arg0: i32) -> (i32, i32, i32) {
    %c0_i32 = arith.constant 0 : i32
    %c0_i32_0 = arith.constant 0 : i32
    %c0_i32_1 = arith.constant 0 : i32
    %c0_i32_2 = arith.constant 0 : i32
    return %c0_i32, %c0_i32_0, %c0_i32_1 : i32, i32, i32
  }
  func.func @transform_3(%arg0: i32) -> (i32, i32) {
    %c0_i32 = arith.constant 0 : i32
    %c0_i32_0 = arith.constant 0 : i32
    %c0_i32_1 = arith.constant 0 : i32
    return %c0_i32, %c0_i32_0 : i32, i32
  }
  func.func @transform_4(%arg0: i32) -> (i32, i32, i32) {
    %c0_i32 = arith.constant 0 : i32
    %c0_i32_0 = arith.constant 0 : i32
    %c0_i32_1 = arith.constant 0 : i32
    %c0_i32_2 = arith.constant 0 : i32
    return %c0_i32, %c0_i32_0, %c0_i32_1 : i32, i32, i32
  }
  func.func @transform_5(%arg0: i32) -> (i32, i32) {
    %c0_i32 = arith.constant 0 : i32
    %c0_i32_0 = arith.constant 0 : i32
    %c0_i32_1 = arith.constant 0 : i32
    return %c0_i32, %c0_i32_0 : i32, i32
  }
  func.func @transform_6(%arg0: i32) -> (i32, i32) {
    %c0_i32 = arith.constant 0 : i32
    %c0_i32_0 = arith.constant 0 : i32
    %c0_i32_1 = arith.constant 0 : i32
    return %c0_i32, %c0_i32_0 : i32, i32
  }
  func.func @transform_7(%arg0: i32) -> (i32, i32) {
    %c0_i32 = arith.constant 0 : i32
    %c0_i32_0 = arith.constant 0 : i32
    %c0_i32_1 = arith.constant 0 : i32
    return %c0_i32, %c0_i32_0 : i32, i32
  }
  func.func @transform_8(%arg0: i32) -> (i32, i32) {
    %c0_i32 = arith.constant 0 : i32
    %c0_i32_0 = arith.constant 0 : i32
    %c0_i32_1 = arith.constant 0 : i32
    return %c0_i32, %c0_i32_0 : i32, i32
  }
  func.func @transform_9(%arg0: i32) -> (i32, i32) {
    %c0_i32 = arith.constant 0 : i32
    %c0_i32_0 = arith.constant 0 : i32
    return %arg0, %c0_i32 : i32, i32
  }
}

</mosaic_0001>

<llo_original>
// kernel: tile.13
$region0: #{tile.13}
  #allocation0 [shape = 's32[1]{0}', space=sflag, size = 0x4, scoped, tag = 'scoped memory for tile.13']
  %s0 = inlined_call_operand.vmem [shape: f32[10], index: 0, kind: input, shape index: {}]
  %s1 = inlined_call_operand.vmem [shape: f32[12,10], index: 1, kind: output, shape index: {}]
  // Predicated region
  $region2: #{tile.13} parent=0 // pred_check
    _
  $region3: #{tile.13} parent=0 // pred_check_branch
    %3 = sbr.rel (0) target = $region5
  $region4: #{tile.13} parent=0 // pred_region
    _
  $region5: #{tile.13} parent=0 // pred_fallthru
    _
  %v4 = vld [vmem:[%s0] ss:$0 sm:$0xff]
  %5 = vst [vmem:[%s1] sm:$0xff] %v4
  %s6 = scalar_lea.vmem %s1, 8
  %7 = vst [vmem:[%s6] sm:$0xff] %v4

// kernel: tile.14
$region0: #{tile.14}
  %s0 = inlined_call_operand.vmem [shape: f32[12,10], index: 0, kind: input, shape index: {}]
  %s1 = inlined_call_operand.vmem [shape: f32[1,1,120], index: 1, kind: output, shape index: {}]
  $region1: #{tile.14} parent=0
    #allocation0 [shape = 'u8[4096]{0}', space=vmem, size = 0x1000, scoped, tag = 'scoped mem for output reshape']
    %v2 = vld [vmem:[%s0] sm:$0x1]
    %vm3 = vcmask 80896
    %4 = vst.msk [vmem:[#allocation0] sm:$0x1] %vm3, %v2
    %s5 = scalar_lea.vmem %s0, 11
    %v6 = vld [vmem:[%s5] sm:$0x1]
    %7 = vrot.lane.b32.xlu0 %v6, 110
    %v8 = vpop.permute.xlu0 %7
    %vm9 = vcmask 982896
    %10 = vst.msk [vmem:[#allocation0] sm:$0x1] %vm9, %v8
    %s11 = scalar_lea.vmem %s0, 10
    %v12 = vld [vmem:[%s11] sm:$0x1]
    %13 = vrot.lane.b32.xlu0 %v12, 100
    %v14 = vpop.permute.xlu0 %13
    %vm15 = vcmask 900896
    %16 = vst.msk [vmem:[#allocation0] sm:$0x1] %vm15, %v14
    %s17 = scalar_lea.vmem %s0, 9
    %v18 = vld [vmem:[%s17] sm:$0x1]
    %19 = vrot.lane.b32.xlu0 %v18, 90
    %v20 = vpop.permute.xlu0 %19
    %vm21 = vcmask 818896
    %22 = vst.msk [vmem:[#allocation0] sm:$0x1] %vm21, %v20
    %s23 = scalar_lea.vmem %s0, 8
    %v24 = vld [vmem:[%s23] sm:$0x1]
    %25 = vrot.lane.b32.xlu0 %v24, 80
    %v26 = vpop.permute.xlu0 %25
    %vm27 = vcmask 736896
    %28 = vst.msk [vmem:[#allocation0] sm:$0x1] %vm27, %v26
    %s29 = scalar_lea.vmem %s0, 7
    %v30 = vld [vmem:[%s29] sm:$0x1]
    %31 = vrot.lane.b32.xlu0 %v30, 70
    %v32 = vpop.permute.xlu0 %31
    %vm33 = vcmask 654896
    %34 = vst.msk [vmem:[#allocation0] sm:$0x1] %vm33, %v32
    %s35 = scalar_lea.vmem %s0, 6
    %v36 = vld [vmem:[%s35] sm:$0x1]
    %37 = vrot.lane.b32.xlu0 %v36, 60
    %v38 = vpop.permute.xlu0 %37
    %vm39 = vcmask 572896
    %40 = vst.msk [vmem:[#allocation0] sm:$0x1] %vm39, %v38
    %s41 = scalar_lea.vmem %s0, 5
    %v42 = vld [vmem:[%s41] sm:$0x1]
    %43 = vrot.lane.b32.xlu0 %v42, 50
    %v44 = vpop.permute.xlu0 %43
    %vm45 = vcmask 490896
    %46 = vst.msk [vmem:[#allocation0] sm:$0x1] %vm45, %v44
    %s47 = scalar_lea.vmem %s0, 4
    %v48 = vld [vmem:[%s47] sm:$0x1]
    %49 = vrot.lane.b32.xlu0 %v48, 40
    %v50 = vpop.permute.xlu0 %49
    %vm51 = vcmask 408896
    %52 = vst.msk [vmem:[#allocation0] sm:$0x1] %vm51, %v50
    %s53 = scalar_lea.vmem %s0, 3
    %v54 = vld [vmem:[%s53] sm:$0x1]
    %55 = vrot.lane.b32.xlu0 %v54, 30
    %v56 = vpop.permute.xlu0 %55
    %vm57 = vcmask 326896
    %58 = vst.msk [vmem:[#allocation0] sm:$0x1] %vm57, %v56
    %s59 = scalar_lea.vmem %s0, 2
    %v60 = vld [vmem:[%s59] sm:$0x1]
    %61 = vrot.lane.b32.xlu0 %v60, 20
    %v62 = vpop.permute.xlu0 %61
    %vm63 = vcmask 244896
    %64 = vst.msk [vmem:[#allocation0] sm:$0x1] %vm63, %v62
    %s65 = scalar_lea.vmem %s0, 1
    %v66 = vld [vmem:[%s65] sm:$0x1]
    %67 = vrot.lane.b32.xlu0 %v66, 10
    %v68 = vpop.permute.xlu0 %67
    %vm69 = vcmask 162896
    %70 = vst.msk [vmem:[#allocation0] sm:$0x1] %vm69, %v68
    %s72 = sshllo.u32 0, 1
    %v74 = vld [vmem:[#allocation0] sm:%s72]
    %s75 = sshllo.u32 0, 1
    %76 = vst [vmem:[%s1] sm:%s75] %v74

// kernel: tile.18
$region0: #{tile.18}
  #allocation0 [shape = 's32[1]{0}', space=sflag, size = 0x4, scoped, tag = 'scoped memory for tile.18']
  %s0 = inlined_call_operand.vmem [shape: f32[20], index: 0, kind: input, shape index: {}]
  %s1 = inlined_call_operand.vmem [shape: f32[4,20], index: 1, kind: output, shape index: {}]
  // Predicated region
  $region2: #{tile.18} parent=0 // pred_check
    _
  $region3: #{tile.18} parent=0 // pred_check_branch
    %3 = sbr.rel (0) target = $region5
  $region4: #{tile.18} parent=0 // pred_region
    _
  $region5: #{tile.18} parent=0 // pred_fallthru
    _
  %v4 = vld [vmem:[%s0] ss:$0 sm:$0xff]
  %5 = vst [vmem:[%s1] sm:$0xf] %v4

// kernel: tile.19
$region0: #{tile.19}
  %s0 = inlined_call_operand.vmem [shape: f32[4,20], index: 0, kind: input, shape index: {}]
  %s1 = inlined_call_operand.vmem [shape: f32[1,1,80], index: 1, kind: output, shape index: {}]
  $region1: #{tile.19} parent=0
    #allocation0 [shape = 'u8[4096]{0}', space=vmem, size = 0x1000, scoped, tag = 'scoped mem for output reshape']
    #allocation1 [shape = 'u8[4096]{0}', space=vmem, size = 0x1000, scoped, tag = 'scoped mem for input reshape']
    %s3 = sshllo.u32 0, 4
    %v4 = vld [vmem:[%s0] sm:%s3]
    %5 = vst [vmem:[#allocation1] sm:%s3] %v4
    %v6 = vld [vmem:[#allocation1] sm:$0x1]
    %vm7 = vcmask 162816
    %8 = vst.msk [vmem:[#allocation0] sm:$0x1] %vm7, %v6
    %s9 = scalar_lea.vmem [#allocation1], 3
    %v10 = vld [vmem:[%s9] sm:$0x1]
    %11 = vrot.lane.b32.xlu0 %v10, 60
    %v12 = vpop.permute.xlu0 %11
    %vm13 = vcmask 654816
    %14 = vst.msk [vmem:[#allocation0] sm:$0x1] %vm13, %v12
    %s15 = scalar_lea.vmem [#allocation1], 2
    %v16 = vld [vmem:[%s15] sm:$0x1]
    %17 = vrot.lane.b32.xlu0 %v16, 40
    %v18 = vpop.permute.xlu0 %17
    %vm19 = vcmask 490816
    %20 = vst.msk [vmem:[#allocation0] sm:$0x1] %vm19, %v18
    %s21 = scalar_lea.vmem [#allocation1], 1
    %v22 = vld [vmem:[%s21] sm:$0x1]
    %23 = vrot.lane.b32.xlu0 %v22, 20
    %v24 = vpop.permute.xlu0 %23
    %vm25 = vcmask 326816
    %26 = vst.msk [vmem:[#allocation0] sm:$0x1] %vm25, %v24
    %s28 = sshllo.u32 0, 1
    %v30 = vld [vmem:[#allocation0] sm:%s28]
    %s31 = sshllo.u32 0, 1
    %32 = vst [vmem:[%s1] sm:%s31] %v30

// kernel: lenet_forward.1
$region0: #{lenet_forward.1}
  #allocation0 [shape = 'u32[]', space=smem, size = 0x4, offset = 0x4, fixed_abs, tag = 'smem constant byte address 0x4 - core index']
  #allocation1 [shape = 'u32[144,128]{1,0:T(1,128)}', space=vmem, size = 0x12000, scoped, tag = 'internal scratch']
  %s0 = inlined_call_operand.vmem [shape: bf16[4,9,16,28], index: 0, kind: input, shape index: {}]
  %s1 = inlined_call_operand.vmem [shape: bf16[140,240], index: 1, kind: input, shape index: {}]
  %s2 = inlined_call_operand.vmem [shape: f32[1,1,120], index: 2, kind: input, shape index: {}]
  %s3 = inlined_call_operand.vmem [shape: bf16[600,160], index: 3, kind: input, shape index: {}]
  %s4 = inlined_call_operand.vmem [shape: f32[1,1,80], index: 4, kind: input, shape index: {}]
  %s5 = inlined_call_operand.vmem [shape: bf16[320,50], index: 5, kind: input, shape index: {}]
  %s6 = inlined_call_operand.vmem [shape: f32[1,50], index: 6, kind: input, shape index: {}]
  %s7 = inlined_call_operand.vmem [shape: bf16[50,10], index: 7, kind: input, shape index: {}]
  %s8 = inlined_call_operand.vmem [shape: f32[1,10], index: 8, kind: input, shape index: {}]
  %s9 = inlined_call_operand.vmem [shape: f32[16,10], index: 9, kind: output, shape index: {}]
  %s10 = sld [smem:[#allocation0]]
  $region46: #{lenet_forward.1} parent=0
    _
  %s12 = ssub.s32 1, %s10
  %s13 = scalar_select 0, %s12, %s10
  // Predicated region
  $region2: #{lenet_forward.1} parent=0 // pred_check
    _
  $region3: #{lenet_forward.1} parent=0 // pred_check_branch
    %15 = sbr.rel (0) target = $region5
  $region4: #{lenet_forward.1} parent=0 // pred_region
    _
  $region5: #{lenet_forward.1} parent=0 // pred_fallthru
    _
  // Predicated region
  $region6: #{lenet_forward.1} parent=0 // pred_check
    _
  $region7: #{lenet_forward.1} parent=0 // pred_check_branch
    %17 = sbr.rel (0) target = $region9
  $region8: #{lenet_forward.1} parent=0 // pred_region
    _
  $region9: #{lenet_forward.1} parent=0 // pred_fallthru
    _
  // Predicated region
  $region10: #{lenet_forward.1} parent=0 // pred_check
    _
  $region11: #{lenet_forward.1} parent=0 // pred_check_branch
    %19 = sbr.rel (0) target = $region13
  $region12: #{lenet_forward.1} parent=0 // pred_region
    _
  $region13: #{lenet_forward.1} parent=0 // pred_fallthru
    _
  // Predicated region
  $region14: #{lenet_forward.1} parent=0 // pred_check
    _
  $region15: #{lenet_forward.1} parent=0 // pred_check_branch
    %21 = sbr.rel (0) target = $region17
  $region16: #{lenet_forward.1} parent=0 // pred_region
    _
  $region17: #{lenet_forward.1} parent=0 // pred_fallthru
    _
  // Predicated region
  $region18: #{lenet_forward.1} parent=0 // pred_check
    _
  $region19: #{lenet_forward.1} parent=0 // pred_check_branch
    %23 = sbr.rel (0) target = $region21
  $region20: #{lenet_forward.1} parent=0 // pred_region
    _
  $region21: #{lenet_forward.1} parent=0 // pred_fallthru
    _
  // Predicated region
  $region22: #{lenet_forward.1} parent=0 // pred_check
    _
  $region23: #{lenet_forward.1} parent=0 // pred_check_branch
    %25 = sbr.rel (0) target = $region25
  $region24: #{lenet_forward.1} parent=0 // pred_region
    _
  $region25: #{lenet_forward.1} parent=0 // pred_fallthru
    _
  // Predicated region
  $region26: #{lenet_forward.1} parent=0 // pred_check
    _
  $region27: #{lenet_forward.1} parent=0 // pred_check_branch
    %27 = sbr.rel (0) target = $region29
  $region28: #{lenet_forward.1} parent=0 // pred_region
    _
  $region29: #{lenet_forward.1} parent=0 // pred_fallthru
    _
  // Predicated region
  $region30: #{lenet_forward.1} parent=0 // pred_check
    _
  $region31: #{lenet_forward.1} parent=0 // pred_check_branch
    %29 = sbr.rel (0) target = $region33
  $region32: #{lenet_forward.1} parent=0 // pred_region
    _
  $region33: #{lenet_forward.1} parent=0 // pred_fallthru
    _
  // Predicated region
  $region34: #{lenet_forward.1} parent=0 // pred_check
    _
  $region35: #{lenet_forward.1} parent=0 // pred_check_branch
    %31 = sbr.rel (0) target = $region37
  $region36: #{lenet_forward.1} parent=0 // pred_region
    _
  $region37: #{lenet_forward.1} parent=0 // pred_fallthru
    _
  %v33 = vld [vmem:[%s0] sm:$0xf]
  %v34 = vld [vmem:[%s0 + $0x4] sm:$0xf]
  %v35 = vld [vmem:[%s0 + $0x8] sm:$0xf]
  %v36 = vld [vmem:[%s0 + $0xc] sm:$0xf]
  %v37 = vld [vmem:[%s0 + $0x10] sm:$0xf]
  %v38 = vld [vmem:[%s0 + $0x14] sm:$0xf]
  %v39 = vld [vmem:[%s0 + $0x18] sm:$0xf]
  %v40 = vld [vmem:[%s0 + $0x1c] sm:$0xf]
  %v41 = vld [vmem:[%s0 + $0x20] sm:$0xf]
  %v42 = vld [vmem:[%s0 + $0x24] sm:$0xf]
  %v43 = vld [vmem:[%s0 + $0x28] sm:$0xf]
  %v44 = vld [vmem:[%s0 + $0x2c] sm:$0xf]
  %v45 = vld [vmem:[%s0 + $0x30] sm:$0xf]
  %v46 = vld [vmem:[%s0 + $0x34] sm:$0xf]
  %v47 = vld [vmem:[%s0 + $0x38] sm:$0xf]
  %v48 = vld [vmem:[%s0 + $0x3c] sm:$0xf]
  %v49 = vld [vmem:[%s0 + $0x40] sm:$0xf]
  %v50 = vld [vmem:[%s0 + $0x44] sm:$0xf]
  %v51 = vld [vmem:[%s0 + $0x48] sm:$0xf]
  %v52 = vld [vmem:[%s0 + $0x4c] sm:$0xf]
  %v53 = vld [vmem:[%s0 + $0x50] sm:$0xf]
  %v54 = vld [vmem:[%s0 + $0x54] sm:$0xf]
  %v55 = vld [vmem:[%s0 + $0x58] sm:$0xf]
  %v56 = vld [vmem:[%s0 + $0x5c] sm:$0xf]
  %v57 = vld [vmem:[%s0 + $0x60] sm:$0xf]
  %v58 = vld [vmem:[%s0 + $0x64] sm:$0xf]
  %v59 = vld [vmem:[%s0 + $0x68] sm:$0xf]
  %v60 = vld [vmem:[%s0 + $0x6c] sm:$0xf]
  %v61 = vld [vmem:[%s0 + $0x70] sm:$0xf]
  %v62 = vld [vmem:[%s0 + $0x74] sm:$0xf]
  %v63 = vld [vmem:[%s0 + $0x78] sm:$0xf]
  %v64 = vld [vmem:[%s0 + $0x7c] sm:$0xf]
  %v65 = vld [vmem:[%s0 + $0x80] sm:$0xf]
  %v66 = vld [vmem:[%s0 + $0x84] sm:$0xf]
  %v67 = vld [vmem:[%s0 + $0x88] sm:$0xf]
  %v68 = vld [vmem:[%s0 + $0x8c] sm:$0xf]
  %v69 = vld [vmem:[%s0 + $0x90] sm:$0xf]
  %v70 = vld [vmem:[%s0 + $0x94] sm:$0xf]
  %v71 = vld [vmem:[%s0 + $0x98] sm:$0xf]
  %v72 = vld [vmem:[%s0 + $0x9c] sm:$0xf]
  %v73 = vld [vmem:[%s0 + $0xa0] sm:$0xf]
  %v74 = vld [vmem:[%s0 + $0xa4] sm:$0xf]
  %v75 = vld [vmem:[%s0 + $0xa8] sm:$0xf]
  %v76 = vld [vmem:[%s0 + $0xac] sm:$0xf]
  %v77 = vld [vmem:[%s0 + $0xb0] sm:$0xf]
  %v78 = vld [vmem:[%s0 + $0xb4] sm:$0xf]
  %v79 = vld [vmem:[%s0 + $0xb8] sm:$0xf]
  %v80 = vld [vmem:[%s0 + $0xbc] sm:$0xf]
  %v81 = vld [vmem:[%s0 + $0xc0] sm:$0xf]
  %v82 = vld [vmem:[%s0 + $0xc4] sm:$0xf]
  %v83 = vld [vmem:[%s0 + $0xc8] sm:$0xf]
  %v84 = vld [vmem:[%s0 + $0xcc] sm:$0xf]
  %v85 = vld [vmem:[%s0 + $0xd0] sm:$0xf]
  %v86 = vld [vmem:[%s0 + $0xd4] sm:$0xf]
  %v87 = vld [vmem:[%s0 + $0xd8] sm:$0xf]
  %v88 = vld [vmem:[%s0 + $0xdc] sm:$0xf]
  %v89 = vld [vmem:[%s0 + $0xe0] sm:$0xf]
  %v90 = vld [vmem:[%s0 + $0xe4] sm:$0xf]
  %v91 = vld [vmem:[%s0 + $0xe8] sm:$0xf]
  %v92 = vld [vmem:[%s0 + $0xec] sm:$0xf]
  %v93 = vld [vmem:[%s0 + $0xf0] sm:$0xf]
  %v94 = vld [vmem:[%s0 + $0xf4] sm:$0xf]
  %v95 = vld [vmem:[%s0 + $0xf8] sm:$0xf]
  %v96 = vld [vmem:[%s0 + $0xfc] sm:$0xf]
  %v97 = vld [vmem:[%s0 + $0x100] sm:$0xf]
  %v98 = vld [vmem:[%s0 + $0x104] sm:$0xf]
  %v99 = vld [vmem:[%s0 + $0x108] sm:$0xf]
  %v100 = vld [vmem:[%s0 + $0x10c] sm:$0xf]
  %v101 = vld [vmem:[%s0 + $0x110] sm:$0xf]
  %v102 = vld [vmem:[%s0 + $0x114] sm:$0xf]
  %v103 = vld [vmem:[%s0 + $0x118] sm:$0xf]
  %v104 = vld [vmem:[%s0 + $0x11c] sm:$0xf]
  %v121 = vunpack.c.l.b16 %v33
  %v122 = vunpack.c.l.b16 %v34
  %v123 = vunpack.c.l.b16 %v35
  %v124 = vunpack.c.l.b16 %v36
  %v125 = vunpack.c.l.b16 %v37
  %v126 = vunpack.c.l.b16 %v38
  %v127 = vunpack.c.l.b16 %v39
  %v128 = vunpack.c.l.b16 %v40
  %v129 = vunpack.c.l.b16 %v41
  %v130 = vunpack.c.l.b16 %v42
  %v131 = vunpack.c.l.b16 %v43
  %v132 = vunpack.c.l.b16 %v44
  %v133 = vunpack.c.l.b16 %v45
  %v134 = vunpack.c.l.b16 %v46
  %v135 = vunpack.c.l.b16 %v47
  %v136 = vunpack.c.l.b16 %v48
  %v137 = vpack.c.b16 %v122, %v121
  %v138 = vpack.c.b16 %v124, %v123
  %v139 = vpack.c.b16 %v126, %v125
  %v140 = vpack.c.b16 %v128, %v127
  %v141 = vpack.c.b16 %v130, %v129
  %v142 = vpack.c.b16 %v132, %v131
  %v143 = vpack.c.b16 %v134, %v133
  %v144 = vpack.c.b16 %v136, %v135
  %v161 = vunpack.c.l.b16 %v51
  %v162 = vunpack.c.l.b16 %v52
  %v163 = vunpack.c.l.b16 %v53
  %v164 = vunpack.c.l.b16 %v54
  %v165 = vunpack.c.l.b16 %v55
  %v166 = vunpack.c.l.b16 %v56
  %v167 = vunpack.c.l.b16 %v57
  %v168 = vunpack.c.l.b16 %v58
  %v169 = vunpack.c.l.b16 %v59
  %v170 = vunpack.c.l.b16 %v60
  %v171 = vunpack.c.l.b16 %v61
  %v172 = vunpack.c.l.b16 %v62
  %v173 = vunpack.c.l.b16 %v63
  %v174 = vunpack.c.l.b16 %v64
  %v175 = vunpack.c.l.b16 %v65
  %v176 = vunpack.c.l.b16 %v66
  %v177 = vpack.c.b16 %v162, %v161
  %v178 = vpack.c.b16 %v164, %v163
  %v179 = vpack.c.b16 %v166, %v165
  %v180 = vpack.c.b16 %v168, %v167
  %v181 = vpack.c.b16 %v170, %v169
  %v182 = vpack.c.b16 %v172, %v171
  %v183 = vpack.c.b16 %v174, %v173
  %v184 = vpack.c.b16 %v176, %v175
  %185 = vrot.lane.b32.xlu0 %v177, 28
  %v186 = vpop.permute.xlu0 %185
  %187 = vrot.lane.b32.xlu0 %v178, 28
  %v188 = vpop.permute.xlu0 %187
  %189 = vrot.lane.b32.xlu0 %v179, 28
  %v190 = vpop.permute.xlu0 %189
  %191 = vrot.lane.b32.xlu0 %v180, 28
  %v192 = vpop.permute.xlu0 %191
  %193 = vrot.lane.b32.xlu0 %v181, 28
  %v194 = vpop.permute.xlu0 %193
  %195 = vrot.lane.b32.xlu0 %v182, 28
  %v196 = vpop.permute.xlu0 %195
  %197 = vrot.lane.b32.xlu0 %v183, 28
  %v198 = vpop.permute.xlu0 %197
  %199 = vrot.lane.b32.xlu0 %v184, 28
  %v200 = vpop.permute.xlu0 %199
  %v217 = vunpack.c.l.b16 %v69
  %v218 = vunpack.c.l.b16 %v70
  %v219 = vunpack.c.l.b16 %v71
  %v220 = vunpack.c.l.b16 %v72
  %v221 = vunpack.c.l.b16 %v73
  %v222 = vunpack.c.l.b16 %v74
  %v223 = vunpack.c.l.b16 %v75
  %v224 = vunpack.c.l.b16 %v76
  %v225 = vunpack.c.l.b16 %v77
  %v226 = vunpack.c.l.b16 %v78
  %v227 = vunpack.c.l.b16 %v79
  %v228 = vunpack.c.l.b16 %v80
  %v229 = vunpack.c.l.b16 %v81
  %v230 = vunpack.c.l.b16 %v82
  %v231 = vunpack.c.l.b16 %v83
  %v232 = vunpack.c.l.b16 %v84
  %v233 = vpack.c.b16 %v218, %v217
  %v234 = vpack.c.b16 %v220, %v219
  %v235 = vpack.c.b16 %v222, %v221
  %v236 = vpack.c.b16 %v224, %v223
  %v237 = vpack.c.b16 %v226, %v225
  %v238 = vpack.c.b16 %v228, %v227
  %v239 = vpack.c.b16 %v230, %v229
  %v240 = vpack.c.b16 %v232, %v231
  %241 = vrot.lane.b32.xlu0 %v233, 56
  %v242 = vpop.permute.xlu0 %241
  %243 = vrot.lane.b32.xlu0 %v234, 56
  %v244 = vpop.permute.xlu0 %243
  %245 = vrot.lane.b32.xlu0 %v235, 56
  %v246 = vpop.permute.xlu0 %245
  %247 = vrot.lane.b32.xlu0 %v236, 56
  %v248 = vpop.permute.xlu0 %247
  %249 = vrot.lane.b32.xlu0 %v237, 56
  %v250 = vpop.permute.xlu0 %249
  %251 = vrot.lane.b32.xlu0 %v238, 56
  %v252 = vpop.permute.xlu0 %251
  %253 = vrot.lane.b32.xlu0 %v239, 56
  %v254 = vpop.permute.xlu0 %253
  %255 = vrot.lane.b32.xlu0 %v240, 56
  %v256 = vpop.permute.xlu0 %255
  %v273 = vunpack.c.l.b16 %v87
  %v274 = vunpack.c.l.b16 %v88
  %v275 = vunpack.c.l.b16 %v89
  %v276 = vunpack.c.l.b16 %v90
  %v277 = vunpack.c.l.b16 %v91
  %v278 = vunpack.c.l.b16 %v92
  %v279 = vunpack.c.l.b16 %v93
  %v280 = vunpack.c.l.b16 %v94
  %v281 = vunpack.c.l.b16 %v95
  %v282 = vunpack.c.l.b16 %v96
  %v283 = vunpack.c.l.b16 %v97
  %v284 = vunpack.c.l.b16 %v98
  %v285 = vunpack.c.l.b16 %v99
  %v286 = vunpack.c.l.b16 %v100
  %v287 = vunpack.c.l.b16 %v101
  %v288 = vunpack.c.l.b16 %v102
  %v289 = vpack.c.b16 %v274, %v273
  %v290 = vpack.c.b16 %v276, %v275
  %v291 = vpack.c.b16 %v278, %v277
  %v292 = vpack.c.b16 %v280, %v279
  %v293 = vpack.c.b16 %v282, %v281
  %v294 = vpack.c.b16 %v284, %v283
  %v295 = vpack.c.b16 %v286, %v285
  %v296 = vpack.c.b16 %v288, %v287
  %297 = vrot.lane.b32.xlu0 %v289, 84
  %v298 = vpop.permute.xlu0 %297
  %299 = vrot.lane.b32.xlu0 %v290, 84
  %v300 = vpop.permute.xlu0 %299
  %301 = vrot.lane.b32.xlu0 %v291, 84
  %v302 = vpop.permute.xlu0 %301
  %303 = vrot.lane.b32.xlu0 %v292, 84
  %v304 = vpop.permute.xlu0 %303
  %305 = vrot.lane.b32.xlu0 %v293, 84
  %v306 = vpop.permute.xlu0 %305
  %307 = vrot.lane.b32.xlu0 %v294, 84
  %v308 = vpop.permute.xlu0 %307
  %309 = vrot.lane.b32.xlu0 %v295, 84
  %v310 = vpop.permute.xlu0 %309
  %311 = vrot.lane.b32.xlu0 %v296, 84
  %v312 = vpop.permute.xlu0 %311
  %v315 = vunpack.c.l.b16 %v49
  %v316 = vunpack.c.l.b16 %v50
  %v317 = vpack.c.b16 %v316, %v315
  %318 = vrot.lane.b32.xlu0 %v138, 112
  %v319 = vpop.permute.xlu0 %318
  %320 = vrot.lane.b32.xlu0 %v139, 112
  %v321 = vpop.permute.xlu0 %320
  %322 = vrot.lane.b32.xlu0 %v140, 112
  %v323 = vpop.permute.xlu0 %322
  %324 = vrot.lane.b32.xlu0 %v141, 112
  %v325 = vpop.permute.xlu0 %324
  %326 = vrot.lane.b32.xlu0 %v142, 112
  %v327 = vpop.permute.xlu0 %326
  %328 = vrot.lane.b32.xlu0 %v143, 112
  %v329 = vpop.permute.xlu0 %328
  %330 = vrot.lane.b32.xlu0 %v144, 112
  %v331 = vpop.permute.xlu0 %330
  %332 = vrot.lane.b32.xlu0 %v317, 112
  %v333 = vpop.permute.xlu0 %332
  %vm334 = vcmask 228352
  %v337 = vsel %vm334, %v137, %v186
  %v340 = vsel %vm334, %v138, %v188
  %v343 = vsel %vm334, %v139, %v190
  %v346 = vsel %vm334, %v140, %v192
  %v349 = vsel %vm334, %v141, %v194
  %v352 = vsel %vm334, %v142, %v196
  %v355 = vsel %vm334, %v143, %v198
  %v358 = vsel %vm334, %v144, %v200
  %vm359 = vcmask 457728
  %v361 = vsel %vm359, %v337, %v242
  %v363 = vsel %vm359, %v340, %v244
  %v365 = vsel %vm359, %v343, %v246
  %v367 = vsel %vm359, %v346, %v248
  %v369 = vsel %vm359, %v349, %v250
  %v371 = vsel %vm359, %v352, %v252
  %v373 = vsel %vm359, %v355, %v254
  %v375 = vsel %vm359, %v358, %v256
  %vm376 = vcmask 687104
  %v378 = vsel %vm376, %v361, %v298
  %v380 = vsel %vm376, %v363, %v300
  %v382 = vsel %vm376, %v365, %v302
  %v384 = vsel %vm376, %v367, %v304
  %v386 = vsel %vm376, %v369, %v306
  %v388 = vsel %vm376, %v371, %v308
  %v390 = vsel %vm376, %v373, %v310
  %v392 = vsel %vm376, %v375, %v312
  %vm393 = vcmask 916480
  %v395 = vsel %vm393, %v378, %v319
  %v398 = vsel %vm393, %v380, %v321
  %v401 = vsel %vm393, %v382, %v323
  %v404 = vsel %vm393, %v384, %v325
  %v407 = vsel %vm393, %v386, %v327
  %v410 = vsel %vm393, %v388, %v329
  %v413 = vsel %vm393, %v390, %v331
  %v416 = vsel %vm393, %v392, %v333
  %418 = vrot.lane.b32.xlu0 %v233, 28
  %v419 = vpop.permute.xlu0 %418
  %420 = vrot.lane.b32.xlu0 %v234, 28
  %v421 = vpop.permute.xlu0 %420
  %422 = vrot.lane.b32.xlu0 %v235, 28
  %v423 = vpop.permute.xlu0 %422
  %424 = vrot.lane.b32.xlu0 %v236, 28
  %v425 = vpop.permute.xlu0 %424
  %426 = vrot.lane.b32.xlu0 %v237, 28
  %v427 = vpop.permute.xlu0 %426
  %428 = vrot.lane.b32.xlu0 %v238, 28
  %v429 = vpop.permute.xlu0 %428
  %430 = vrot.lane.b32.xlu0 %v239, 28
  %v431 = vpop.permute.xlu0 %430
  %432 = vrot.lane.b32.xlu0 %v240, 28
  %v433 = vpop.permute.xlu0 %432
  %434 = vrot.lane.b32.xlu0 %v289, 56
  %v435 = vpop.permute.xlu0 %434
  %436 = vrot.lane.b32.xlu0 %v290, 56
  %v437 = vpop.permute.xlu0 %436
  %438 = vrot.lane.b32.xlu0 %v291, 56
  %v439 = vpop.permute.xlu0 %438
  %440 = vrot.lane.b32.xlu0 %v292, 56
  %v441 = vpop.permute.xlu0 %440
  %442 = vrot.lane.b32.xlu0 %v293, 56
  %v443 = vpop.permute.xlu0 %442
  %444 = vrot.lane.b32.xlu0 %v294, 56
  %v445 = vpop.permute.xlu0 %444
  %446 = vrot.lane.b32.xlu0 %v295, 56
  %v447 = vpop.permute.xlu0 %446
  %448 = vrot.lane.b32.xlu0 %v296, 56
  %v449 = vpop.permute.xlu0 %448
  %450 = vrot.lane.b32.xlu0 %v138, 84
  %v451 = vpop.permute.xlu0 %450
  %452 = vrot.lane.b32.xlu0 %v139, 84
  %v453 = vpop.permute.xlu0 %452
  %454 = vrot.lane.b32.xlu0 %v140, 84
  %v455 = vpop.permute.xlu0 %454
  %456 = vrot.lane.b32.xlu0 %v141, 84
  %v457 = vpop.permute.xlu0 %456
  %458 = vrot.lane.b32.xlu0 %v142, 84
  %v459 = vpop.permute.xlu0 %458
  %460 = vrot.lane.b32.xlu0 %v143, 84
  %v461 = vpop.permute.xlu0 %460
  %462 = vrot.lane.b32.xlu0 %v144, 84
  %v463 = vpop.permute.xlu0 %462
  %464 = vrot.lane.b32.xlu0 %v317, 84
  %v465 = vpop.permute.xlu0 %464
  %v468 = vunpack.c.l.b16 %v67
  %v469 = vunpack.c.l.b16 %v68
  %v470 = vpack.c.b16 %v469, %v468
  %471 = vrot.lane.b32.xlu0 %v178, 112
  %v472 = vpop.permute.xlu0 %471
  %473 = vrot.lane.b32.xlu0 %v179, 112
  %v474 = vpop.permute.xlu0 %473
  %475 = vrot.lane.b32.xlu0 %v180, 112
  %v476 = vpop.permute.xlu0 %475
  %477 = vrot.lane.b32.xlu0 %v181, 112
  %v478 = vpop.permute.xlu0 %477
  %479 = vrot.lane.b32.xlu0 %v182, 112
  %v480 = vpop.permute.xlu0 %479
  %481 = vrot.lane.b32.xlu0 %v183, 112
  %v482 = vpop.permute.xlu0 %481
  %483 = vrot.lane.b32.xlu0 %v184, 112
  %v484 = vpop.permute.xlu0 %483
  %485 = vrot.lane.b32.xlu0 %v470, 112
  %v486 = vpop.permute.xlu0 %485
  %v489 = vsel %vm334, %v177, %v419
  %v492 = vsel %vm334, %v178, %v421
  %v495 = vsel %vm334, %v179, %v423
  %v498 = vsel %vm334, %v180, %v425
  %v501 = vsel %vm334, %v181, %v427
  %v504 = vsel %vm334, %v182, %v429
  %v507 = vsel %vm334, %v183, %v431
  %v510 = vsel %vm334, %v184, %v433
  %v512 = vsel %vm359, %v489, %v435
  %v514 = vsel %vm359, %v492, %v437
  %v516 = vsel %vm359, %v495, %v439
  %v518 = vsel %vm359, %v498, %v441
  %v520 = vsel %vm359, %v501, %v443
  %v522 = vsel %vm359, %v504, %v445
  %v524 = vsel %vm359, %v507, %v447
  %v526 = vsel %vm359, %v510, %v449
  %v528 = vsel %vm376, %v512, %v451
  %v530 = vsel %vm376, %v514, %v453
  %v532 = vsel %vm376, %v516, %v455
  %v534 = vsel %vm376, %v518, %v457
  %v536 = vsel %vm376, %v520, %v459
  %v538 = vsel %vm376, %v522, %v461
  %v540 = vsel %vm376, %v524, %v463
  %v542 = vsel %vm376, %v526, %v465
  %v544 = vsel %vm393, %v528, %v472
  %v547 = vsel %vm393, %v530, %v474
  %v550 = vsel %vm393, %v532, %v476
  %v553 = vsel %vm393, %v534, %v478
  %v556 = vsel %vm393, %v536, %v480
  %v559 = vsel %vm393, %v538, %v482
  %v562 = vsel %vm393, %v540, %v484
  %v565 = vsel %vm393, %v542, %v486
  %567 = vrot.lane.b32.xlu0 %v289, 28
  %v568 = vpop.permute.xlu0 %567
  %569 = vrot.lane.b32.xlu0 %v290, 28
  %v570 = vpop.permute.xlu0 %569
  %571 = vrot.lane.b32.xlu0 %v291, 28
  %v572 = vpop.permute.xlu0 %571
  %573 = vrot.lane.b32.xlu0 %v292, 28
  %v574 = vpop.permute.xlu0 %573
  %575 = vrot.lane.b32.xlu0 %v293, 28
  %v576 = vpop.permute.xlu0 %575
  %577 = vrot.lane.b32.xlu0 %v294, 28
  %v578 = vpop.permute.xlu0 %577
  %579 = vrot.lane.b32.xlu0 %v295, 28
  %v580 = vpop.permute.xlu0 %579
  %581 = vrot.lane.b32.xlu0 %v296, 28
  %v582 = vpop.permute.xlu0 %581
  %583 = vrot.lane.b32.xlu0 %v138, 56
  %v584 = vpop.permute.xlu0 %583
  %585 = vrot.lane.b32.xlu0 %v139, 56
  %v586 = vpop.permute.xlu0 %585
  %587 = vrot.lane.b32.xlu0 %v140, 56
  %v588 = vpop.permute.xlu0 %587
  %589 = vrot.lane.b32.xlu0 %v141, 56
  %v590 = vpop.permute.xlu0 %589
  %591 = vrot.lane.b32.xlu0 %v142, 56
  %v592 = vpop.permute.xlu0 %591
  %593 = vrot.lane.b32.xlu0 %v143, 56
  %v594 = vpop.permute.xlu0 %593
  %595 = vrot.lane.b32.xlu0 %v144, 56
  %v596 = vpop.permute.xlu0 %595
  %597 = vrot.lane.b32.xlu0 %v317, 56
  %v598 = vpop.permute.xlu0 %597
  %599 = vrot.lane.b32.xlu0 %v178, 84
  %v600 = vpop.permute.xlu0 %599
  %601 = vrot.lane.b32.xlu0 %v179, 84
  %v602 = vpop.permute.xlu0 %601
  %603 = vrot.lane.b32.xlu0 %v180, 84
  %v604 = vpop.permute.xlu0 %603
  %605 = vrot.lane.b32.xlu0 %v181, 84
  %v606 = vpop.permute.xlu0 %605
  %607 = vrot.lane.b32.xlu0 %v182, 84
  %v608 = vpop.permute.xlu0 %607
  %609 = vrot.lane.b32.xlu0 %v183, 84
  %v610 = vpop.permute.xlu0 %609
  %611 = vrot.lane.b32.xlu0 %v184, 84
  %v612 = vpop.permute.xlu0 %611
  %613 = vrot.lane.b32.xlu0 %v470, 84
  %v614 = vpop.permute.xlu0 %613
  %v617 = vunpack.c.l.b16 %v85
  %v618 = vunpack.c.l.b16 %v86
  %v619 = vpack.c.b16 %v618, %v617
  %620 = vrot.lane.b32.xlu0 %v234, 112
  %v621 = vpop.permute.xlu0 %620
  %622 = vrot.lane.b32.xlu0 %v235, 112
  %v623 = vpop.permute.xlu0 %622
  %624 = vrot.lane.b32.xlu0 %v236, 112
  %v625 = vpop.permute.xlu0 %624
  %626 = vrot.lane.b32.xlu0 %v237, 112
  %v627 = vpop.permute.xlu0 %626
  %628 = vrot.lane.b32.xlu0 %v238, 112
  %v629 = vpop.permute.xlu0 %628
  %630 = vrot.lane.b32.xlu0 %v239, 112
  %v631 = vpop.permute.xlu0 %630
  %632 = vrot.lane.b32.xlu0 %v240, 112
  %v633 = vpop.permute.xlu0 %632
  %634 = vrot.lane.b32.xlu0 %v619, 112
  %v635 = vpop.permute.xlu0 %634
  %v638 = vsel %vm334, %v233, %v568
  %v641 = vsel %vm334, %v234, %v570
  %v644 = vsel %vm334, %v235, %v572
  %v647 = vsel %vm334, %v236, %v574
  %v650 = vsel %vm334, %v237, %v576
  %v653 = vsel %vm334, %v238, %v578
  %v656 = vsel %vm334, %v239, %v580
  %v659 = vsel %vm334, %v240, %v582
  %v661 = vsel %vm359, %v638, %v584
  %v663 = vsel %vm359, %v641, %v586
  %v665 = vsel %vm359, %v644, %v588
  %v667 = vsel %vm359, %v647, %v590
  %v669 = vsel %vm359, %v650, %v592
  %v671 = vsel %vm359, %v653, %v594
  %v673 = vsel %vm359, %v656, %v596
  %v675 = vsel %vm359, %v659, %v598
  %v677 = vsel %vm376, %v661, %v600
  %v679 = vsel %vm376, %v663, %v602
  %v681 = vsel %vm376, %v665, %v604
  %v683 = vsel %vm376, %v667, %v606
  %v685 = vsel %vm376, %v669, %v608
  %v687 = vsel %vm376, %v671, %v610
  %v689 = vsel %vm376, %v673, %v612
  %v691 = vsel %vm376, %v675, %v614
  %v693 = vsel %vm393, %v677, %v621
  %v696 = vsel %vm393, %v679, %v623
  %v699 = vsel %vm393, %v681, %v625
  %v702 = vsel %vm393, %v683, %v627
  %v705 = vsel %vm393, %v685, %v629
  %v708 = vsel %vm393, %v687, %v631
  %v711 = vsel %vm393, %v689, %v633
  %v714 = vsel %vm393, %v691, %v635
  %716 = vrot.lane.b32.xlu0 %v138, 28
  %v717 = vpop.permute.xlu0 %716
  %718 = vrot.lane.b32.xlu0 %v139, 28
  %v719 = vpop.permute.xlu0 %718
  %720 = vrot.lane.b32.xlu0 %v140, 28
  %v721 = vpop.permute.xlu0 %720
  %722 = vrot.lane.b32.xlu0 %v141, 28
  %v723 = vpop.permute.xlu0 %722
  %724 = vrot.lane.b32.xlu0 %v142, 28
  %v725 = vpop.permute.xlu0 %724
  %726 = vrot.lane.b32.xlu0 %v143, 28
  %v727 = vpop.permute.xlu0 %726
  %728 = vrot.lane.b32.xlu0 %v144, 28
  %v729 = vpop.permute.xlu0 %728
  %730 = vrot.lane.b32.xlu0 %v317, 28
  %v731 = vpop.permute.xlu0 %730
  %732 = vrot.lane.b32.xlu0 %v178, 56
  %v733 = vpop.permute.xlu0 %732
  %734 = vrot.lane.b32.xlu0 %v179, 56
  %v735 = vpop.permute.xlu0 %734
  %736 = vrot.lane.b32.xlu0 %v180, 56
  %v737 = vpop.permute.xlu0 %736
  %738 = vrot.lane.b32.xlu0 %v181, 56
  %v739 = vpop.permute.xlu0 %738
  %740 = vrot.lane.b32.xlu0 %v182, 56
  %v741 = vpop.permute.xlu0 %740
  %742 = vrot.lane.b32.xlu0 %v183, 56
  %v743 = vpop.permute.xlu0 %742
  %744 = vrot.lane.b32.xlu0 %v184, 56
  %v745 = vpop.permute.xlu0 %744
  %746 = vrot.lane.b32.xlu0 %v470, 56
  %v747 = vpop.permute.xlu0 %746
  %748 = vrot.lane.b32.xlu0 %v234, 84
  %v749 = vpop.permute.xlu0 %748
  %750 = vrot.lane.b32.xlu0 %v235, 84
  %v751 = vpop.permute.xlu0 %750
  %752 = vrot.lane.b32.xlu0 %v236, 84
  %v753 = vpop.permute.xlu0 %752
  %754 = vrot.lane.b32.xlu0 %v237, 84
  %v755 = vpop.permute.xlu0 %754
  %756 = vrot.lane.b32.xlu0 %v238, 84
  %v757 = vpop.permute.xlu0 %756
  %758 = vrot.lane.b32.xlu0 %v239, 84
  %v759 = vpop.permute.xlu0 %758
  %760 = vrot.lane.b32.xlu0 %v240, 84
  %v761 = vpop.permute.xlu0 %760
  %762 = vrot.lane.b32.xlu0 %v619, 84
  %v763 = vpop.permute.xlu0 %762
  %v766 = vunpack.c.l.b16 %v103
  %v767 = vunpack.c.l.b16 %v104
  %v768 = vpack.c.b16 %v767, %v766
  %769 = vrot.lane.b32.xlu0 %v290, 112
  %v770 = vpop.permute.xlu0 %769
  %771 = vrot.lane.b32.xlu0 %v291, 112
  %v772 = vpop.permute.xlu0 %771
  %773 = vrot.lane.b32.xlu0 %v292, 112
  %v774 = vpop.permute.xlu0 %773
  %775 = vrot.lane.b32.xlu0 %v293, 112
  %v776 = vpop.permute.xlu0 %775
  %777 = vrot.lane.b32.xlu0 %v294, 112
  %v778 = vpop.permute.xlu0 %777
  %779 = vrot.lane.b32.xlu0 %v295, 112
  %v780 = vpop.permute.xlu0 %779
  %781 = vrot.lane.b32.xlu0 %v296, 112
  %v782 = vpop.permute.xlu0 %781
  %783 = vrot.lane.b32.xlu0 %v768, 112
  %v784 = vpop.permute.xlu0 %783
  %v787 = vsel %vm334, %v289, %v717
  %v790 = vsel %vm334, %v290, %v719
  %v793 = vsel %vm334, %v291, %v721
  %v796 = vsel %vm334, %v292, %v723
  %v799 = vsel %vm334, %v293, %v725
  %v802 = vsel %vm334, %v294, %v727
  %v805 = vsel %vm334, %v295, %v729
  %v808 = vsel %vm334, %v296, %v731
  %v810 = vsel %vm359, %v787, %v733
  %v812 = vsel %vm359, %v790, %v735
  %v814 = vsel %vm359, %v793, %v737
  %v816 = vsel %vm359, %v796, %v739
  %v818 = vsel %vm359, %v799, %v741
  %v820 = vsel %vm359, %v802, %v743
  %v822 = vsel %vm359, %v805, %v745
  %v824 = vsel %vm359, %v808, %v747
  %v826 = vsel %vm376, %v810, %v749
  %v828 = vsel %vm376, %v812, %v751
  %v830 = vsel %vm376, %v814, %v753
  %v832 = vsel %vm376, %v816, %v755
  %v834 = vsel %vm376, %v818, %v757
  %v836 = vsel %vm376, %v820, %v759
  %v838 = vsel %vm376, %v822, %v761
  %v840 = vsel %vm376, %v824, %v763
  %v842 = vsel %vm393, %v826, %v770
  %v845 = vsel %vm393, %v828, %v772
  %v848 = vsel %vm393, %v830, %v774
  %v851 = vsel %vm393, %v832, %v776
  %v854 = vsel %vm393, %v834, %v778
  %v857 = vsel %vm393, %v836, %v780
  %v860 = vsel %vm393, %v838, %v782
  %v863 = vsel %vm393, %v840, %v784
  %v865 = vld [vmem:[%s1] sm:$0xff]
  %v866 = vld [vmem:[%s1 + $0x8] sm:$0xff]
  %v867 = vld [vmem:[%s1 + $0x10] sm:$0xff]
  %v868 = vld [vmem:[%s1 + $0x18] sm:$0xff]
  %v869 = vld [vmem:[%s1 + $0x20] sm:$0xff]
  %v870 = vld [vmem:[%s1 + $0x28] sm:$0xff]
  %v871 = vld [vmem:[%s1 + $0x30] sm:$0xff]
  %v872 = vld [vmem:[%s1 + $0x38] sm:$0xff]
  %v873 = vld [vmem:[%s1 + $0x40] sm:$0xff]
  %v874 = vld [vmem:[%s1 + $0x48] sm:$0xff]
  %v875 = vld [vmem:[%s1 + $0x50] sm:$0xff]
  %v876 = vld [vmem:[%s1 + $0x58] sm:$0xff]
  %v877 = vld [vmem:[%s1 + $0x60] sm:$0xff]
  %v878 = vld [vmem:[%s1 + $0x68] sm:$0xff]
  %v879 = vld [vmem:[%s1 + $0x70] sm:$0xff]
  %v880 = vld [vmem:[%s1 + $0x78] sm:$0xff]
  %v881 = vld [vmem:[%s1 + $0x80] sm:$0xff]
  %v882 = vld [vmem:[%s1 + $0x88] sm:$0x33]
  %v901 = vunpack.c.l.b16 %v865
  %v902 = vunpack.c.h.b16 %v865
  %v903 = vunpack.c.l.b16 %v866
  %v904 = vunpack.c.h.b16 %v866
  %v905 = vunpack.c.l.b16 %v867
  %v906 = vunpack.c.h.b16 %v867
  %v907 = vunpack.c.l.b16 %v868
  %v908 = vunpack.c.h.b16 %v868
  %v909 = vunpack.c.l.b16 %v869
  %v910 = vunpack.c.h.b16 %v869
  %v911 = vunpack.c.l.b16 %v870
  %v912 = vunpack.c.h.b16 %v870
  %v913 = vunpack.c.l.b16 %v871
  %v914 = vunpack.c.h.b16 %v871
  %v915 = vunpack.c.l.b16 %v872
  %v916 = vunpack.c.h.b16 %v872
  %v917 = vunpack.c.l.b16 %v873
  %v918 = vunpack.c.h.b16 %v873
  %v919 = vunpack.c.l.b16 %v874
  %v920 = vunpack.c.h.b16 %v874
  %v921 = vunpack.c.l.b16 %v875
  %v922 = vunpack.c.h.b16 %v875
  %v923 = vunpack.c.l.b16 %v876
  %v924 = vunpack.c.h.b16 %v876
  %v925 = vunpack.c.l.b16 %v877
  %v926 = vunpack.c.h.b16 %v877
  %v927 = vunpack.c.l.b16 %v878
  %v928 = vunpack.c.h.b16 %v878
  %v929 = vunpack.c.l.b16 %v879
  %v930 = vunpack.c.h.b16 %v879
  %v931 = vunpack.c.l.b16 %v880
  %v932 = vunpack.c.h.b16 %v880
  %v933 = vunpack.c.l.b16 %v881
  %v934 = vunpack.c.h.b16 %v881
  %v935 = vunpack.c.l.b16 %v882
  %v936 = vunpack.c.h.b16 %v882
  %v937 = vpack.c.b16 %v903, %v901
  %v938 = vpack.c.b16 %v904, %v902
  %v939 = vpack.c.b16 %v907, %v905
  %v940 = vpack.c.b16 %v908, %v906
  %v941 = vpack.c.b16 %v911, %v909
  %v942 = vpack.c.b16 %v912, %v910
  %v943 = vpack.c.b16 %v915, %v913
  %v944 = vpack.c.b16 %v916, %v914
  %v945 = vpack.c.b16 %v919, %v917
  %v946 = vpack.c.b16 %v920, %v918
  %v947 = vpack.c.b16 %v923, %v921
  %v948 = vpack.c.b16 %v924, %v922
  %v949 = vpack.c.b16 %v927, %v925
  %v950 = vpack.c.b16 %v928, %v926
  %v951 = vpack.c.b16 %v931, %v929
  %v952 = vpack.c.b16 %v932, %v930
  %v953 = vpack.c.b16 %v935, %v933
  %v954 = vpack.c.b16 %v936, %v934
  %vm971 = vcmask 97280
  %v972 = vsel %vm971, %v319, 0
  %v974 = vsel %vm971, %v321, 0
  %v976 = vsel %vm971, %v323, 0
  %v978 = vsel %vm971, %v325, 0
  %v980 = vsel %vm971, %v327, 0
  %v982 = vsel %vm971, %v329, 0
  %v984 = vsel %vm971, %v331, 0
  %v986 = vsel %vm971, %v333, 0
  %v988 = vsel %vm971, %v472, 0
  %v990 = vsel %vm971, %v474, 0
  %v992 = vsel %vm971, %v476, 0
  %v994 = vsel %vm971, %v478, 0
  %v996 = vsel %vm971, %v480, 0
  %v998 = vsel %vm971, %v482, 0
  %v1000 = vsel %vm971, %v484, 0
  %v1002 = vsel %vm971, %v486, 0
  %v1004 = vsel %vm971, %v621, 0
  %v1006 = vsel %vm971, %v623, 0
  %v1008 = vsel %vm971, %v625, 0
  %v1010 = vsel %vm971, %v627, 0
  %v1012 = vsel %vm971, %v629, 0
  %v1014 = vsel %vm971, %v631, 0
  %v1016 = vsel %vm971, %v633, 0
  %v1018 = vsel %vm971, %v635, 0
  %v1020 = vsel %vm971, %v770, 0
  %v1022 = vsel %vm971, %v772, 0
  %v1024 = vsel %vm971, %v774, 0
  %v1026 = vsel %vm971, %v776, 0
  %v1028 = vsel %vm971, %v778, 0
  %v1030 = vsel %vm971, %v780, 0
  %v1032 = vsel %vm971, %v782, 0
  %v1034 = vsel %vm971, %v784, 0
  %vm1036 = vcmask 1045504
  %v1038 = vsel %vm1036, %v953, 0
  %v1041 = vsel %vm1036, %v954, 0
  %1043 = vmatprep.subr.bf16.mxu0 %v938
  %1044 = vmatpush1.bf16.msra.mxu0 %v937
  %1045 = vmatprep.subr.bf16.mxu0 %v940
  %1046 = vmatpush1.bf16.msra.mxu0 %v939
  %1047 = vmatprep.subr.bf16.mxu0 %v942
  %1048 = vmatpush1.bf16.msra.mxu0 %v941
  %1049 = vmatprep.subr.bf16.mxu0 %v944
  %1050 = vmatpush1.bf16.msra.mxu0 %v943
  %1051 = vmatprep.subr.bf16.mxu0 %v946
  %1052 = vmatpush1.bf16.msra.mxu0 %v945
  %1053 = vmatprep.subr.bf16.mxu0 %v948
  %1054 = vmatpush1.bf16.msra.mxu0 %v947
  %1055 = vmatprep.subr.bf16.mxu0 %v950
  %1056 = vmatpush1.bf16.msra.mxu0 %v949
  %1057 = vmatprep.subr.bf16.mxu0 %v952
  %1058 = vmatpush1.bf16.msra.mxu0 %v951
  %1059 = vmatprep.subr.bf16.mxu0 %v1041
  %1060 = vmatpush1.bf16.msra.mxu0 %v1038
  %1061 = vmatprep.subr.bf16.mxu0 0
  %1062 = vmatpush1.bf16.msra.mxu0 0
  %1063 = vmatprep.subr.bf16.mxu0 0
  %1064 = vmatpush1.bf16.msra.mxu0 0
  %1065 = vmatprep.subr.bf16.mxu0 0
  %1066 = vmatpush1.bf16.msra.mxu0 0
  %1067 = vmatprep.subr.bf16.mxu0 0
  %1068 = vmatpush1.bf16.msra.mxu0 0
  %1069 = vmatprep.subr.bf16.mxu0 0
  %1070 = vmatpush1.bf16.msra.mxu0 0
  %1071 = vmatprep.subr.bf16.mxu0 0
  %1072 = vmatpush1.bf16.msra.mxu0 0
  %1073 = vmatprep.subr.bf16.mxu0 0
  %1074 = vmatpush1.bf16.msra.mxu0 0
  %1075 = vmatprep.mubr.bf16.mxu0 %v972
  %1076 = vmatmul.mubr.bf16.gmra.mrb[0].mxu0 %v395
  %v1077 = vpop.f32.mrb[0].mxu0
  %v1078 = vadd.f32 0.0, %v1077
  %v1079 = vpop.f32.mrb[0].mxu0
  %v1080 = vadd.f32 0.0, %v1079
  %v1081 = vpop.f32.mrb[0].mxu0
  %v1082 = vadd.f32 0.0, %v1081
  %v1083 = vpop.f32.mrb[0].mxu0
  %v1084 = vadd.f32 0.0, %v1083
  %1085 = vmatprep.mubr.bf16.mxu0 %v974
  %1086 = vmatmul.mubr.bf16.gmra.mrb[0].mxu0 %v398
  %v1087 = vpop.f32.mrb[0].mxu0
  %v1088 = vadd.f32 0.0, %v1087
  %v1089 = vpop.f32.mrb[0].mxu0
  %v1090 = vadd.f32 0.0, %v1089
  %v1091 = vpop.f32.mrb[0].mxu0
  %v1092 = vadd.f32 0.0, %v1091
  %v1093 = vpop.f32.mrb[0].mxu0
  %v1094 = vadd.f32 0.0, %v1093
  %1095 = vmatprep.mubr.bf16.mxu0 %v976
  %1096 = vmatmul.mubr.bf16.gmra.mrb[0].mxu0 %v401
  %v1097 = vpop.f32.mrb[0].mxu0
  %v1098 = vadd.f32 0.0, %v1097
  %v1099 = vpop.f32.mrb[0].mxu0
  %v1100 = vadd.f32 0.0, %v1099
  %v1101 = vpop.f32.mrb[0].mxu0
  %v1102 = vadd.f32 0.0, %v1101
  %v1103 = vpop.f32.mrb[0].mxu0
  %v1104 = vadd.f32 0.0, %v1103
  %1105 = vmatprep.mubr.bf16.mxu0 %v978
  %1106 = vmatmul.mubr.bf16.gmra.mrb[0].mxu0 %v404
  %v1107 = vpop.f32.mrb[0].mxu0
  %v1108 = vadd.f32 0.0, %v1107
  %v1109 = vpop.f32.mrb[0].mxu0
  %v1110 = vadd.f32 0.0, %v1109
  %v1111 = vpop.f32.mrb[0].mxu0
  %v1112 = vadd.f32 0.0, %v1111
  %v1113 = vpop.f32.mrb[0].mxu0
  %v1114 = vadd.f32 0.0, %v1113
  %1115 = vmatprep.mubr.bf16.mxu0 %v980
  %1116 = vmatmul.mubr.bf16.gmra.mrb[0].mxu0 %v407
  %v1117 = vpop.f32.mrb[0].mxu0
  %v1118 = vadd.f32 0.0, %v1117
  %v1119 = vpop.f32.mrb[0].mxu0
  %v1120 = vadd.f32 0.0, %v1119
  %v1121 = vpop.f32.mrb[0].mxu0
  %v1122 = vadd.f32 0.0, %v1121
  %v1123 = vpop.f32.mrb[0].mxu0
  %v1124 = vadd.f32 0.0, %v1123
  %1125 = vmatprep.mubr.bf16.mxu0 %v982
  %1126 = vmatmul.mubr.bf16.gmra.mrb[0].mxu0 %v410
  %v1127 = vpop.f32.mrb[0].mxu0
  %v1128 = vadd.f32 0.0, %v1127
  %v1129 = vpop.f32.mrb[0].mxu0
  %v1130 = vadd.f32 0.0, %v1129
  %v1131 = vpop.f32.mrb[0].mxu0
  %v1132 = vadd.f32 0.0, %v1131
  %v1133 = vpop.f32.mrb[0].mxu0
  %v1134 = vadd.f32 0.0, %v1133
  %1135 = vmatprep.mubr.bf16.mxu0 %v984
  %1136 = vmatmul.mubr.bf16.gmra.mrb[0].mxu0 %v413
  %v1137 = vpop.f32.mrb[0].mxu0
  %v1138 = vadd.f32 0.0, %v1137
  %v1139 = vpop.f32.mrb[0].mxu0
  %v1140 = vadd.f32 0.0, %v1139
  %v1141 = vpop.f32.mrb[0].mxu0
  %v1142 = vadd.f32 0.0, %v1141
  %v1143 = vpop.f32.mrb[0].mxu0
  %v1144 = vadd.f32 0.0, %v1143
  %1145 = vmatprep.mubr.bf16.mxu0 %v986
  %1146 = vmatmul.mubr.bf16.gmra.mrb[0].mxu0 %v416
  %v1147 = vpop.f32.mrb[0].mxu0
  %v1148 = vadd.f32 0.0, %v1147
  %v1149 = vpop.f32.mrb[0].mxu0
  %v1150 = vadd.f32 0.0, %v1149
  %v1151 = vpop.f32.mrb[0].mxu0
  %v1152 = vadd.f32 0.0, %v1151
  %v1153 = vpop.f32.mrb[0].mxu0
  %v1154 = vadd.f32 0.0, %v1153
  %1155 = vmatprep.mubr.bf16.mxu0 %v988
  %1156 = vmatmul.mubr.bf16.gmra.mrb[0].mxu0 %v544
  %v1157 = vpop.f32.mrb[0].mxu0
  %v1158 = vadd.f32 0.0, %v1157
  %v1159 = vpop.f32.mrb[0].mxu0
  %v1160 = vadd.f32 0.0, %v1159
  %v1161 = vpop.f32.mrb[0].mxu0
  %v1162 = vadd.f32 0.0, %v1161
  %v1163 = vpop.f32.mrb[0].mxu0
  %v1164 = vadd.f32 0.0, %v1163
  %1165 = vmatprep.mubr.bf16.mxu0 %v990
  %1166 = vmatmul.mubr.bf16.gmra.mrb[0].mxu0 %v547
  %v1167 = vpop.f32.mrb[0].mxu0
  %v1168 = vadd.f32 0.0, %v1167
  %v1169 = vpop.f32.mrb[0].mxu0
  %v1170 = vadd.f32 0.0, %v1169
  %v1171 = vpop.f32.mrb[0].mxu0
  %v1172 = vadd.f32 0.0, %v1171
  %v1173 = vpop.f32.mrb[0].mxu0
  %v1174 = vadd.f32 0.0, %v1173
  %1175 = vmatprep.mubr.bf16.mxu0 %v992
  %1176 = vmatmul.mubr.bf16.gmra.mrb[0].mxu0 %v550
  %v1177 = vpop.f32.mrb[0].mxu0
  %v1178 = vadd.f32 0.0, %v1177
  %v1179 = vpop.f32.mrb[0].mxu0
  %v1180 = vadd.f32 0.0, %v1179
  %v1181 = vpop.f32.mrb[0].mxu0
  %v1182 = vadd.f32 0.0, %v1181
  %v1183 = vpop.f32.mrb[0].mxu0
  %v1184 = vadd.f32 0.0, %v1183
  %1185 = vmatprep.mubr.bf16.mxu0 %v994
  %1186 = vmatmul.mubr.bf16.gmra.mrb[0].mxu0 %v553
  %v1187 = vpop.f32.mrb[0].mxu0
  %v1188 = vadd.f32 0.0, %v1187
  %v1189 = vpop.f32.mrb[0].mxu0
  %v1190 = vadd.f32 0.0, %v1189
  %v1191 = vpop.f32.mrb[0].mxu0
  %v1192 = vadd.f32 0.0, %v1191
  %v1193 = vpop.f32.mrb[0].mxu0
  %v1194 = vadd.f32 0.0, %v1193
  %1195 = vmatprep.mubr.bf16.mxu0 %v996
  %1196 = vmatmul.mubr.bf16.gmra.mrb[0].mxu0 %v556
  %v1197 = vpop.f32.mrb[0].mxu0
  %v1198 = vadd.f32 0.0, %v1197
  %v1199 = vpop.f32.mrb[0].mxu0
  %v1200 = vadd.f32 0.0, %v1199
  %v1201 = vpop.f32.mrb[0].mxu0
  %v1202 = vadd.f32 0.0, %v1201
  %v1203 = vpop.f32.mrb[0].mxu0
  %v1204 = vadd.f32 0.0, %v1203
  %1205 = vmatprep.mubr.bf16.mxu0 %v998
  %1206 = vmatmul.mubr.bf16.gmra.mrb[0].mxu0 %v559
  %v1207 = vpop.f32.mrb[0].mxu0
  %v1208 = vadd.f32 0.0, %v1207
  %v1209 = vpop.f32.mrb[0].mxu0
  %v1210 = vadd.f32 0.0, %v1209
  %v1211 = vpop.f32.mrb[0].mxu0
  %v1212 = vadd.f32 0.0, %v1211
  %v1213 = vpop.f32.mrb[0].mxu0
  %v1214 = vadd.f32 0.0, %v1213
  %1215 = vmatprep.mubr.bf16.mxu0 %v1000
  %1216 = vmatmul.mubr.bf16.gmra.mrb[0].mxu0 %v562
  %v1217 = vpop.f32.mrb[0].mxu0
  %v1218 = vadd.f32 0.0, %v1217
  %v1219 = vpop.f32.mrb[0].mxu0
  %v1220 = vadd.f32 0.0, %v1219
  %v1221 = vpop.f32.mrb[0].mxu0
  %v1222 = vadd.f32 0.0, %v1221
  %v1223 = vpop.f32.mrb[0].mxu0
  %v1224 = vadd.f32 0.0, %v1223
  %1225 = vmatprep.mubr.bf16.mxu0 %v1002
  %1226 = vmatmul.mubr.bf16.gmra.mrb[0].mxu0 %v565
  %v1227 = vpop.f32.mrb[0].mxu0
  %v1228 = vadd.f32 0.0, %v1227
  %v1229 = vpop.f32.mrb[0].mxu0
  %v1230 = vadd.f32 0.0, %v1229
  %v1231 = vpop.f32.mrb[0].mxu0
  %v1232 = vadd.f32 0.0, %v1231
  %v1233 = vpop.f32.mrb[0].mxu0
  %v1234 = vadd.f32 0.0, %v1233
  %1235 = vmatprep.mubr.bf16.mxu0 %v1004
  %1236 = vmatmul.mubr.bf16.gmra.mrb[0].mxu0 %v693
  %v1237 = vpop.f32.mrb[0].mxu0
  %v1238 = vadd.f32 0.0, %v1237
  %v1239 = vpop.f32.mrb[0].mxu0
  %v1240 = vadd.f32 0.0, %v1239
  %v1241 = vpop.f32.mrb[0].mxu0
  %v1242 = vadd.f32 0.0, %v1241
  %v1243 = vpop.f32.mrb[0].mxu0
  %v1244 = vadd.f32 0.0, %v1243
  %1245 = vmatprep.mubr.bf16.mxu0 %v1006
  %1246 = vmatmul.mubr.bf16.gmra.mrb[0].mxu0 %v696
  %v1247 = vpop.f32.mrb[0].mxu0
  %v1248 = vadd.f32 0.0, %v1247
  %v1249 = vpop.f32.mrb[0].mxu0
  %v1250 = vadd.f32 0.0, %v1249
  %v1251 = vpop.f32.mrb[0].mxu0
  %v1252 = vadd.f32 0.0, %v1251
  %v1253 = vpop.f32.mrb[0].mxu0
  %v1254 = vadd.f32 0.0, %v1253
  %1255 = vmatprep.mubr.bf16.mxu0 %v1008
  %1256 = vmatmul.mubr.bf16.gmra.mrb[0].mxu0 %v699
  %v1257 = vpop.f32.mrb[0].mxu0
  %v1258 = vadd.f32 0.0, %v1257
  %v1259 = vpop.f32.mrb[0].mxu0
  %v1260 = vadd.f32 0.0, %v1259
  %v1261 = vpop.f32.mrb[0].mxu0
  %v1262 = vadd.f32 0.0, %v1261
  %v1263 = vpop.f32.mrb[0].mxu0
  %v1264 = vadd.f32 0.0, %v1263
  %1265 = vmatprep.mubr.bf16.mxu0 %v1010
  %1266 = vmatmul.mubr.bf16.gmra.mrb[0].mxu0 %v702
  %v1267 = vpop.f32.mrb[0].mxu0
  %v1268 = vadd.f32 0.0, %v1267
  %v1269 = vpop.f32.mrb[0].mxu0
  %v1270 = vadd.f32 0.0, %v1269
  %v1271 = vpop.f32.mrb[0].mxu0
  %v1272 = vadd.f32 0.0, %v1271
  %v1273 = vpop.f32.mrb[0].mxu0
  %v1274 = vadd.f32 0.0, %v1273
  %1275 = vmatprep.mubr.bf16.mxu0 %v1012
  %1276 = vmatmul.mubr.bf16.gmra.mrb[0].mxu0 %v705
  %v1277 = vpop.f32.mrb[0].mxu0
  %v1278 = vadd.f32 0.0, %v1277
  %v1279 = vpop.f32.mrb[0].mxu0
  %v1280 = vadd.f32 0.0, %v1279
  %v1281 = vpop.f32.mrb[0].mxu0
  %v1282 = vadd.f32 0.0, %v1281
  %v1283 = vpop.f32.mrb[0].mxu0
  %v1284 = vadd.f32 0.0, %v1283
  %1285 = vmatprep.mubr.bf16.mxu0 %v1014
  %1286 = vmatmul.mubr.bf16.gmra.mrb[0].mxu0 %v708
  %v1287 = vpop.f32.mrb[0].mxu0
  %v1288 = vadd.f32 0.0, %v1287
  %v1289 = vpop.f32.mrb[0].mxu0
  %v1290 = vadd.f32 0.0, %v1289
  %v1291 = vpop.f32.mrb[0].mxu0
  %v1292 = vadd.f32 0.0, %v1291
  %v1293 = vpop.f32.mrb[0].mxu0
  %v1294 = vadd.f32 0.0, %v1293
  %1295 = vmatprep.mubr.bf16.mxu0 %v1016
  %1296 = vmatmul.mubr.bf16.gmra.mrb[0].mxu0 %v711
  %v1297 = vpop.f32.mrb[0].mxu0
  %v1298 = vadd.f32 0.0, %v1297
  %v1299 = vpop.f32.mrb[0].mxu0
  %v1300 = vadd.f32 0.0, %v1299
  %v1301 = vpop.f32.mrb[0].mxu0
  %v1302 = vadd.f32 0.0, %v1301
  %v1303 = vpop.f32.mrb[0].mxu0
  %v1304 = vadd.f32 0.0, %v1303
  %1305 = vmatprep.mubr.bf16.mxu0 %v1018
  %1306 = vmatmul.mubr.bf16.gmra.mrb[0].mxu0 %v714
  %v1307 = vpop.f32.mrb[0].mxu0
  %v1308 = vadd.f32 0.0, %v1307
  %v1309 = vpop.f32.mrb[0].mxu0
  %v1310 = vadd.f32 0.0, %v1309
  %v1311 = vpop.f32.mrb[0].mxu0
  %v1312 = vadd.f32 0.0, %v1311
  %v1313 = vpop.f32.mrb[0].mxu0
  %v1314 = vadd.f32 0.0, %v1313
  %1315 = vmatprep.mubr.bf16.mxu0 %v1020
  %1316 = vmatmul.mubr.bf16.gmra.mrb[0].mxu0 %v842
  %v1317 = vpop.f32.mrb[0].mxu0
  %v1318 = vadd.f32 0.0, %v1317
  %v1319 = vpop.f32.mrb[0].mxu0
  %v1320 = vadd.f32 0.0, %v1319
  %v1321 = vpop.f32.mrb[0].mxu0
  %v1322 = vadd.f32 0.0, %v1321
  %v1323 = vpop.f32.mrb[0].mxu0
  %v1324 = vadd.f32 0.0, %v1323
  %1325 = vmatprep.mubr.bf16.mxu0 %v1022
  %1326 = vmatmul.mubr.bf16.gmra.mrb[0].mxu0 %v845
  %v1327 = vpop.f32.mrb[0].mxu0
  %v1328 = vadd.f32 0.0, %v1327
  %v1329 = vpop.f32.mrb[0].mxu0
  %v1330 = vadd.f32 0.0, %v1329
  %v1331 = vpop.f32.mrb[0].mxu0
  %v1332 = vadd.f32 0.0, %v1331
  %v1333 = vpop.f32.mrb[0].mxu0
  %v1334 = vadd.f32 0.0, %v1333
  %1335 = vmatprep.mubr.bf16.mxu0 %v1024
  %1336 = vmatmul.mubr.bf16.gmra.mrb[0].mxu0 %v848
  %v1337 = vpop.f32.mrb[0].mxu0
  %v1338 = vadd.f32 0.0, %v1337
  %v1339 = vpop.f32.mrb[0].mxu0
  %v1340 = vadd.f32 0.0, %v1339
  %v1341 = vpop.f32.mrb[0].mxu0
  %v1342 = vadd.f32 0.0, %v1341
  %v1343 = vpop.f32.mrb[0].mxu0
  %v1344 = vadd.f32 0.0, %v1343
  %1345 = vmatprep.mubr.bf16.mxu0 %v1026
  %1346 = vmatmul.mubr.bf16.gmra.mrb[0].mxu0 %v851
  %v1347 = vpop.f32.mrb[0].mxu0
  %v1348 = vadd.f32 0.0, %v1347
  %v1349 = vpop.f32.mrb[0].mxu0
  %v1350 = vadd.f32 0.0, %v1349
  %v1351 = vpop.f32.mrb[0].mxu0
  %v1352 = vadd.f32 0.0, %v1351
  %v1353 = vpop.f32.mrb[0].mxu0
  %v1354 = vadd.f32 0.0, %v1353
  %1355 = vmatprep.mubr.bf16.mxu0 %v1028
  %1356 = vmatmul.mubr.bf16.gmra.mrb[0].mxu0 %v854
  %v1357 = vpop.f32.mrb[0].mxu0
  %v1358 = vadd.f32 0.0, %v1357
  %v1359 = vpop.f32.mrb[0].mxu0
  %v1360 = vadd.f32 0.0, %v1359
  %v1361 = vpop.f32.mrb[0].mxu0
  %v1362 = vadd.f32 0.0, %v1361
  %v1363 = vpop.f32.mrb[0].mxu0
  %v1364 = vadd.f32 0.0, %v1363
  %1365 = vmatprep.mubr.bf16.mxu0 %v1030
  %1366 = vmatmul.mubr.bf16.gmra.mrb[0].mxu0 %v857
  %v1367 = vpop.f32.mrb[0].mxu0
  %v1368 = vadd.f32 0.0, %v1367
  %v1369 = vpop.f32.mrb[0].mxu0
  %v1370 = vadd.f32 0.0, %v1369
  %v1371 = vpop.f32.mrb[0].mxu0
  %v1372 = vadd.f32 0.0, %v1371
  %v1373 = vpop.f32.mrb[0].mxu0
  %v1374 = vadd.f32 0.0, %v1373
  %1375 = vmatprep.mubr.bf16.mxu0 %v1032
  %1376 = vmatmul.mubr.bf16.gmra.mrb[0].mxu0 %v860
  %v1377 = vpop.f32.mrb[0].mxu0
  %v1378 = vadd.f32 0.0, %v1377
  %v1379 = vpop.f32.mrb[0].mxu0
  %v1380 = vadd.f32 0.0, %v1379
  %v1381 = vpop.f32.mrb[0].mxu0
  %v1382 = vadd.f32 0.0, %v1381
  %v1383 = vpop.f32.mrb[0].mxu0
  %v1384 = vadd.f32 0.0, %v1383
  %1385 = vmatprep.mubr.bf16.mxu0 %v1034
  %1386 = vmatmul.mubr.bf16.gmra.mrb[0].mxu0 %v863
  %v1387 = vpop.f32.mrb[0].mxu0
  %v1388 = vadd.f32 0.0, %v1387
  %v1389 = vpop.f32.mrb[0].mxu0
  %v1390 = vadd.f32 0.0, %v1389
  %v1391 = vpop.f32.mrb[0].mxu0
  %v1392 = vadd.f32 0.0, %v1391
  %v1393 = vpop.f32.mrb[0].mxu0
  %v1394 = vadd.f32 0.0, %v1393
  %1395 = vdwg.mxu0
  %1524 = vrot.lane.b32.xlu0 %v1078, 8
  %v1525 = vpop.permute.xlu0 %1524
  %1526 = vrot.lane.b32.xlu0 %v1080, 8
  %v1527 = vpop.permute.xlu0 %1526
  %1528 = vrot.lane.b32.xlu0 %v1082, 8
  %v1529 = vpop.permute.xlu0 %1528
  %1530 = vrot.lane.b32.xlu0 %v1084, 8
  %v1531 = vpop.permute.xlu0 %1530
  %1532 = vrot.lane.b32.xlu0 %v1088, 8
  %v1533 = vpop.permute.xlu0 %1532
  %1534 = vrot.lane.b32.xlu0 %v1090, 8
  %v1535 = vpop.permute.xlu0 %1534
  %1536 = vrot.lane.b32.xlu0 %v1092, 8
  %v1537 = vpop.permute.xlu0 %1536
  %1538 = vrot.lane.b32.xlu0 %v1094, 8
  %v1539 = vpop.permute.xlu0 %1538
  %1540 = vrot.lane.b32.xlu0 %v1098, 8
  %v1541 = vpop.permute.xlu0 %1540
  %1542 = vrot.lane.b32.xlu0 %v1100, 8
  %v1543 = vpop.permute.xlu0 %1542
  %1544 = vrot.lane.b32.xlu0 %v1102, 8
  %v1545 = vpop.permute.xlu0 %1544
  %1546 = vrot.lane.b32.xlu0 %v1104, 8
  %v1547 = vpop.permute.xlu0 %1546
  %1548 = vrot.lane.b32.xlu0 %v1108, 8
  %v1549 = vpop.permute.xlu0 %1548
  %1550 = vrot.lane.b32.xlu0 %v1110, 8
  %v1551 = vpop.permute.xlu0 %1550
  %1552 = vrot.lane.b32.xlu0 %v1112, 8
  %v1553 = vpop.permute.xlu0 %1552
  %1554 = vrot.lane.b32.xlu0 %v1114, 8
  %v1555 = vpop.permute.xlu0 %1554
  %1556 = vrot.lane.b32.xlu0 %v1118, 8
  %v1557 = vpop.permute.xlu0 %1556
  %1558 = vrot.lane.b32.xlu0 %v1120, 8
  %v1559 = vpop.permute.xlu0 %1558
  %1560 = vrot.lane.b32.xlu0 %v1122, 8
  %v1561 = vpop.permute.xlu0 %1560
  %1562 = vrot.lane.b32.xlu0 %v1124, 8
  %v1563 = vpop.permute.xlu0 %1562
  %1564 = vrot.lane.b32.xlu0 %v1128, 8
  %v1565 = vpop.permute.xlu0 %1564
  %1566 = vrot.lane.b32.xlu0 %v1130, 8
  %v1567 = vpop.permute.xlu0 %1566
  %1568 = vrot.lane.b32.xlu0 %v1132, 8
  %v1569 = vpop.permute.xlu0 %1568
  %1570 = vrot.lane.b32.xlu0 %v1134, 8
  %v1571 = vpop.permute.xlu0 %1570
  %1572 = vrot.lane.b32.xlu0 %v1138, 8
  %v1573 = vpop.permute.xlu0 %1572
  %1574 = vrot.lane.b32.xlu0 %v1140, 8
  %v1575 = vpop.permute.xlu0 %1574
  %1576 = vrot.lane.b32.xlu0 %v1142, 8
  %v1577 = vpop.permute.xlu0 %1576
  %1578 = vrot.lane.b32.xlu0 %v1144, 8
  %v1579 = vpop.permute.xlu0 %1578
  %1580 = vrot.lane.b32.xlu0 %v1148, 8
  %v1581 = vpop.permute.xlu0 %1580
  %1582 = vrot.lane.b32.xlu0 %v1150, 8
  %v1583 = vpop.permute.xlu0 %1582
  %1584 = vrot.lane.b32.xlu0 %v1152, 8
  %v1585 = vpop.permute.xlu0 %1584
  %1586 = vrot.lane.b32.xlu0 %v1154, 8
  %v1587 = vpop.permute.xlu0 %1586
  %1588 = vrot.lane.b32.xlu0 %v1158, 8
  %v1589 = vpop.permute.xlu0 %1588
  %1590 = vrot.lane.b32.xlu0 %v1160, 8
  %v1591 = vpop.permute.xlu0 %1590
  %1592 = vrot.lane.b32.xlu0 %v1162, 8
  %v1593 = vpop.permute.xlu0 %1592
  %1594 = vrot.lane.b32.xlu0 %v1164, 8
  %v1595 = vpop.permute.xlu0 %1594
  %1596 = vrot.lane.b32.xlu0 %v1168, 8
  %v1597 = vpop.permute.xlu0 %1596
  %1598 = vrot.lane.b32.xlu0 %v1170, 8
  %v1599 = vpop.permute.xlu0 %1598
  %1600 = vrot.lane.b32.xlu0 %v1172, 8
  %v1601 = vpop.permute.xlu0 %1600
  %1602 = vrot.lane.b32.xlu0 %v1174, 8
  %v1603 = vpop.permute.xlu0 %1602
  %1604 = vrot.lane.b32.xlu0 %v1178, 8
  %v1605 = vpop.permute.xlu0 %1604
  %1606 = vrot.lane.b32.xlu0 %v1180, 8
  %v1607 = vpop.permute.xlu0 %1606
  %1608 = vrot.lane.b32.xlu0 %v1182, 8
  %v1609 = vpop.permute.xlu0 %1608
  %1610 = vrot.lane.b32.xlu0 %v1184, 8
  %v1611 = vpop.permute.xlu0 %1610
  %1612 = vrot.lane.b32.xlu0 %v1188, 8
  %v1613 = vpop.permute.xlu0 %1612
  %1614 = vrot.lane.b32.xlu0 %v1190, 8
  %v1615 = vpop.permute.xlu0 %1614
  %1616 = vrot.lane.b32.xlu0 %v1192, 8
  %v1617 = vpop.permute.xlu0 %1616
  %1618 = vrot.lane.b32.xlu0 %v1194, 8
  %v1619 = vpop.permute.xlu0 %1618
  %1620 = vrot.lane.b32.xlu0 %v1198, 8
  %v1621 = vpop.permute.xlu0 %1620
  %1622 = vrot.lane.b32.xlu0 %v1200, 8
  %v1623 = vpop.permute.xlu0 %1622
  %1624 = vrot.lane.b32.xlu0 %v1202, 8
  %v1625 = vpop.permute.xlu0 %1624
  %1626 = vrot.lane.b32.xlu0 %v1204, 8
  %v1627 = vpop.permute.xlu0 %1626
  %1628 = vrot.lane.b32.xlu0 %v1208, 8
  %v1629 = vpop.permute.xlu0 %1628
  %1630 = vrot.lane.b32.xlu0 %v1210, 8
  %v1631 = vpop.permute.xlu0 %1630
  %1632 = vrot.lane.b32.xlu0 %v1212, 8
  %v1633 = vpop.permute.xlu0 %1632
  %1634 = vrot.lane.b32.xlu0 %v1214, 8
  %v1635 = vpop.permute.xlu0 %1634
  %1636 = vrot.lane.b32.xlu0 %v1218, 8
  %v1637 = vpop.permute.xlu0 %1636
  %1638 = vrot.lane.b32.xlu0 %v1220, 8
  %v1639 = vpop.permute.xlu0 %1638
  %1640 = vrot.lane.b32.xlu0 %v1222, 8
  %v1641 = vpop.permute.xlu0 %1640
  %1642 = vrot.lane.b32.xlu0 %v1224, 8
  %v1643 = vpop.permute.xlu0 %1642
  %1644 = vrot.lane.b32.xlu0 %v1228, 8
  %v1645 = vpop.permute.xlu0 %1644
  %1646 = vrot.lane.b32.xlu0 %v1230, 8
  %v1647 = vpop.permute.xlu0 %1646
  %1648 = vrot.lane.b32.xlu0 %v1232, 8
  %v1649 = vpop.permute.xlu0 %1648
  %1650 = vrot.lane.b32.xlu0 %v1234, 8
  %v1651 = vpop.permute.xlu0 %1650
  %1652 = vrot.lane.b32.xlu0 %v1238, 8
  %v1653 = vpop.permute.xlu0 %1652
  %1654 = vrot.lane.b32.xlu0 %v1240, 8
  %v1655 = vpop.permute.xlu0 %1654
  %1656 = vrot.lane.b32.xlu0 %v1242, 8
  %v1657 = vpop.permute.xlu0 %1656
  %1658 = vrot.lane.b32.xlu0 %v1244, 8
  %v1659 = vpop.permute.xlu0 %1658
  %1660 = vrot.lane.b32.xlu0 %v1248, 8
  %v1661 = vpop.permute.xlu0 %1660
  %1662 = vrot.lane.b32.xlu0 %v1250, 8
  %v1663 = vpop.permute.xlu0 %1662
  %1664 = vrot.lane.b32.xlu0 %v1252, 8
  %v1665 = vpop.permute.xlu0 %1664
  %1666 = vrot.lane.b32.xlu0 %v1254, 8
  %v1667 = vpop.permute.xlu0 %1666
  %1668 = vrot.lane.b32.xlu0 %v1258, 8
  %v1669 = vpop.permute.xlu0 %1668
  %1670 = vrot.lane.b32.xlu0 %v1260, 8
  %v1671 = vpop.permute.xlu0 %1670
  %1672 = vrot.lane.b32.xlu0 %v1262, 8
  %v1673 = vpop.permute.xlu0 %1672
  %1674 = vrot.lane.b32.xlu0 %v1264, 8
  %v1675 = vpop.permute.xlu0 %1674
  %1676 = vrot.lane.b32.xlu0 %v1268, 8
  %v1677 = vpop.permute.xlu0 %1676
  %1678 = vrot.lane.b32.xlu0 %v1270, 8
  %v1679 = vpop.permute.xlu0 %1678
  %1680 = vrot.lane.b32.xlu0 %v1272, 8
  %v1681 = vpop.permute.xlu0 %1680
  %1682 = vrot.lane.b32.xlu0 %v1274, 8
  %v1683 = vpop.permute.xlu0 %1682
  %1684 = vrot.lane.b32.xlu0 %v1278, 8
  %v1685 = vpop.permute.xlu0 %1684
  %1686 = vrot.lane.b32.xlu0 %v1280, 8
  %v1687 = vpop.permute.xlu0 %1686
  %1688 = vrot.lane.b32.xlu0 %v1282, 8
  %v1689 = vpop.permute.xlu0 %1688
  %1690 = vrot.lane.b32.xlu0 %v1284, 8
  %v1691 = vpop.permute.xlu0 %1690
  %1692 = vrot.lane.b32.xlu0 %v1288, 8
  %v1693 = vpop.permute.xlu0 %1692
  %1694 = vrot.lane.b32.xlu0 %v1290, 8
  %v1695 = vpop.permute.xlu0 %1694
  %1696 = vrot.lane.b32.xlu0 %v1292, 8
  %v1697 = vpop.permute.xlu0 %1696
  %1698 = vrot.lane.b32.xlu0 %v1294, 8
  %v1699 = vpop.permute.xlu0 %1698
  %1700 = vrot.lane.b32.xlu0 %v1298, 8
  %v1701 = vpop.permute.xlu0 %1700
  %1702 = vrot.lane.b32.xlu0 %v1300, 8
  %v1703 = vpop.permute.xlu0 %1702
  %1704 = vrot.lane.b32.xlu0 %v1302, 8
  %v1705 = vpop.permute.xlu0 %1704
  %1706 = vrot.lane.b32.xlu0 %v1304, 8
  %v1707 = vpop.permute.xlu0 %1706
  %1708 = vrot.lane.b32.xlu0 %v1308, 8
  %v1709 = vpop.permute.xlu0 %1708
  %1710 = vrot.lane.b32.xlu0 %v1310, 8
  %v1711 = vpop.permute.xlu0 %1710
  %1712 = vrot.lane.b32.xlu0 %v1312, 8
  %v1713 = vpop.permute.xlu0 %1712
  %1714 = vrot.lane.b32.xlu0 %v1314, 8
  %v1715 = vpop.permute.xlu0 %1714
  %1716 = vrot.lane.b32.xlu0 %v1318, 8
  %v1717 = vpop.permute.xlu0 %1716
  %1718 = vrot.lane.b32.xlu0 %v1320, 8
  %v1719 = vpop.permute.xlu0 %1718
  %1720 = vrot.lane.b32.xlu0 %v1322, 8
  %v1721 = vpop.permute.xlu0 %1720
  %1722 = vrot.lane.b32.xlu0 %v1324, 8
  %v1723 = vpop.permute.xlu0 %1722
  %1724 = vrot.lane.b32.xlu0 %v1328, 8
  %v1725 = vpop.permute.xlu0 %1724
  %1726 = vrot.lane.b32.xlu0 %v1330, 8
  %v1727 = vpop.permute.xlu0 %1726
  %1728 = vrot.lane.b32.xlu0 %v1332, 8
  %v1729 = vpop.permute.xlu0 %1728
  %1730 = vrot.lane.b32.xlu0 %v1334, 8
  %v1731 = vpop.permute.xlu0 %1730
  %1732 = vrot.lane.b32.xlu0 %v1338, 8
  %v1733 = vpop.permute.xlu0 %1732
  %1734 = vrot.lane.b32.xlu0 %v1340, 8
  %v1735 = vpop.permute.xlu0 %1734
  %1736 = vrot.lane.b32.xlu0 %v1342, 8
  %v1737 = vpop.permute.xlu0 %1736
  %1738 = vrot.lane.b32.xlu0 %v1344, 8
  %v1739 = vpop.permute.xlu0 %1738
  %1740 = vrot.lane.b32.xlu0 %v1348, 8
  %v1741 = vpop.permute.xlu0 %1740
  %1742 = vrot.lane.b32.xlu0 %v1350, 8
  %v1743 = vpop.permute.xlu0 %1742
  %1744 = vrot.lane.b32.xlu0 %v1352, 8
  %v1745 = vpop.permute.xlu0 %1744
  %1746 = vrot.lane.b32.xlu0 %v1354, 8
  %v1747 = vpop.permute.xlu0 %1746
  %1748 = vrot.lane.b32.xlu0 %v1358, 8
  %v1749 = vpop.permute.xlu0 %1748
  %1750 = vrot.lane.b32.xlu0 %v1360, 8
  %v1751 = vpop.permute.xlu0 %1750
  %1752 = vrot.lane.b32.xlu0 %v1362, 8
  %v1753 = vpop.permute.xlu0 %1752
  %1754 = vrot.lane.b32.xlu0 %v1364, 8
  %v1755 = vpop.permute.xlu0 %1754
  %1756 = vrot.lane.b32.xlu0 %v1368, 8
  %v1757 = vpop.permute.xlu0 %1756
  %1758 = vrot.lane.b32.xlu0 %v1370, 8
  %v1759 = vpop.permute.xlu0 %1758
  %1760 = vrot.lane.b32.xlu0 %v1372, 8
  %v1761 = vpop.permute.xlu0 %1760
  %1762 = vrot.lane.b32.xlu0 %v1374, 8
  %v1763 = vpop.permute.xlu0 %1762
  %1764 = vrot.lane.b32.xlu0 %v1378, 8
  %v1765 = vpop.permute.xlu0 %1764
  %1766 = vrot.lane.b32.xlu0 %v1380, 8
  %v1767 = vpop.permute.xlu0 %1766
  %1768 = vrot.lane.b32.xlu0 %v1382, 8
  %v1769 = vpop.permute.xlu0 %1768
  %1770 = vrot.lane.b32.xlu0 %v1384, 8
  %v1771 = vpop.permute.xlu0 %1770
  %1772 = vrot.lane.b32.xlu0 %v1388, 8
  %v1773 = vpop.permute.xlu0 %1772
  %1774 = vrot.lane.b32.xlu0 %v1390, 8
  %v1775 = vpop.permute.xlu0 %1774
  %1776 = vrot.lane.b32.xlu0 %v1392, 8
  %v1777 = vpop.permute.xlu0 %1776
  %1778 = vrot.lane.b32.xlu0 %v1394, 8
  %v1779 = vpop.permute.xlu0 %1778
  %vm1780 = vcmask 64512
  %v1781 = vsel %vm1780, %v1525, %v1527
  %v1782 = vsel %vm1780, %v1529, %v1531
  %v1783 = vsel %vm1780, %v1533, %v1535
  %v1784 = vsel %vm1780, %v1537, %v1539
  %v1785 = vsel %vm1780, %v1541, %v1543
  %v1786 = vsel %vm1780, %v1545, %v1547
  %v1787 = vsel %vm1780, %v1549, %v1551
  %v1788 = vsel %vm1780, %v1553, %v1555
  %v1789 = vsel %vm1780, %v1557, %v1559
  %v1790 = vsel %vm1780, %v1561, %v1563
  %v1791 = vsel %vm1780, %v1565, %v1567
  %v1792 = vsel %vm1780, %v1569, %v1571
  %v1793 = vsel %vm1780, %v1573, %v1575
  %v1794 = vsel %vm1780, %v1577, %v1579
  %v1795 = vsel %vm1780, %v1581, %v1583
  %v1796 = vsel %vm1780, %v1585, %v1587
  %v1797 = vsel %vm1780, %v1589, %v1591
  %v1798 = vsel %vm1780, %v1593, %v1595
  %v1799 = vsel %vm1780, %v1597, %v1599
  %v1800 = vsel %vm1780, %v1601, %v1603
  %v1801 = vsel %vm1780, %v1605, %v1607
  %v1802 = vsel %vm1780, %v1609, %v1611
  %v1803 = vsel %vm1780, %v1613, %v1615
  %v1804 = vsel %vm1780, %v1617, %v1619
  %v1805 = vsel %vm1780, %v1621, %v1623
  %v1806 = vsel %vm1780, %v1625, %v1627
  %v1807 = vsel %vm1780, %v1629, %v1631
  %v1808 = vsel %vm1780, %v1633, %v1635
  %v1809 = vsel %vm1780, %v1637, %v1639
  %v1810 = vsel %vm1780, %v1641, %v1643
  %v1811 = vsel %vm1780, %v1645, %v1647
  %v1812 = vsel %vm1780, %v1649, %v1651
  %v1813 = vsel %vm1780, %v1653, %v1655
  %v1814 = vsel %vm1780, %v1657, %v1659
  %v1815 = vsel %vm1780, %v1661, %v1663
  %v1816 = vsel %vm1780, %v1665, %v1667
  %v1817 = vsel %vm1780, %v1669, %v1671
  %v1818 = vsel %vm1780, %v1673, %v1675
  %v1819 = vsel %vm1780, %v1677, %v1679
  %v1820 = vsel %vm1780, %v1681, %v1683
  %v1821 = vsel %vm1780, %v1685, %v1687
  %v1822 = vsel %vm1780, %v1689, %v1691
  %v1823 = vsel %vm1780, %v1693, %v1695
  %v1824 = vsel %vm1780, %v1697, %v1699
  %v1825 = vsel %vm1780, %v1701, %v1703
  %v1826 = vsel %vm1780, %v1705, %v1707
  %v1827 = vsel %vm1780, %v1709, %v1711
  %v1828 = vsel %vm1780, %v1713, %v1715
  %v1829 = vsel %vm1780, %v1717, %v1719
  %v1830 = vsel %vm1780, %v1721, %v1723
  %v1831 = vsel %vm1780, %v1725, %v1727
  %v1832 = vsel %vm1780, %v1729, %v1731
  %v1833 = vsel %vm1780, %v1733, %v1735
  %v1834 = vsel %vm1780, %v1737, %v1739
  %v1835 = vsel %vm1780, %v1741, %v1743
  %v1836 = vsel %vm1780, %v1745, %v1747
  %v1837 = vsel %vm1780, %v1749, %v1751
  %v1838 = vsel %vm1780, %v1753, %v1755
  %v1839 = vsel %vm1780, %v1757, %v1759
  %v1840 = vsel %vm1780, %v1761, %v1763
  %v1841 = vsel %vm1780, %v1765, %v1767
  %v1842 = vsel %vm1780, %v1769, %v1771
  %v1843 = vsel %vm1780, %v1773, %v1775
  %v1844 = vsel %vm1780, %v1777, %v1779
  %v1909 = vmax.f32 %v1078, %v1781
  %v1910 = vmax.f32 %v1082, %v1782
  %v1911 = vmax.f32 %v1088, %v1783
  %v1912 = vmax.f32 %v1092, %v1784
  %v1913 = vmax.f32 %v1098, %v1785
  %v1914 = vmax.f32 %v1102, %v1786
  %v1915 = vmax.f32 %v1108, %v1787
  %v1916 = vmax.f32 %v1112, %v1788
  %v1917 = vmax.f32 %v1118, %v1789
  %v1918 = vmax.f32 %v1122, %v1790
  %v1919 = vmax.f32 %v1128, %v1791
  %v1920 = vmax.f32 %v1132, %v1792
  %v1921 = vmax.f32 %v1138, %v1793
  %v1922 = vmax.f32 %v1142, %v1794
  %v1923 = vmax.f32 %v1148, %v1795
  %v1924 = vmax.f32 %v1152, %v1796
  %v1925 = vmax.f32 %v1158, %v1797
  %v1926 = vmax.f32 %v1162, %v1798
  %v1927 = vmax.f32 %v1168, %v1799
  %v1928 = vmax.f32 %v1172, %v1800
  %v1929 = vmax.f32 %v1178, %v1801
  %v1930 = vmax.f32 %v1182, %v1802
  %v1931 = vmax.f32 %v1188, %v1803
  %v1932 = vmax.f32 %v1192, %v1804
  %v1933 = vmax.f32 %v1198, %v1805
  %v1934 = vmax.f32 %v1202, %v1806
  %v1935 = vmax.f32 %v1208, %v1807
  %v1936 = vmax.f32 %v1212, %v1808
  %v1937 = vmax.f32 %v1218, %v1809
  %v1938 = vmax.f32 %v1222, %v1810
  %v1939 = vmax.f32 %v1228, %v1811
  %v1940 = vmax.f32 %v1232, %v1812
  %v1941 = vmax.f32 %v1238, %v1813
  %v1942 = vmax.f32 %v1242, %v1814
  %v1943 = vmax.f32 %v1248, %v1815
  %v1944 = vmax.f32 %v1252, %v1816
  %v1945 = vmax.f32 %v1258, %v1817
  %v1946 = vmax.f32 %v1262, %v1818
  %v1947 = vmax.f32 %v1268, %v1819
  %v1948 = vmax.f32 %v1272, %v1820
  %v1949 = vmax.f32 %v1278, %v1821
  %v1950 = vmax.f32 %v1282, %v1822
  %v1951 = vmax.f32 %v1288, %v1823
  %v1952 = vmax.f32 %v1292, %v1824
  %v1953 = vmax.f32 %v1298, %v1825
  %v1954 = vmax.f32 %v1302, %v1826
  %v1955 = vmax.f32 %v1308, %v1827
  %v1956 = vmax.f32 %v1312, %v1828
  %v1957 = vmax.f32 %v1318, %v1829
  %v1958 = vmax.f32 %v1322, %v1830
  %v1959 = vmax.f32 %v1328, %v1831
  %v1960 = vmax.f32 %v1332, %v1832
  %v1961 = vmax.f32 %v1338, %v1833
  %v1962 = vmax.f32 %v1342, %v1834
  %v1963 = vmax.f32 %v1348, %v1835
  %v1964 = vmax.f32 %v1352, %v1836
  %v1965 = vmax.f32 %v1358, %v1837
  %v1966 = vmax.f32 %v1362, %v1838
  %v1967 = vmax.f32 %v1368, %v1839
  %v1968 = vmax.f32 %v1372, %v1840
  %v1969 = vmax.f32 %v1378, %v1841
  %v1970 = vmax.f32 %v1382, %v1842
  %v1971 = vmax.f32 %v1388, %v1843
  %v1972 = vmax.f32 %v1392, %v1844
  %v1973 = vld [vmem:[%s2] sm:$0x1]
  %v1974 = vmax.f32 %v1909, %v1925
  %v1975 = vmax.f32 %v1910, %v1926
  %v1976 = vmax.f32 %v1911, %v1927
  %v1977 = vmax.f32 %v1912, %v1928
  %v1978 = vmax.f32 %v1913, %v1929
  %v1979 = vmax.f32 %v1914, %v1930
  %v1980 = vmax.f32 %v1915, %v1931
  %v1981 = vmax.f32 %v1916, %v1932
  %v1982 = vmax.f32 %v1917, %v1933
  %v1983 = vmax.f32 %v1918, %v1934
  %v1984 = vmax.f32 %v1919, %v1935
  %v1985 = vmax.f32 %v1920, %v1936
  %v1986 = vmax.f32 %v1921, %v1937
  %v1987 = vmax.f32 %v1922, %v1938
  %v1988 = vmax.f32 %v1923, %v1939
  %v1989 = vmax.f32 %v1924, %v1940
  %v1991 = vlaneseq
  %v1992 = vshrl.u32 %v1991, 7
  %v1993 = vsub.s32 0, %v1992
  %v1994 = vrot.slane %v1973, %v1993
  %v1996 = vadd.f32 %v1974, %v1994
  %v1997 = vadd.f32 %v1975, %v1994
  %v1998 = vadd.f32 %v1976, %v1994
  %v1999 = vadd.f32 %v1977, %v1994
  %v2000 = vadd.f32 %v1978, %v1994
  %v2001 = vadd.f32 %v1979, %v1994
  %v2002 = vadd.f32 %v1980, %v1994
  %v2003 = vadd.f32 %v1981, %v1994
  %v2004 = vadd.f32 %v1982, %v1994
  %v2005 = vadd.f32 %v1983, %v1994
  %v2006 = vadd.f32 %v1984, %v1994
  %v2007 = vadd.f32 %v1985, %v1994
  %v2008 = vadd.f32 %v1986, %v1994
  %v2009 = vadd.f32 %v1987, %v1994
  %v2010 = vadd.f32 %v1988, %v1994
  %v2011 = vadd.f32 %v1989, %v1994
  %v2012 = vmax.f32 %v1996, 0.0
  %v2013 = vmax.f32 %v1997, 0.0
  %v2014 = vmax.f32 %v1998, 0.0
  %v2015 = vmax.f32 %v1999, 0.0
  %v2016 = vmax.f32 %v2000, 0.0
  %v2017 = vmax.f32 %v2001, 0.0
  %v2018 = vmax.f32 %v2002, 0.0
  %v2019 = vmax.f32 %v2003, 0.0
  %v2020 = vmax.f32 %v2004, 0.0
  %v2021 = vmax.f32 %v2005, 0.0
  %v2022 = vmax.f32 %v2006, 0.0
  %v2023 = vmax.f32 %v2007, 0.0
  %v2024 = vmax.f32 %v2008, 0.0
  %v2025 = vmax.f32 %v2009, 0.0
  %v2026 = vmax.f32 %v2010, 0.0
  %v2027 = vmax.f32 %v2011, 0.0
  %v2028 = vmax.f32 %v1941, %v1957
  %v2029 = vmax.f32 %v1942, %v1958
  %v2030 = vmax.f32 %v1943, %v1959
  %v2031 = vmax.f32 %v1944, %v1960
  %v2032 = vmax.f32 %v1945, %v1961
  %v2033 = vmax.f32 %v1946, %v1962
  %v2034 = vmax.f32 %v1947, %v1963
  %v2035 = vmax.f32 %v1948, %v1964
  %v2036 = vmax.f32 %v1949, %v1965
  %v2037 = vmax.f32 %v1950, %v1966
  %v2038 = vmax.f32 %v1951, %v1967
  %v2039 = vmax.f32 %v1952, %v1968
  %v2040 = vmax.f32 %v1953, %v1969
  %v2041 = vmax.f32 %v1954, %v1970
  %v2042 = vmax.f32 %v1955, %v1971
  %v2043 = vmax.f32 %v1956, %v1972
  %v2044 = vadd.f32 %v2028, %v1994
  %v2045 = vadd.f32 %v2029, %v1994
  %v2046 = vadd.f32 %v2030, %v1994
  %v2047 = vadd.f32 %v2031, %v1994
  %v2048 = vadd.f32 %v2032, %v1994
  %v2049 = vadd.f32 %v2033, %v1994
  %v2050 = vadd.f32 %v2034, %v1994
  %v2051 = vadd.f32 %v2035, %v1994
  %v2052 = vadd.f32 %v2036, %v1994
  %v2053 = vadd.f32 %v2037, %v1994
  %v2054 = vadd.f32 %v2038, %v1994
  %v2055 = vadd.f32 %v2039, %v1994
  %v2056 = vadd.f32 %v2040, %v1994
  %v2057 = vadd.f32 %v2041, %v1994
  %v2058 = vadd.f32 %v2042, %v1994
  %v2059 = vadd.f32 %v2043, %v1994
  %v2060 = vmax.f32 %v2044, 0.0
  %v2061 = vmax.f32 %v2045, 0.0
  %v2062 = vmax.f32 %v2046, 0.0
  %v2063 = vmax.f32 %v2047, 0.0
  %v2064 = vmax.f32 %v2048, 0.0
  %v2065 = vmax.f32 %v2049, 0.0
  %v2066 = vmax.f32 %v2050, 0.0
  %v2067 = vmax.f32 %v2051, 0.0
  %v2068 = vmax.f32 %v2052, 0.0
  %v2069 = vmax.f32 %v2053, 0.0
  %v2070 = vmax.f32 %v2054, 0.0
  %v2071 = vmax.f32 %v2055, 0.0
  %v2072 = vmax.f32 %v2056, 0.0
  %v2073 = vmax.f32 %v2057, 0.0
  %v2074 = vmax.f32 %v2058, 0.0
  %v2075 = vmax.f32 %v2059, 0.0
  %2092 = vrot.lane.b32.xlu0 %v2060, 120
  %v2093 = vpop.permute.xlu0 %2092
  %2094 = vrot.lane.b32.xlu0 %v2061, 120
  %v2095 = vpop.permute.xlu0 %2094
  %2096 = vrot.lane.b32.xlu0 %v2062, 120
  %v2097 = vpop.permute.xlu0 %2096
  %2098 = vrot.lane.b32.xlu0 %v2063, 120
  %v2099 = vpop.permute.xlu0 %2098
  %2100 = vrot.lane.b32.xlu0 %v2064, 120
  %v2101 = vpop.permute.xlu0 %2100
  %2102 = vrot.lane.b32.xlu0 %v2065, 120
  %v2103 = vpop.permute.xlu0 %2102
  %2104 = vrot.lane.b32.xlu0 %v2066, 120
  %v2105 = vpop.permute.xlu0 %2104
  %2106 = vrot.lane.b32.xlu0 %v2067, 120
  %v2107 = vpop.permute.xlu0 %2106
  %2108 = vrot.lane.b32.xlu0 %v2068, 120
  %v2109 = vpop.permute.xlu0 %2108
  %2110 = vrot.lane.b32.xlu0 %v2069, 120
  %v2111 = vpop.permute.xlu0 %2110
  %2112 = vrot.lane.b32.xlu0 %v2070, 120
  %v2113 = vpop.permute.xlu0 %2112
  %2114 = vrot.lane.b32.xlu0 %v2071, 120
  %v2115 = vpop.permute.xlu0 %2114
  %2116 = vrot.lane.b32.xlu0 %v2072, 120
  %v2117 = vpop.permute.xlu0 %2116
  %2118 = vrot.lane.b32.xlu0 %v2073, 120
  %v2119 = vpop.permute.xlu0 %2118
  %2120 = vrot.lane.b32.xlu0 %v2074, 120
  %v2121 = vpop.permute.xlu0 %2120
  %2122 = vrot.lane.b32.xlu0 %v2075, 120
  %v2123 = vpop.permute.xlu0 %2122
  %2155 = vrot.lane.b32.xlu0 %v2014, 112
  %v2156 = vpop.permute.xlu0 %2155
  %2157 = vrot.lane.b32.xlu0 %v2015, 112
  %v2158 = vpop.permute.xlu0 %2157
  %2159 = vrot.lane.b32.xlu0 %v2016, 112
  %v2160 = vpop.permute.xlu0 %2159
  %2161 = vrot.lane.b32.xlu0 %v2017, 112
  %v2162 = vpop.permute.xlu0 %2161
  %2163 = vrot.lane.b32.xlu0 %v2018, 112
  %v2164 = vpop.permute.xlu0 %2163
  %2165 = vrot.lane.b32.xlu0 %v2019, 112
  %v2166 = vpop.permute.xlu0 %2165
  %2167 = vrot.lane.b32.xlu0 %v2020, 112
  %v2168 = vpop.permute.xlu0 %2167
  %2169 = vrot.lane.b32.xlu0 %v2021, 112
  %v2170 = vpop.permute.xlu0 %2169
  %2171 = vrot.lane.b32.xlu0 %v2022, 112
  %v2172 = vpop.permute.xlu0 %2171
  %2173 = vrot.lane.b32.xlu0 %v2023, 112
  %v2174 = vpop.permute.xlu0 %2173
  %2175 = vrot.lane.b32.xlu0 %v2024, 112
  %v2176 = vpop.permute.xlu0 %2175
  %2177 = vrot.lane.b32.xlu0 %v2025, 112
  %v2178 = vpop.permute.xlu0 %2177
  %2179 = vrot.lane.b32.xlu0 %v2026, 112
  %v2180 = vpop.permute.xlu0 %2179
  %2181 = vrot.lane.b32.xlu0 %v2027, 112
  %v2182 = vpop.permute.xlu0 %2181
  %2183 = vrot.lane.b32.xlu0 0.0, 112
  %v2184 = vpop.permute.xlu0 %2183
  %2200 = vrot.lane.b32.xlu0 %v2062, 104
  %v2201 = vpop.permute.xlu0 %2200
  %2202 = vrot.lane.b32.xlu0 %v2063, 104
  %v2203 = vpop.permute.xlu0 %2202
  %2204 = vrot.lane.b32.xlu0 %v2064, 104
  %v2205 = vpop.permute.xlu0 %2204
  %2206 = vrot.lane.b32.xlu0 %v2065, 104
  %v2207 = vpop.permute.xlu0 %2206
  %2208 = vrot.lane.b32.xlu0 %v2066, 104
  %v2209 = vpop.permute.xlu0 %2208
  %2210 = vrot.lane.b32.xlu0 %v2067, 104
  %v2211 = vpop.permute.xlu0 %2210
  %2212 = vrot.lane.b32.xlu0 %v2068, 104
  %v2213 = vpop.permute.xlu0 %2212
  %2214 = vrot.lane.b32.xlu0 %v2069, 104
  %v2215 = vpop.permute.xlu0 %2214
  %2216 = vrot.lane.b32.xlu0 %v2070, 104
  %v2217 = vpop.permute.xlu0 %2216
  %2218 = vrot.lane.b32.xlu0 %v2071, 104
  %v2219 = vpop.permute.xlu0 %2218
  %2220 = vrot.lane.b32.xlu0 %v2072, 104
  %v2221 = vpop.permute.xlu0 %2220
  %2222 = vrot.lane.b32.xlu0 %v2073, 104
  %v2223 = vpop.permute.xlu0 %2222
  %2224 = vrot.lane.b32.xlu0 %v2074, 104
  %v2225 = vpop.permute.xlu0 %2224
  %2226 = vrot.lane.b32.xlu0 %v2075, 104
  %v2227 = vpop.permute.xlu0 %2226
  %2228 = vrot.lane.b32.xlu0 0.0, 104
  %v2229 = vpop.permute.xlu0 %2228
  %2245 = vrot.lane.b32.xlu0 %v2016, 96
  %v2246 = vpop.permute.xlu0 %2245
  %2247 = vrot.lane.b32.xlu0 %v2017, 96
  %v2248 = vpop.permute.xlu0 %2247
  %2249 = vrot.lane.b32.xlu0 %v2018, 96
  %v2250 = vpop.permute.xlu0 %2249
  %2251 = vrot.lane.b32.xlu0 %v2019, 96
  %v2252 = vpop.permute.xlu0 %2251
  %2253 = vrot.lane.b32.xlu0 %v2020, 96
  %v2254 = vpop.permute.xlu0 %2253
  %2255 = vrot.lane.b32.xlu0 %v2021, 96
  %v2256 = vpop.permute.xlu0 %2255
  %2257 = vrot.lane.b32.xlu0 %v2022, 96
  %v2258 = vpop.permute.xlu0 %2257
  %2259 = vrot.lane.b32.xlu0 %v2023, 96
  %v2260 = vpop.permute.xlu0 %2259
  %2261 = vrot.lane.b32.xlu0 %v2024, 96
  %v2262 = vpop.permute.xlu0 %2261
  %2263 = vrot.lane.b32.xlu0 %v2025, 96
  %v2264 = vpop.permute.xlu0 %2263
  %2265 = vrot.lane.b32.xlu0 %v2026, 96
  %v2266 = vpop.permute.xlu0 %2265
  %2267 = vrot.lane.b32.xlu0 %v2027, 96
  %v2268 = vpop.permute.xlu0 %2267
  %2269 = vrot.lane.b32.xlu0 0.0, 96
  %v2270 = vpop.permute.xlu0 %2269
  %vm2284 = vcmask 982016
  %v2285 = vsel %vm2284, %v2012, %v2093
  %v2286 = vsel %vm2284, %v2013, %v2095
  %v2287 = vsel %vm2284, %v2014, %v2097
  %v2288 = vsel %vm2284, %v2015, %v2099
  %v2289 = vsel %vm2284, %v2016, %v2101
  %v2290 = vsel %vm2284, %v2017, %v2103
  %v2291 = vsel %vm2284, %v2018, %v2105
  %v2292 = vsel %vm2284, %v2019, %v2107
  %v2293 = vsel %vm2284, %v2020, %v2109
  %v2294 = vsel %vm2284, %v2021, %v2111
  %v2295 = vsel %vm2284, %v2022, %v2113
  %v2296 = vsel %vm2284, %v2023, %v2115
  %v2297 = vsel %vm2284, %v2024, %v2117
  %v2298 = vsel %vm2284, %v2025, %v2119
  %v2299 = vsel %vm2284, %v2026, %v2121
  %v2300 = vsel %vm2284, %v2027, %v2123
  %v2301 = vsel %vm393, %v2093, %v2156
  %v2302 = vsel %vm393, %v2095, %v2158
  %v2303 = vsel %vm393, %v2097, %v2160
  %v2304 = vsel %vm393, %v2099, %v2162
  %v2305 = vsel %vm393, %v2101, %v2164
  %v2306 = vsel %vm393, %v2103, %v2166
  %v2307 = vsel %vm393, %v2105, %v2168
  %v2308 = vsel %vm393, %v2107, %v2170
  %v2309 = vsel %vm393, %v2109, %v2172
  %v2310 = vsel %vm393, %v2111, %v2174
  %v2311 = vsel %vm393, %v2113, %v2176
  %v2312 = vsel %vm393, %v2115, %v2178
  %v2313 = vsel %vm393, %v2117, %v2180
  %v2314 = vsel %vm393, %v2119, %v2182
  %v2315 = vsel %vm393, %v2121, %v2184
  %v2316 = vsel %vm393, %v2123, %v2184
  %vm2317 = vcmask 850944
  %v2318 = vsel %vm2317, %v2156, %v2201
  %v2319 = vsel %vm2317, %v2158, %v2203
  %v2320 = vsel %vm2317, %v2160, %v2205
  %v2321 = vsel %vm2317, %v2162, %v2207
  %v2322 = vsel %vm2317, %v2164, %v2209
  %v2323 = vsel %vm2317, %v2166, %v2211
  %v2324 = vsel %vm2317, %v2168, %v2213
  %v2325 = vsel %vm2317, %v2170, %v2215
  %v2326 = vsel %vm2317, %v2172, %v2217
  %v2327 = vsel %vm2317, %v2174, %v2219
  %v2328 = vsel %vm2317, %v2176, %v2221
  %v2329 = vsel %vm2317, %v2178, %v2223
  %v2330 = vsel %vm2317, %v2180, %v2225
  %v2331 = vsel %vm2317, %v2182, %v2227
  %v2332 = vsel %vm2317, %v2184, %v2229
  %vm2333 = vcmask 785408
  %v2334 = vsel %vm2333, %v2201, %v2246
  %v2335 = vsel %vm2333, %v2203, %v2248
  %v2336 = vsel %vm2333, %v2205, %v2250
  %v2337 = vsel %vm2333, %v2207, %v2252
  %v2338 = vsel %vm2333, %v2209, %v2254
  %v2339 = vsel %vm2333, %v2211, %v2256
  %v2340 = vsel %vm2333, %v2213, %v2258
  %v2341 = vsel %vm2333, %v2215, %v2260
  %v2342 = vsel %vm2333, %v2217, %v2262
  %v2343 = vsel %vm2333, %v2219, %v2264
  %v2344 = vsel %vm2333, %v2221, %v2266
  %v2345 = vsel %vm2333, %v2223, %v2268
  %v2346 = vsel %vm2333, %v2225, %v2270
  %v2347 = vsel %vm2333, %v2227, %v2270
  %v2348 = vsel %vm2333, %v2229, %v2270
  %2349 = vrot.lane.b32.xlu0 %v2014, 120
  %v2350 = vpop.permute.xlu0 %2349
  %2351 = vrot.lane.b32.xlu0 %v2015, 120
  %v2352 = vpop.permute.xlu0 %2351
  %2353 = vrot.lane.b32.xlu0 %v2016, 120
  %v2354 = vpop.permute.xlu0 %2353
  %2355 = vrot.lane.b32.xlu0 %v2017, 120
  %v2356 = vpop.permute.xlu0 %2355
  %2357 = vrot.lane.b32.xlu0 %v2018, 120
  %v2358 = vpop.permute.xlu0 %2357
  %2359 = vrot.lane.b32.xlu0 %v2019, 120
  %v2360 = vpop.permute.xlu0 %2359
  %2361 = vrot.lane.b32.xlu0 %v2020, 120
  %v2362 = vpop.permute.xlu0 %2361
  %2363 = vrot.lane.b32.xlu0 %v2021, 120
  %v2364 = vpop.permute.xlu0 %2363
  %2365 = vrot.lane.b32.xlu0 %v2022, 120
  %v2366 = vpop.permute.xlu0 %2365
  %2367 = vrot.lane.b32.xlu0 %v2023, 120
  %v2368 = vpop.permute.xlu0 %2367
  %2369 = vrot.lane.b32.xlu0 %v2024, 120
  %v2370 = vpop.permute.xlu0 %2369
  %2371 = vrot.lane.b32.xlu0 %v2025, 120
  %v2372 = vpop.permute.xlu0 %2371
  %2373 = vrot.lane.b32.xlu0 %v2026, 120
  %v2374 = vpop.permute.xlu0 %2373
  %2375 = vrot.lane.b32.xlu0 %v2027, 120
  %v2376 = vpop.permute.xlu0 %2375
  %2377 = vrot.lane.b32.xlu0 0.0, 120
  %v2378 = vpop.permute.xlu0 %2377
  %2394 = vrot.lane.b32.xlu0 %v2062, 112
  %v2395 = vpop.permute.xlu0 %2394
  %2396 = vrot.lane.b32.xlu0 %v2063, 112
  %v2397 = vpop.permute.xlu0 %2396
  %2398 = vrot.lane.b32.xlu0 %v2064, 112
  %v2399 = vpop.permute.xlu0 %2398
  %2400 = vrot.lane.b32.xlu0 %v2065, 112
  %v2401 = vpop.permute.xlu0 %2400
  %2402 = vrot.lane.b32.xlu0 %v2066, 112
  %v2403 = vpop.permute.xlu0 %2402
  %2404 = vrot.lane.b32.xlu0 %v2067, 112
  %v2405 = vpop.permute.xlu0 %2404
  %2406 = vrot.lane.b32.xlu0 %v2068, 112
  %v2407 = vpop.permute.xlu0 %2406
  %2408 = vrot.lane.b32.xlu0 %v2069, 112
  %v2409 = vpop.permute.xlu0 %2408
  %2410 = vrot.lane.b32.xlu0 %v2070, 112
  %v2411 = vpop.permute.xlu0 %2410
  %2412 = vrot.lane.b32.xlu0 %v2071, 112
  %v2413 = vpop.permute.xlu0 %2412
  %2414 = vrot.lane.b32.xlu0 %v2072, 112
  %v2415 = vpop.permute.xlu0 %2414
  %2416 = vrot.lane.b32.xlu0 %v2073, 112
  %v2417 = vpop.permute.xlu0 %2416
  %2418 = vrot.lane.b32.xlu0 %v2074, 112
  %v2419 = vpop.permute.xlu0 %2418
  %2420 = vrot.lane.b32.xlu0 %v2075, 112
  %v2421 = vpop.permute.xlu0 %2420
  %2436 = vrot.lane.b32.xlu0 %v2016, 104
  %v2437 = vpop.permute.xlu0 %2436
  %2438 = vrot.lane.b32.xlu0 %v2017, 104
  %v2439 = vpop.permute.xlu0 %2438
  %2440 = vrot.lane.b32.xlu0 %v2018, 104
  %v2441 = vpop.permute.xlu0 %2440
  %2442 = vrot.lane.b32.xlu0 %v2019, 104
  %v2443 = vpop.permute.xlu0 %2442
  %2444 = vrot.lane.b32.xlu0 %v2020, 104
  %v2445 = vpop.permute.xlu0 %2444
  %2446 = vrot.lane.b32.xlu0 %v2021, 104
  %v2447 = vpop.permute.xlu0 %2446
  %2448 = vrot.lane.b32.xlu0 %v2022, 104
  %v2449 = vpop.permute.xlu0 %2448
  %2450 = vrot.lane.b32.xlu0 %v2023, 104
  %v2451 = vpop.permute.xlu0 %2450
  %2452 = vrot.lane.b32.xlu0 %v2024, 104
  %v2453 = vpop.permute.xlu0 %2452
  %2454 = vrot.lane.b32.xlu0 %v2025, 104
  %v2455 = vpop.permute.xlu0 %2454
  %2456 = vrot.lane.b32.xlu0 %v2026, 104
  %v2457 = vpop.permute.xlu0 %2456
  %2458 = vrot.lane.b32.xlu0 %v2027, 104
  %v2459 = vpop.permute.xlu0 %2458
  %2472 = vrot.lane.b32.xlu0 %v2064, 96
  %v2473 = vpop.permute.xlu0 %2472
  %2474 = vrot.lane.b32.xlu0 %v2065, 96
  %v2475 = vpop.permute.xlu0 %2474
  %2476 = vrot.lane.b32.xlu0 %v2066, 96
  %v2477 = vpop.permute.xlu0 %2476
  %2478 = vrot.lane.b32.xlu0 %v2067, 96
  %v2479 = vpop.permute.xlu0 %2478
  %2480 = vrot.lane.b32.xlu0 %v2068, 96
  %v2481 = vpop.permute.xlu0 %2480
  %2482 = vrot.lane.b32.xlu0 %v2069, 96
  %v2483 = vpop.permute.xlu0 %2482
  %2484 = vrot.lane.b32.xlu0 %v2070, 96
  %v2485 = vpop.permute.xlu0 %2484
  %2486 = vrot.lane.b32.xlu0 %v2071, 96
  %v2487 = vpop.permute.xlu0 %2486
  %2488 = vrot.lane.b32.xlu0 %v2072, 96
  %v2489 = vpop.permute.xlu0 %2488
  %2490 = vrot.lane.b32.xlu0 %v2073, 96
  %v2491 = vpop.permute.xlu0 %2490
  %2492 = vrot.lane.b32.xlu0 %v2074, 96
  %v2493 = vpop.permute.xlu0 %2492
  %2494 = vrot.lane.b32.xlu0 %v2075, 96
  %v2495 = vpop.permute.xlu0 %2494
  %v2508 = vsel %vm2284, %v2060, %v2350
  %v2509 = vsel %vm2284, %v2061, %v2352
  %v2510 = vsel %vm2284, %v2062, %v2354
  %v2511 = vsel %vm2284, %v2063, %v2356
  %v2512 = vsel %vm2284, %v2064, %v2358
  %v2513 = vsel %vm2284, %v2065, %v2360
  %v2514 = vsel %vm2284, %v2066, %v2362
  %v2515 = vsel %vm2284, %v2067, %v2364
  %v2516 = vsel %vm2284, %v2068, %v2366
  %v2517 = vsel %vm2284, %v2069, %v2368
  %v2518 = vsel %vm2284, %v2070, %v2370
  %v2519 = vsel %vm2284, %v2071, %v2372
  %v2520 = vsel %vm2284, %v2072, %v2374
  %v2521 = vsel %vm2284, %v2073, %v2376
  %v2522 = vsel %vm2284, %v2074, %v2378
  %v2523 = vsel %vm2284, %v2075, %v2378
  %v2524 = vsel %vm393, %v2350, %v2395
  %v2525 = vsel %vm393, %v2352, %v2397
  %v2526 = vsel %vm393, %v2354, %v2399
  %v2527 = vsel %vm393, %v2356, %v2401
  %v2528 = vsel %vm393, %v2358, %v2403
  %v2529 = vsel %vm393, %v2360, %v2405
  %v2530 = vsel %vm393, %v2362, %v2407
  %v2531 = vsel %vm393, %v2364, %v2409
  %v2532 = vsel %vm393, %v2366, %v2411
  %v2533 = vsel %vm393, %v2368, %v2413
  %v2534 = vsel %vm393, %v2370, %v2415
  %v2535 = vsel %vm393, %v2372, %v2417
  %v2536 = vsel %vm393, %v2374, %v2419
  %v2537 = vsel %vm393, %v2376, %v2421
  %v2538 = vsel %vm393, %v2378, %v2184
  %v2539 = vsel %vm2317, %v2395, %v2437
  %v2540 = vsel %vm2317, %v2397, %v2439
  %v2541 = vsel %vm2317, %v2399, %v2441
  %v2542 = vsel %vm2317, %v2401, %v2443
  %v2543 = vsel %vm2317, %v2403, %v2445
  %v2544 = vsel %vm2317, %v2405, %v2447
  %v2545 = vsel %vm2317, %v2407, %v2449
  %v2546 = vsel %vm2317, %v2409, %v2451
  %v2547 = vsel %vm2317, %v2411, %v2453
  %v2548 = vsel %vm2317, %v2413, %v2455
  %v2549 = vsel %vm2317, %v2415, %v2457
  %v2550 = vsel %vm2317, %v2417, %v2459
  %v2551 = vsel %vm2317, %v2419, %v2229
  %v2552 = vsel %vm2317, %v2421, %v2229
  %v2553 = vsel %vm2333, %v2437, %v2473
  %v2554 = vsel %vm2333, %v2439, %v2475
  %v2555 = vsel %vm2333, %v2441, %v2477
  %v2556 = vsel %vm2333, %v2443, %v2479
  %v2557 = vsel %vm2333, %v2445, %v2481
  %v2558 = vsel %vm2333, %v2447, %v2483
  %v2559 = vsel %vm2333, %v2449, %v2485
  %v2560 = vsel %vm2333, %v2451, %v2487
  %v2561 = vsel %vm2333, %v2453, %v2489
  %v2562 = vsel %vm2333, %v2455, %v2491
  %v2563 = vsel %vm2333, %v2457, %v2493
  %v2564 = vsel %vm2333, %v2459, %v2495
  %v2565 = vpack.c.bf16 %v2286, %v2285
  %v2566 = vpack.c.bf16 %v2302, %v2301
  %v2567 = vpack.c.bf16 %v2319, %v2318
  %v2568 = vpack.c.bf16 %v2335, %v2334
  %v2569 = vpack.c.bf16 %v2248, %v2246
  %v2570 = vpack.c.bf16 %v2288, %v2287
  %v2571 = vpack.c.bf16 %v2304, %v2303
  %v2572 = vpack.c.bf16 %v2321, %v2320
  %v2573 = vpack.c.bf16 %v2337, %v2336
  %v2574 = vpack.c.bf16 %v2252, %v2250
  %v2575 = vpack.c.bf16 %v2290, %v2289
  %v2576 = vpack.c.bf16 %v2306, %v2305
  %v2577 = vpack.c.bf16 %v2323, %v2322
  %v2578 = vpack.c.bf16 %v2339, %v2338
  %v2579 = vpack.c.bf16 %v2256, %v2254
  %v2580 = vpack.c.bf16 %v2292, %v2291
  %v2581 = vpack.c.bf16 %v2308, %v2307
  %v2582 = vpack.c.bf16 %v2325, %v2324
  %v2583 = vpack.c.bf16 %v2341, %v2340
  %v2584 = vpack.c.bf16 %v2260, %v2258
  %v2585 = vpack.c.bf16 %v2294, %v2293
  %v2586 = vpack.c.bf16 %v2310, %v2309
  %v2587 = vpack.c.bf16 %v2327, %v2326
  %v2588 = vpack.c.bf16 %v2343, %v2342
  %v2589 = vpack.c.bf16 %v2264, %v2262
  %v2590 = vpack.c.bf16 %v2296, %v2295
  %v2591 = vpack.c.bf16 %v2312, %v2311
  %v2592 = vpack.c.bf16 %v2329, %v2328
  %v2593 = vpack.c.bf16 %v2345, %v2344
  %v2594 = vpack.c.bf16 %v2268, %v2266
  %v2595 = vpack.c.bf16 %v2298, %v2297
  %v2596 = vpack.c.bf16 %v2314, %v2313
  %v2597 = vpack.c.bf16 %v2331, %v2330
  %v2598 = vpack.c.bf16 %v2347, %v2346
  %v2599 = vpack.c.bf16 %v2270, %v2270
  %v2600 = vpack.c.bf16 %v2300, %v2299
  %v2601 = vpack.c.bf16 %v2316, %v2315
  %v2602 = vpack.c.bf16 %v2332, %v2332
  %v2603 = vpack.c.bf16 %v2348, %v2348
  %v2604 = vpack.c.bf16 %v2509, %v2508
  %v2605 = vpack.c.bf16 %v2525, %v2524
  %v2606 = vpack.c.bf16 %v2540, %v2539
  %v2607 = vpack.c.bf16 %v2554, %v2553
  %v2608 = vpack.c.bf16 %v2475, %v2473
  %v2609 = vpack.c.bf16 %v2511, %v2510
  %v2610 = vpack.c.bf16 %v2527, %v2526
  %v2611 = vpack.c.bf16 %v2542, %v2541
  %v2612 = vpack.c.bf16 %v2556, %v2555
  %v2613 = vpack.c.bf16 %v2479, %v2477
  %v2614 = vpack.c.bf16 %v2513, %v2512
  %v2615 = vpack.c.bf16 %v2529, %v2528
  %v2616 = vpack.c.bf16 %v2544, %v2543
  %v2617 = vpack.c.bf16 %v2558, %v2557
  %v2618 = vpack.c.bf16 %v2483, %v2481
  %v2619 = vpack.c.bf16 %v2515, %v2514
  %v2620 = vpack.c.bf16 %v2531, %v2530
  %v2621 = vpack.c.bf16 %v2546, %v2545
  %v2622 = vpack.c.bf16 %v2560, %v2559
  %v2623 = vpack.c.bf16 %v2487, %v2485
  %v2624 = vpack.c.bf16 %v2517, %v2516
  %v2625 = vpack.c.bf16 %v2533, %v2532
  %v2626 = vpack.c.bf16 %v2548, %v2547
  %v2627 = vpack.c.bf16 %v2562, %v2561
  %v2628 = vpack.c.bf16 %v2491, %v2489
  %v2629 = vpack.c.bf16 %v2519, %v2518
  %v2630 = vpack.c.bf16 %v2535, %v2534
  %v2631 = vpack.c.bf16 %v2550, %v2549
  %v2632 = vpack.c.bf16 %v2564, %v2563
  %v2633 = vpack.c.bf16 %v2495, %v2493
  %v2634 = vpack.c.bf16 %v2521, %v2520
  %v2635 = vpack.c.bf16 %v2537, %v2536
  %v2636 = vpack.c.bf16 %v2552, %v2551
  %v2637 = vpack.c.bf16 %v2523, %v2522
  %v2638 = vpack.c.bf16 %v2538, %v2538
  %v2639 = vld [vmem:[%s3] sm:$0xff]
  %v2640 = vld [vmem:[%s3 + $0x8] sm:$0xff]
  %v2641 = vld [vmem:[%s3 + $0x10] sm:$0xff]
  %v2642 = vld [vmem:[%s3 + $0x18] sm:$0xff]
  %v2643 = vld [vmem:[%s3 + $0x20] sm:$0xff]
  %v2644 = vld [vmem:[%s3 + $0x28] sm:$0xff]
  %v2645 = vld [vmem:[%s3 + $0x30] sm:$0xff]
  %v2646 = vld [vmem:[%s3 + $0x38] sm:$0xff]
  %v2647 = vld [vmem:[%s3 + $0x40] sm:$0xff]
  %v2648 = vld [vmem:[%s3 + $0x48] sm:$0xff]
  %v2649 = vld [vmem:[%s3 + $0x50] sm:$0xff]
  %v2650 = vld [vmem:[%s3 + $0x58] sm:$0xff]
  %v2651 = vld [vmem:[%s3 + $0x60] sm:$0xff]
  %v2652 = vld [vmem:[%s3 + $0x68] sm:$0xff]
  %v2653 = vld [vmem:[%s3 + $0x70] sm:$0xff]
  %v2654 = vld [vmem:[%s3 + $0x78] sm:$0xff]
  %v2655 = vld [vmem:[%s3 + $0x80] sm:$0xff]
  %v2656 = vld [vmem:[%s3 + $0x88] sm:$0xff]
  %v2657 = vld [vmem:[%s3 + $0x90] sm:$0xff]
  %v2658 = vld [vmem:[%s3 + $0x98] sm:$0xff]
  %v2659 = vld [vmem:[%s3 + $0xa0] sm:$0xff]
  %v2660 = vld [vmem:[%s3 + $0xa8] sm:$0xff]
  %v2661 = vld [vmem:[%s3 + $0xb0] sm:$0xff]
  %v2662 = vld [vmem:[%s3 + $0xb8] sm:$0xff]
  %v2663 = vld [vmem:[%s3 + $0xc0] sm:$0xff]
  %v2664 = vld [vmem:[%s3 + $0xc8] sm:$0xff]
  %v2665 = vld [vmem:[%s3 + $0xd0] sm:$0xff]
  %v2666 = vld [vmem:[%s3 + $0xd8] sm:$0xff]
  %v2667 = vld [vmem:[%s3 + $0xe0] sm:$0xff]
  %v2668 = vld [vmem:[%s3 + $0xe8] sm:$0xff]
  %v2669 = vld [vmem:[%s3 + $0xf0] sm:$0xff]
  %v2670 = vld [vmem:[%s3 + $0xf8] sm:$0xff]
  %v2671 = vld [vmem:[%s3 + $0x100] sm:$0xff]
  %v2672 = vld [vmem:[%s3 + $0x108] sm:$0xff]
  %v2673 = vld [vmem:[%s3 + $0x110] sm:$0xff]
  %v2674 = vld [vmem:[%s3 + $0x118] sm:$0xff]
  %v2675 = vld [vmem:[%s3 + $0x120] sm:$0xff]
  %v2676 = vld [vmem:[%s3 + $0x128] sm:$0xff]
  %v2677 = vld [vmem:[%s3 + $0x130] sm:$0xff]
  %v2678 = vld [vmem:[%s3 + $0x138] sm:$0xff]
  %v2679 = vld [vmem:[%s3 + $0x140] sm:$0xff]
  %v2680 = vld [vmem:[%s3 + $0x148] sm:$0xff]
  %v2681 = vld [vmem:[%s3 + $0x150] sm:$0xff]
  %v2682 = vld [vmem:[%s3 + $0x158] sm:$0xff]
  %v2683 = vld [vmem:[%s3 + $0x160] sm:$0xff]
  %v2684 = vld [vmem:[%s3 + $0x168] sm:$0xff]
  %v2685 = vld [vmem:[%s3 + $0x170] sm:$0xff]
  %v2686 = vld [vmem:[%s3 + $0x178] sm:$0xff]
  %v2687 = vld [vmem:[%s3 + $0x180] sm:$0xff]
  %v2688 = vld [vmem:[%s3 + $0x188] sm:$0xff]
  %v2689 = vld [vmem:[%s3 + $0x190] sm:$0xff]
  %v2690 = vld [vmem:[%s3 + $0x198] sm:$0xff]
  %v2691 = vld [vmem:[%s3 + $0x1a0] sm:$0xff]
  %v2692 = vld [vmem:[%s3 + $0x1a8] sm:$0xff]
  %v2693 = vld [vmem:[%s3 + $0x1b0] sm:$0xff]
  %v2694 = vld [vmem:[%s3 + $0x1b8] sm:$0xff]
  %v2695 = vld [vmem:[%s3 + $0x1c0] sm:$0xff]
  %v2696 = vld [vmem:[%s3 + $0x1c8] sm:$0xff]
  %v2697 = vld [vmem:[%s3 + $0x1d0] sm:$0xff]
  %v2698 = vld [vmem:[%s3 + $0x1d8] sm:$0xff]
  %v2699 = vld [vmem:[%s3 + $0x1e0] sm:$0xff]
  %v2700 = vld [vmem:[%s3 + $0x1e8] sm:$0xff]
  %v2701 = vld [vmem:[%s3 + $0x1f0] sm:$0xff]
  %v2702 = vld [vmem:[%s3 + $0x1f8] sm:$0xff]
  %v2703 = vld [vmem:[%s3 + $0x200] sm:$0xff]
  %v2704 = vld [vmem:[%s3 + $0x208] sm:$0xff]
  %v2705 = vld [vmem:[%s3 + $0x210] sm:$0xff]
  %v2706 = vld [vmem:[%s3 + $0x218] sm:$0xff]
  %v2707 = vld [vmem:[%s3 + $0x220] sm:$0xff]
  %v2708 = vld [vmem:[%s3 + $0x228] sm:$0xff]
  %v2709 = vld [vmem:[%s3 + $0x230] sm:$0xff]
  %v2710 = vld [vmem:[%s3 + $0x238] sm:$0xff]
  %v2711 = vld [vmem:[%s3 + $0x240] sm:$0xff]
  %v2712 = vld [vmem:[%s3 + $0x248] sm:$0xff]
  %v2713 = vld [vmem:[%s3 + $0x250] sm:$0xff]
  %v2789 = vunpack.c.l.b16 %v2639
  %v2790 = vunpack.c.h.b16 %v2639
  %v2791 = vunpack.c.l.b16 %v2640
  %v2792 = vunpack.c.h.b16 %v2640
  %v2793 = vunpack.c.l.b16 %v2641
  %v2794 = vunpack.c.h.b16 %v2641
  %v2795 = vunpack.c.l.b16 %v2642
  %v2796 = vunpack.c.h.b16 %v2642
  %v2797 = vunpack.c.l.b16 %v2643
  %v2798 = vunpack.c.h.b16 %v2643
  %v2799 = vunpack.c.l.b16 %v2644
  %v2800 = vunpack.c.h.b16 %v2644
  %v2801 = vunpack.c.l.b16 %v2645
  %v2802 = vunpack.c.h.b16 %v2645
  %v2803 = vunpack.c.l.b16 %v2646
  %v2804 = vunpack.c.h.b16 %v2646
  %v2805 = vunpack.c.l.b16 %v2647
  %v2806 = vunpack.c.h.b16 %v2647
  %v2807 = vunpack.c.l.b16 %v2648
  %v2808 = vunpack.c.h.b16 %v2648
  %v2809 = vunpack.c.l.b16 %v2649
  %v2810 = vunpack.c.h.b16 %v2649
  %v2811 = vunpack.c.l.b16 %v2650
  %v2812 = vunpack.c.h.b16 %v2650
  %v2813 = vunpack.c.l.b16 %v2651
  %v2814 = vunpack.c.h.b16 %v2651
  %v2815 = vunpack.c.l.b16 %v2652
  %v2816 = vunpack.c.h.b16 %v2652
  %v2817 = vunpack.c.l.b16 %v2653
  %v2818 = vunpack.c.h.b16 %v2653
  %v2819 = vunpack.c.l.b16 %v2654
  %v2820 = vunpack.c.h.b16 %v2654
  %v2821 = vunpack.c.l.b16 %v2655
  %v2822 = vunpack.c.h.b16 %v2655
  %v2823 = vunpack.c.l.b16 %v2656
  %v2824 = vunpack.c.h.b16 %v2656
  %v2825 = vunpack.c.l.b16 %v2657
  %v2826 = vunpack.c.h.b16 %v2657
  %v2827 = vunpack.c.l.b16 %v2658
  %v2828 = vunpack.c.h.b16 %v2658
  %v2829 = vunpack.c.l.b16 %v2659
  %v2830 = vunpack.c.h.b16 %v2659
  %v2831 = vunpack.c.l.b16 %v2660
  %v2832 = vunpack.c.h.b16 %v2660
  %v2833 = vunpack.c.l.b16 %v2661
  %v2834 = vunpack.c.h.b16 %v2661
  %v2835 = vunpack.c.l.b16 %v2662
  %v2836 = vunpack.c.h.b16 %v2662
  %v2837 = vunpack.c.l.b16 %v2663
  %v2838 = vunpack.c.h.b16 %v2663
  %v2839 = vunpack.c.l.b16 %v2664
  %v2840 = vunpack.c.h.b16 %v2664
  %v2841 = vunpack.c.l.b16 %v2665
  %v2842 = vunpack.c.h.b16 %v2665
  %v2843 = vunpack.c.l.b16 %v2666
  %v2844 = vunpack.c.h.b16 %v2666
  %v2845 = vunpack.c.l.b16 %v2667
  %v2846 = vunpack.c.h.b16 %v2667
  %v2847 = vunpack.c.l.b16 %v2668
  %v2848 = vunpack.c.h.b16 %v2668
  %v2849 = vunpack.c.l.b16 %v2669
  %v2850 = vunpack.c.h.b16 %v2669
  %v2851 = vunpack.c.l.b16 %v2670
  %v2852 = vunpack.c.h.b16 %v2670
  %v2853 = vunpack.c.l.b16 %v2671
  %v2854 = vunpack.c.h.b16 %v2671
  %v2855 = vunpack.c.l.b16 %v2672
  %v2856 = vunpack.c.h.b16 %v2672
  %v2857 = vunpack.c.l.b16 %v2673
  %v2858 = vunpack.c.h.b16 %v2673
  %v2859 = vunpack.c.l.b16 %v2674
  %v2860 = vunpack.c.h.b16 %v2674
  %v2861 = vunpack.c.l.b16 %v2675
  %v2862 = vunpack.c.h.b16 %v2675
  %v2863 = vunpack.c.l.b16 %v2676
  %v2864 = vunpack.c.h.b16 %v2676
  %v2865 = vunpack.c.l.b16 %v2677
  %v2866 = vunpack.c.h.b16 %v2677
  %v2867 = vunpack.c.l.b16 %v2678
  %v2868 = vunpack.c.h.b16 %v2678
  %v2869 = vunpack.c.l.b16 %v2679
  %v2870 = vunpack.c.h.b16 %v2679
  %v2871 = vunpack.c.l.b16 %v2680
  %v2872 = vunpack.c.h.b16 %v2680
  %v2873 = vunpack.c.l.b16 %v2681
  %v2874 = vunpack.c.h.b16 %v2681
  %v2875 = vunpack.c.l.b16 %v2682
  %v2876 = vunpack.c.h.b16 %v2682
  %v2877 = vunpack.c.l.b16 %v2683
  %v2878 = vunpack.c.h.b16 %v2683
  %v2879 = vunpack.c.l.b16 %v2684
  %v2880 = vunpack.c.h.b16 %v2684
  %v2881 = vunpack.c.l.b16 %v2685
  %v2882 = vunpack.c.h.b16 %v2685
  %v2883 = vunpack.c.l.b16 %v2686
  %v2884 = vunpack.c.h.b16 %v2686
  %v2885 = vunpack.c.l.b16 %v2687
  %v2886 = vunpack.c.h.b16 %v2687
  %v2887 = vunpack.c.l.b16 %v2688
  %v2888 = vunpack.c.h.b16 %v2688
  %v2889 = vunpack.c.l.b16 %v2689
  %v2890 = vunpack.c.h.b16 %v2689
  %v2891 = vunpack.c.l.b16 %v2690
  %v2892 = vunpack.c.h.b16 %v2690
  %v2893 = vunpack.c.l.b16 %v2691
  %v2894 = vunpack.c.h.b16 %v2691
  %v2895 = vunpack.c.l.b16 %v2692
  %v2896 = vunpack.c.h.b16 %v2692
  %v2897 = vunpack.c.l.b16 %v2693
  %v2898 = vunpack.c.h.b16 %v2693
  %v2899 = vunpack.c.l.b16 %v2694
  %v2900 = vunpack.c.h.b16 %v2694
  %v2901 = vunpack.c.l.b16 %v2695
  %v2902 = vunpack.c.h.b16 %v2695
  %v2903 = vunpack.c.l.b16 %v2696
  %v2904 = vunpack.c.h.b16 %v2696
  %v2905 = vunpack.c.l.b16 %v2697
  %v2906 = vunpack.c.h.b16 %v2697
  %v2907 = vunpack.c.l.b16 %v2698
  %v2908 = vunpack.c.h.b16 %v2698
  %v2909 = vunpack.c.l.b16 %v2699
  %v2910 = vunpack.c.h.b16 %v2699
  %v2911 = vunpack.c.l.b16 %v2700
  %v2912 = vunpack.c.h.b16 %v2700
  %v2913 = vunpack.c.l.b16 %v2701
  %v2914 = vunpack.c.h.b16 %v2701
  %v2915 = vunpack.c.l.b16 %v2702
  %v2916 = vunpack.c.h.b16 %v2702
  %v2917 = vunpack.c.l.b16 %v2703
  %v2918 = vunpack.c.h.b16 %v2703
  %v2919 = vunpack.c.l.b16 %v2704
  %v2920 = vunpack.c.h.b16 %v2704
  %v2921 = vunpack.c.l.b16 %v2705
  %v2922 = vunpack.c.h.b16 %v2705
  %v2923 = vunpack.c.l.b16 %v2706
  %v2924 = vunpack.c.h.b16 %v2706
  %v2925 = vunpack.c.l.b16 %v2707
  %v2926 = vunpack.c.h.b16 %v2707
  %v2927 = vunpack.c.l.b16 %v2708
  %v2928 = vunpack.c.h.b16 %v2708
  %v2929 = vunpack.c.l.b16 %v2709
  %v2930 = vunpack.c.h.b16 %v2709
  %v2931 = vunpack.c.l.b16 %v2710
  %v2932 = vunpack.c.h.b16 %v2710
  %v2933 = vunpack.c.l.b16 %v2711
  %v2934 = vunpack.c.h.b16 %v2711
  %v2935 = vunpack.c.l.b16 %v2712
  %v2936 = vunpack.c.h.b16 %v2712
  %v2937 = vunpack.c.l.b16 %v2713
  %v2938 = vunpack.c.h.b16 %v2713
  %v2939 = vpack.c.b16 %v2791, %v2789
  %v2940 = vpack.c.b16 %v2792, %v2790
  %v2941 = vpack.c.b16 %v2795, %v2793
  %v2942 = vpack.c.b16 %v2796, %v2794
  %v2943 = vpack.c.b16 %v2799, %v2797
  %v2944 = vpack.c.b16 %v2800, %v2798
  %v2945 = vpack.c.b16 %v2803, %v2801
  %v2946 = vpack.c.b16 %v2804, %v2802
  %v2947 = vpack.c.b16 %v2807, %v2805
  %v2948 = vpack.c.b16 %v2808, %v2806
  %v2949 = vpack.c.b16 %v2811, %v2809
  %v2950 = vpack.c.b16 %v2812, %v2810
  %v2951 = vpack.c.b16 %v2815, %v2813
  %v2952 = vpack.c.b16 %v2816, %v2814
  %v2953 = vpack.c.b16 %v2819, %v2817
  %v2954 = vpack.c.b16 %v2820, %v2818
  %v2955 = vpack.c.b16 %v2823, %v2821
  %v2956 = vpack.c.b16 %v2824, %v2822
  %v2957 = vpack.c.b16 %v2827, %v2825
  %v2958 = vpack.c.b16 %v2828, %v2826
  %v2959 = vpack.c.b16 %v2831, %v2829
  %v2960 = vpack.c.b16 %v2832, %v2830
  %v2961 = vpack.c.b16 %v2835, %v2833
  %v2962 = vpack.c.b16 %v2836, %v2834
  %v2963 = vpack.c.b16 %v2839, %v2837
  %v2964 = vpack.c.b16 %v2840, %v2838
  %v2965 = vpack.c.b16 %v2843, %v2841
  %v2966 = vpack.c.b16 %v2844, %v2842
  %v2967 = vpack.c.b16 %v2847, %v2845
  %v2968 = vpack.c.b16 %v2848, %v2846
  %v2969 = vpack.c.b16 %v2851, %v2849
  %v2970 = vpack.c.b16 %v2852, %v2850
  %v2971 = vpack.c.b16 %v2855, %v2853
  %v2972 = vpack.c.b16 %v2856, %v2854
  %v2973 = vpack.c.b16 %v2859, %v2857
  %v2974 = vpack.c.b16 %v2860, %v2858
  %v2975 = vpack.c.b16 %v2863, %v2861
  %v2976 = vpack.c.b16 %v2864, %v2862
  %v2977 = vpack.c.b16 %v2867, %v2865
  %v2978 = vpack.c.b16 %v2868, %v2866
  %v2979 = vpack.c.b16 %v2871, %v2869
  %v2980 = vpack.c.b16 %v2872, %v2870
  %v2981 = vpack.c.b16 %v2875, %v2873
  %v2982 = vpack.c.b16 %v2876, %v2874
  %v2983 = vpack.c.b16 %v2879, %v2877
  %v2984 = vpack.c.b16 %v2880, %v2878
  %v2985 = vpack.c.b16 %v2883, %v2881
  %v2986 = vpack.c.b16 %v2884, %v2882
  %v2987 = vpack.c.b16 %v2887, %v2885
  %v2988 = vpack.c.b16 %v2888, %v2886
  %v2989 = vpack.c.b16 %v2891, %v2889
  %v2990 = vpack.c.b16 %v2892, %v2890
  %v2991 = vpack.c.b16 %v2895, %v2893
  %v2992 = vpack.c.b16 %v2896, %v2894
  %v2993 = vpack.c.b16 %v2899, %v2897
  %v2994 = vpack.c.b16 %v2900, %v2898
  %v2995 = vpack.c.b16 %v2903, %v2901
  %v2996 = vpack.c.b16 %v2904, %v2902
  %v2997 = vpack.c.b16 %v2907, %v2905
  %v2998 = vpack.c.b16 %v2908, %v2906
  %v2999 = vpack.c.b16 %v2911, %v2909
  %v3000 = vpack.c.b16 %v2912, %v2910
  %v3001 = vpack.c.b16 %v2915, %v2913
  %v3002 = vpack.c.b16 %v2916, %v2914
  %v3003 = vpack.c.b16 %v2919, %v2917
  %v3004 = vpack.c.b16 %v2920, %v2918
  %v3005 = vpack.c.b16 %v2923, %v2921
  %v3006 = vpack.c.b16 %v2924, %v2922
  %v3007 = vpack.c.b16 %v2927, %v2925
  %v3008 = vpack.c.b16 %v2928, %v2926
  %v3009 = vpack.c.b16 %v2931, %v2929
  %v3010 = vpack.c.b16 %v2932, %v2930
  %v3011 = vpack.c.b16 %v2935, %v2933
  %v3012 = vpack.c.b16 %v2936, %v2934
  %v3013 = vpack.c.b16 %v2937, %v2937
  %v3014 = vpack.c.b16 %v2938, %v2938
  %vm3089 = vcmask 719872
  %v3091 = vsel %vm3089, %v2569, 0
  %v3094 = vsel %vm3089, %v2574, 0
  %v3097 = vsel %vm3089, %v2579, 0
  %v3100 = vsel %vm3089, %v2584, 0
  %v3103 = vsel %vm3089, %v2589, 0
  %v3106 = vsel %vm3089, %v2594, 0
  %v3109 = vsel %vm3089, %v2599, 0
  %v3112 = vsel %vm3089, %v2608, 0
  %v3115 = vsel %vm3089, %v2613, 0
  %v3118 = vsel %vm3089, %v2618, 0
  %v3121 = vsel %vm3089, %v2623, 0
  %v3124 = vsel %vm3089, %v2628, 0
  %v3127 = vsel %vm3089, %v2633, 0
  %vm3129 = vcmask 1043456
  %v3131 = vsel %vm3129, %v3013, 0
  %v3134 = vsel %vm3129, %v3014, 0
  %3136 = vmatprep.subr.bf16.mxu0 %v2940
  %3137 = vmatpush1.bf16.msra.mxu0 %v2939
  %3138 = vmatprep.subr.bf16.mxu0 %v2942
  %3139 = vmatpush1.bf16.msra.mxu0 %v2941
  %3140 = vmatprep.subr.bf16.mxu0 %v2944
  %3141 = vmatpush1.bf16.msra.mxu0 %v2943
  %3142 = vmatprep.subr.bf16.mxu0 %v2946
  %3143 = vmatpush1.bf16.msra.mxu0 %v2945
  %3144 = vmatprep.subr.bf16.mxu0 %v2948
  %3145 = vmatpush1.bf16.msra.mxu0 %v2947
  %3146 = vmatprep.subr.bf16.mxu0 %v2950
  %3147 = vmatpush1.bf16.msra.mxu0 %v2949
  %3148 = vmatprep.subr.bf16.mxu0 %v2952
  %3149 = vmatpush1.bf16.msra.mxu0 %v2951
  %3150 = vmatprep.subr.bf16.mxu0 %v2954
  %3151 = vmatpush1.bf16.msra.mxu0 %v2953
  %3152 = vmatprep.subr.bf16.mxu0 %v2956
  %3153 = vmatpush1.bf16.msra.mxu0 %v2955
  %3154 = vmatprep.subr.bf16.mxu0 %v2958
  %3155 = vmatpush1.bf16.msra.mxu0 %v2957
  %3156 = vmatprep.subr.bf16.mxu0 %v2960
  %3157 = vmatpush1.bf16.msra.mxu0 %v2959
  %3158 = vmatprep.subr.bf16.mxu0 %v2962
  %3159 = vmatpush1.bf16.msra.mxu0 %v2961
  %3160 = vmatprep.subr.bf16.mxu0 %v2964
  %3161 = vmatpush1.bf16.msra.mxu0 %v2963
  %3162 = vmatprep.subr.bf16.mxu0 %v2966
  %3163 = vmatpush1.bf16.msra.mxu0 %v2965
  %3164 = vmatprep.subr.bf16.mxu0 %v2968
  %3165 = vmatpush1.bf16.msra.mxu0 %v2967
  %3166 = vmatprep.subr.bf16.mxu0 %v2970
  %3167 = vmatpush1.bf16.msra.mxu0 %v2969
  %3168 = vmatprep.mubr.bf16.mxu0 %v2566
  %3169 = vmatmul.mubr.bf16.gmra.mrb[0].mxu0 %v2565
  %v3170 = vpop.f32.mrb[0].mxu0
  %v3171 = vadd.f32 0.0, %v3170
  %v3172 = vpop.f32.mrb[0].mxu0
  %v3173 = vadd.f32 0.0, %v3172
  %v3174 = vpop.f32.mrb[0].mxu0
  %v3175 = vadd.f32 0.0, %v3174
  %v3176 = vpop.f32.mrb[0].mxu0
  %v3177 = vadd.f32 0.0, %v3176
  %3178 = vmatprep.mubr.bf16.mxu0 %v2571
  %3179 = vmatmul.mubr.bf16.gmra.mrb[0].mxu0 %v2570
  %v3180 = vpop.f32.mrb[0].mxu0
  %v3181 = vadd.f32 0.0, %v3180
  %v3182 = vpop.f32.mrb[0].mxu0
  %v3183 = vadd.f32 0.0, %v3182
  %v3184 = vpop.f32.mrb[0].mxu0
  %v3185 = vadd.f32 0.0, %v3184
  %v3186 = vpop.f32.mrb[0].mxu0
  %v3187 = vadd.f32 0.0, %v3186
  %3188 = vmatprep.mubr.bf16.mxu0 %v2576
  %3189 = vmatmul.mubr.bf16.gmra.mrb[0].mxu0 %v2575
  %v3190 = vpop.f32.mrb[0].mxu0
  %v3191 = vadd.f32 0.0, %v3190
  %v3192 = vpop.f32.mrb[0].mxu0
  %v3193 = vadd.f32 0.0, %v3192
  %v3194 = vpop.f32.mrb[0].mxu0
  %v3195 = vadd.f32 0.0, %v3194
  %v3196 = vpop.f32.mrb[0].mxu0
  %v3197 = vadd.f32 0.0, %v3196
  %3198 = vmatprep.mubr.bf16.mxu0 %v2581
  %3199 = vmatmul.mubr.bf16.gmra.mrb[0].mxu0 %v2580
  %v3200 = vpop.f32.mrb[0].mxu0
  %v3201 = vadd.f32 0.0, %v3200
  %v3202 = vpop.f32.mrb[0].mxu0
  %v3203 = vadd.f32 0.0, %v3202
  %v3204 = vpop.f32.mrb[0].mxu0
  %v3205 = vadd.f32 0.0, %v3204
  %v3206 = vpop.f32.mrb[0].mxu0
  %v3207 = vadd.f32 0.0, %v3206
  %3208 = vmatprep.mubr.bf16.mxu0 %v2586
  %3209 = vmatmul.mubr.bf16.gmra.mrb[0].mxu0 %v2585
  %v3210 = vpop.f32.mrb[0].mxu0
  %v3211 = vpop.f32.mrb[0].mxu0
  %v3212 = vpop.f32.mrb[0].mxu0
  %v3213 = vpop.f32.mrb[0].mxu0
  %3214 = vmatprep.mubr.bf16.mxu0 %v2591
  %3215 = vmatmul.mubr.bf16.gmra.mrb[0].mxu0 %v2590
  %v3216 = vpop.f32.mrb[0].mxu0
  %v3217 = vpop.f32.mrb[0].mxu0
  %v3218 = vpop.f32.mrb[0].mxu0
  %v3219 = vpop.f32.mrb[0].mxu0
  %3220 = vmatprep.mubr.bf16.mxu0 %v2596
  %3221 = vmatmul.mubr.bf16.gmra.mrb[0].mxu0 %v2595
  %v3222 = vpop.f32.mrb[0].mxu0
  %v3223 = vpop.f32.mrb[0].mxu0
  %v3224 = vpop.f32.mrb[0].mxu0
  %v3225 = vpop.f32.mrb[0].mxu0
  %3226 = vmatprep.mubr.bf16.mxu0 %v2601
  %3227 = vmatmul.mubr.bf16.gmra.mrb[0].mxu0 %v2600
  %v3228 = vpop.f32.mrb[0].mxu0
  %v3229 = vpop.f32.mrb[0].mxu0
  %v3230 = vpop.f32.mrb[0].mxu0
  %v3231 = vpop.f32.mrb[0].mxu0
  %3232 = vmatprep.mubr.bf16.mxu0 %v2605
  %3233 = vmatmul.mubr.bf16.gmra.mrb[0].mxu0 %v2604
  %v3234 = vpop.f32.mrb[0].mxu0
  %v3235 = vadd.f32 0.0, %v3234
  %v3236 = vpop.f32.mrb[0].mxu0
  %v3237 = vadd.f32 0.0, %v3236
  %v3238 = vpop.f32.mrb[0].mxu0
  %v3239 = vadd.f32 0.0, %v3238
  %v3240 = vpop.f32.mrb[0].mxu0
  %v3241 = vadd.f32 0.0, %v3240
  %3242 = vmatprep.mubr.bf16.mxu0 %v2610
  %3243 = vmatmul.mubr.bf16.gmra.mrb[0].mxu0 %v2609
  %v3244 = vpop.f32.mrb[0].mxu0
  %v3245 = vadd.f32 0.0, %v3244
  %v3246 = vpop.f32.mrb[0].mxu0
  %v3247 = vadd.f32 0.0, %v3246
  %v3248 = vpop.f32.mrb[0].mxu0
  %v3249 = vadd.f32 0.0, %v3248
  %v3250 = vpop.f32.mrb[0].mxu0
  %v3251 = vadd.f32 0.0, %v3250
  %3252 = vmatprep.mubr.bf16.mxu0 %v2615
  %3253 = vmatmul.mubr.bf16.gmra.mrb[0].mxu0 %v2614
  %v3254 = vpop.f32.mrb[0].mxu0
  %v3255 = vadd.f32 0.0, %v3254
  %v3256 = vpop.f32.mrb[0].mxu0
  %v3257 = vadd.f32 0.0, %v3256
  %v3258 = vpop.f32.mrb[0].mxu0
  %v3259 = vadd.f32 0.0, %v3258
  %v3260 = vpop.f32.mrb[0].mxu0
  %v3261 = vadd.f32 0.0, %v3260
  %3262 = vmatprep.mubr.bf16.mxu0 %v2620
  %3263 = vmatmul.mubr.bf16.gmra.mrb[0].mxu0 %v2619
  %v3264 = vpop.f32.mrb[0].mxu0
  %v3265 = vadd.f32 0.0, %v3264
  %v3266 = vpop.f32.mrb[0].mxu0
  %v3267 = vadd.f32 0.0, %v3266
  %v3268 = vpop.f32.mrb[0].mxu0
  %v3269 = vadd.f32 0.0, %v3268
  %v3270 = vpop.f32.mrb[0].mxu0
  %v3271 = vadd.f32 0.0, %v3270
  %3272 = vmatprep.mubr.bf16.mxu0 %v2625
  %3273 = vmatmul.mubr.bf16.gmra.mrb[0].mxu0 %v2624
  %v3274 = vpop.f32.mrb[0].mxu0
  %v3275 = vpop.f32.mrb[0].mxu0
  %v3276 = vpop.f32.mrb[0].mxu0
  %v3277 = vpop.f32.mrb[0].mxu0
  %3278 = vmatprep.mubr.bf16.mxu0 %v2630
  %3279 = vmatmul.mubr.bf16.gmra.mrb[0].mxu0 %v2629
  %v3280 = vpop.f32.mrb[0].mxu0
  %v3281 = vpop.f32.mrb[0].mxu0
  %v3282 = vpop.f32.mrb[0].mxu0
  %v3283 = vpop.f32.mrb[0].mxu0
  %3284 = vmatprep.mubr.bf16.mxu0 %v2635
  %3285 = vmatmul.mubr.bf16.gmra.mrb[0].mxu0 %v2634
  %v3286 = vpop.f32.mrb[0].mxu0
  %v3287 = vpop.f32.mrb[0].mxu0
  %v3288 = vpop.f32.mrb[0].mxu0
  %v3289 = vpop.f32.mrb[0].mxu0
  %3290 = vmatprep.mubr.bf16.mxu0 %v2638
  %3291 = vmatmul.mubr.bf16.gmra.mrb[0].mxu0 %v2637
  %v3292 = vpop.f32.mrb[0].mxu0
  %v3293 = vpop.f32.mrb[0].mxu0
  %v3294 = vpop.f32.mrb[0].mxu0
  %v3295 = vpop.f32.mrb[0].mxu0
  %3296 = vdwg.mxu0
  %3297 = vmatprep.subr.bf16.mxu0 %v2972
  %3298 = vmatpush1.bf16.msra.mxu0 %v2971
  %3299 = vmatprep.subr.bf16.mxu0 %v2974
  %3300 = vmatpush1.bf16.msra.mxu0 %v2973
  %3301 = vmatprep.subr.bf16.mxu0 %v2976
  %3302 = vmatpush1.bf16.msra.mxu0 %v2975
  %3303 = vmatprep.subr.bf16.mxu0 %v2978
  %3304 = vmatpush1.bf16.msra.mxu0 %v2977
  %3305 = vmatprep.subr.bf16.mxu0 %v2980
  %3306 = vmatpush1.bf16.msra.mxu0 %v2979
  %3307 = vmatprep.subr.bf16.mxu0 %v2982
  %3308 = vmatpush1.bf16.msra.mxu0 %v2981
  %3309 = vmatprep.subr.bf16.mxu0 %v2984
  %3310 = vmatpush1.bf16.msra.mxu0 %v2983
  %3311 = vmatprep.subr.bf16.mxu0 %v2986
  %3312 = vmatpush1.bf16.msra.mxu0 %v2985
  %3313 = vmatprep.subr.bf16.mxu0 %v2988
  %3314 = vmatpush1.bf16.msra.mxu0 %v2987
  %3315 = vmatprep.subr.bf16.mxu0 %v2990
  %3316 = vmatpush1.bf16.msra.mxu0 %v2989
  %3317 = vmatprep.subr.bf16.mxu0 %v2992
  %3318 = vmatpush1.bf16.msra.mxu0 %v2991
  %3319 = vmatprep.subr.bf16.mxu0 %v2994
  %3320 = vmatpush1.bf16.msra.mxu0 %v2993
  %3321 = vmatprep.subr.bf16.mxu0 %v2996
  %3322 = vmatpush1.bf16.msra.mxu0 %v2995
  %3323 = vmatprep.subr.bf16.mxu0 %v2998
  %3324 = vmatpush1.bf16.msra.mxu0 %v2997
  %3325 = vmatprep.subr.bf16.mxu0 %v3000
  %3326 = vmatpush1.bf16.msra.mxu0 %v2999
  %3327 = vmatprep.subr.bf16.mxu0 %v3002
  %3328 = vmatpush1.bf16.msra.mxu0 %v3001
  %3329 = vmatprep.mubr.bf16.mxu0 %v2568
  %3330 = vmatmul.mubr.bf16.gmra.mrb[0].mxu0 %v2567
  %v3331 = vpop.f32.mrb[0].mxu0
  %v3332 = vadd.f32 %v3171, %v3331
  %v3333 = vpop.f32.mrb[0].mxu0
  %v3334 = vadd.f32 %v3173, %v3333
  %v3335 = vpop.f32.mrb[0].mxu0
  %v3336 = vadd.f32 %v3175, %v3335
  %v3337 = vpop.f32.mrb[0].mxu0
  %v3338 = vadd.f32 %v3177, %v3337
  %3339 = vmatprep.mubr.bf16.mxu0 %v2573
  %3340 = vmatmul.mubr.bf16.gmra.mrb[0].mxu0 %v2572
  %v3341 = vpop.f32.mrb[0].mxu0
  %v3342 = vadd.f32 %v3181, %v3341
  %v3343 = vpop.f32.mrb[0].mxu0
  %v3344 = vadd.f32 %v3183, %v3343
  %v3345 = vpop.f32.mrb[0].mxu0
  %v3346 = vadd.f32 %v3185, %v3345
  %v3347 = vpop.f32.mrb[0].mxu0
  %v3348 = vadd.f32 %v3187, %v3347
  %3349 = vmatprep.mubr.bf16.mxu0 %v2578
  %3350 = vmatmul.mubr.bf16.gmra.mrb[0].mxu0 %v2577
  %v3351 = vpop.f32.mrb[0].mxu0
  %v3352 = vadd.f32 %v3191, %v3351
  %v3353 = vpop.f32.mrb[0].mxu0
  %v3354 = vadd.f32 %v3193, %v3353
  %v3355 = vpop.f32.mrb[0].mxu0
  %v3356 = vadd.f32 %v3195, %v3355
  %v3357 = vpop.f32.mrb[0].mxu0
  %v3358 = vadd.f32 %v3197, %v3357
  %3359 = vmatprep.mubr.bf16.mxu0 %v2583
  %3360 = vmatmul.mubr.bf16.gmra.mrb[0].mxu0 %v2582
  %v3361 = vpop.f32.mrb[0].mxu0
  %v3362 = vadd.f32 %v3201, %v3361
  %v3363 = vpop.f32.mrb[0].mxu0
  %v3364 = vadd.f32 %v3203, %v3363
  %v3365 = vpop.f32.mrb[0].mxu0
  %v3366 = vadd.f32 %v3205, %v3365
  %v3367 = vpop.f32.mrb[0].mxu0
  %v3368 = vadd.f32 %v3207, %v3367
  %3369 = vmatprep.mubr.bf16.mxu0 %v2588
  %3370 = vmatmul.mubr.bf16.gmra.mrb[0].mxu0 %v2587
  %v3371 = vpop.f32.mrb[0].mxu0
  %v3372 = vpop.f32.mrb[0].mxu0
  %v3373 = vpop.f32.mrb[0].mxu0
  %v3374 = vpop.f32.mrb[0].mxu0
  %3375 = vmatprep.mubr.bf16.mxu0 %v2593
  %3376 = vmatmul.mubr.bf16.gmra.mrb[0].mxu0 %v2592
  %v3377 = vpop.f32.mrb[0].mxu0
  %v3378 = vpop.f32.mrb[0].mxu0
  %v3379 = vpop.f32.mrb[0].mxu0
  %v3380 = vpop.f32.mrb[0].mxu0
  %3381 = vmatprep.mubr.bf16.mxu0 %v2598
  %3382 = vmatmul.mubr.bf16.gmra.mrb[0].mxu0 %v2597
  %v3383 = vpop.f32.mrb[0].mxu0
  %v3384 = vpop.f32.mrb[0].mxu0
  %v3385 = vpop.f32.mrb[0].mxu0
  %v3386 = vpop.f32.mrb[0].mxu0
  %3387 = vmatprep.mubr.bf16.mxu0 %v2603
  %3388 = vmatmul.mubr.bf16.gmra.mrb[0].mxu0 %v2602
  %v3389 = vpop.f32.mrb[0].mxu0
  %v3390 = vpop.f32.mrb[0].mxu0
  %v3391 = vpop.f32.mrb[0].mxu0
  %v3392 = vpop.f32.mrb[0].mxu0
  %3393 = vmatprep.mubr.bf16.mxu0 %v2607
  %3394 = vmatmul.mubr.bf16.gmra.mrb[0].mxu0 %v2606
  %v3395 = vpop.f32.mrb[0].mxu0
  %v3396 = vadd.f32 %v3235, %v3395
  %v3397 = vpop.f32.mrb[0].mxu0
  %v3398 = vadd.f32 %v3237, %v3397
  %v3399 = vpop.f32.mrb[0].mxu0
  %v3400 = vadd.f32 %v3239, %v3399
  %v3401 = vpop.f32.mrb[0].mxu0
  %v3402 = vadd.f32 %v3241, %v3401
  %3403 = vmatprep.mubr.bf16.mxu0 %v2612
  %3404 = vmatmul.mubr.bf16.gmra.mrb[0].mxu0 %v2611
  %v3405 = vpop.f32.mrb[0].mxu0
  %v3406 = vadd.f32 %v3245, %v3405
  %v3407 = vpop.f32.mrb[0].mxu0
  %v3408 = vadd.f32 %v3247, %v3407
  %v3409 = vpop.f32.mrb[0].mxu0
  %v3410 = vadd.f32 %v3249, %v3409
  %v3411 = vpop.f32.mrb[0].mxu0
  %v3412 = vadd.f32 %v3251, %v3411
  %3413 = vmatprep.mubr.bf16.mxu0 %v2617
  %3414 = vmatmul.mubr.bf16.gmra.mrb[0].mxu0 %v2616
  %v3415 = vpop.f32.mrb[0].mxu0
  %v3416 = vadd.f32 %v3255, %v3415
  %v3417 = vpop.f32.mrb[0].mxu0
  %v3418 = vadd.f32 %v3257, %v3417
  %v3419 = vpop.f32.mrb[0].mxu0
  %v3420 = vadd.f32 %v3259, %v3419
  %v3421 = vpop.f32.mrb[0].mxu0
  %v3422 = vadd.f32 %v3261, %v3421
  %3423 = vmatprep.mubr.bf16.mxu0 %v2622
  %3424 = vmatmul.mubr.bf16.gmra.mrb[0].mxu0 %v2621
  %v3425 = vpop.f32.mrb[0].mxu0
  %v3426 = vadd.f32 %v3265, %v3425
  %v3427 = vpop.f32.mrb[0].mxu0
  %v3428 = vadd.f32 %v3267, %v3427
  %v3429 = vpop.f32.mrb[0].mxu0
  %v3430 = vadd.f32 %v3269, %v3429
  %v3431 = vpop.f32.mrb[0].mxu0
  %v3432 = vadd.f32 %v3271, %v3431
  %3433 = vmatprep.mubr.bf16.mxu0 %v2627
  %3434 = vmatmul.mubr.bf16.gmra.mrb[0].mxu0 %v2626
  %v3435 = vpop.f32.mrb[0].mxu0
  %v3436 = vpop.f32.mrb[0].mxu0
  %v3437 = vpop.f32.mrb[0].mxu0
  %v3438 = vpop.f32.mrb[0].mxu0
  %3439 = vmatprep.mubr.bf16.mxu0 %v2632
  %3440 = vmatmul.mubr.bf16.gmra.mrb[0].mxu0 %v2631
  %v3441 = vpop.f32.mrb[0].mxu0
  %v3442 = vpop.f32.mrb[0].mxu0
  %v3443 = vpop.f32.mrb[0].mxu0
  %v3444 = vpop.f32.mrb[0].mxu0
  %3445 = vmatprep.mubr.bf16.mxu0 %v2603
  %3446 = vmatmul.mubr.bf16.gmra.mrb[0].mxu0 %v2636
  %v3447 = vpop.f32.mrb[0].mxu0
  %v3448 = vpop.f32.mrb[0].mxu0
  %v3449 = vpop.f32.mrb[0].mxu0
  %v3450 = vpop.f32.mrb[0].mxu0
  %3451 = vmatprep.mubr.bf16.mxu0 %v2603
  %3452 = vmatmul.mubr.bf16.gmra.mrb[0].mxu0 %v2602
  %v3453 = vpop.f32.mrb[0].mxu0
  %v3454 = vpop.f32.mrb[0].mxu0
  %v3455 = vpop.f32.mrb[0].mxu0
  %v3456 = vpop.f32.mrb[0].mxu0
  %3457 = vdwg.mxu0
  %3458 = vmatprep.subr.bf16.mxu0 %v3004
  %3459 = vmatpush1.bf16.msra.mxu0 %v3003
  %3460 = vmatprep.subr.bf16.mxu0 %v3006
  %3461 = vmatpush1.bf16.msra.mxu0 %v3005
  %3462 = vmatprep.subr.bf16.mxu0 %v3008
  %3463 = vmatpush1.bf16.msra.mxu0 %v3007
  %3464 = vmatprep.subr.bf16.mxu0 %v3010
  %3465 = vmatpush1.bf16.msra.mxu0 %v3009
  %3466 = vmatprep.subr.bf16.mxu0 %v3012
  %3467 = vmatpush1.bf16.msra.mxu0 %v3011
  %3468 = vmatprep.subr.bf16.mxu0 %v3134
  %3469 = vmatpush1.bf16.msra.mxu0 %v3131
  %3470 = vmatprep.subr.bf16.mxu0 0
  %3471 = vmatpush1.bf16.msra.mxu0 0
  %3472 = vmatprep.subr.bf16.mxu0 0
  %3473 = vmatpush1.bf16.msra.mxu0 0
  %3474 = vmatprep.subr.bf16.mxu0 0
  %3475 = vmatpush1.bf16.msra.mxu0 0
  %3476 = vmatprep.subr.bf16.mxu0 0
  %3477 = vmatpush1.bf16.msra.mxu0 0
  %3478 = vmatprep.subr.bf16.mxu0 0
  %3479 = vmatpush1.bf16.msra.mxu0 0
  %3480 = vmatprep.subr.bf16.mxu0 0
  %3481 = vmatpush1.bf16.msra.mxu0 0
  %3482 = vmatprep.subr.bf16.mxu0 0
  %3483 = vmatpush1.bf16.msra.mxu0 0
  %3484 = vmatprep.subr.bf16.mxu0 0
  %3485 = vmatpush1.bf16.msra.mxu0 0
  %3486 = vmatprep.subr.bf16.mxu0 0
  %3487 = vmatpush1.bf16.msra.mxu0 0
  %3488 = vmatprep.subr.bf16.mxu0 0
  %3489 = vmatpush1.bf16.msra.mxu0 0
  %3490 = vmatprep.mubr.bf16.mxu0 0
  %3491 = vmatmul.mubr.bf16.gmra.mrb[0].mxu0 %v3091
  %v3492 = vpop.f32.mrb[0].mxu0
  %v3493 = vadd.f32 %v3332, %v3492
  %v3494 = vpop.f32.mrb[0].mxu0
  %v3495 = vadd.f32 %v3334, %v3494
  %v3496 = vpop.f32.mrb[0].mxu0
  %v3497 = vadd.f32 %v3336, %v3496
  %v3498 = vpop.f32.mrb[0].mxu0
  %v3499 = vadd.f32 %v3338, %v3498
  %3500 = vmatprep.mubr.bf16.mxu0 0
  %3501 = vmatmul.mubr.bf16.gmra.mrb[0].mxu0 %v3094
  %v3502 = vpop.f32.mrb[0].mxu0
  %v3503 = vadd.f32 %v3342, %v3502
  %v3504 = vpop.f32.mrb[0].mxu0
  %v3505 = vadd.f32 %v3344, %v3504
  %v3506 = vpop.f32.mrb[0].mxu0
  %v3507 = vadd.f32 %v3346, %v3506
  %v3508 = vpop.f32.mrb[0].mxu0
  %v3509 = vadd.f32 %v3348, %v3508
  %3510 = vmatprep.mubr.bf16.mxu0 0
  %3511 = vmatmul.mubr.bf16.gmra.mrb[0].mxu0 %v3097
  %v3512 = vpop.f32.mrb[0].mxu0
  %v3513 = vadd.f32 %v3352, %v3512
  %v3514 = vpop.f32.mrb[0].mxu0
  %v3515 = vadd.f32 %v3354, %v3514
  %v3516 = vpop.f32.mrb[0].mxu0
  %v3517 = vadd.f32 %v3356, %v3516
  %v3518 = vpop.f32.mrb[0].mxu0
  %v3519 = vadd.f32 %v3358, %v3518
  %3520 = vmatprep.mubr.bf16.mxu0 0
  %3521 = vmatmul.mubr.bf16.gmra.mrb[0].mxu0 %v3100
  %v3522 = vpop.f32.mrb[0].mxu0
  %v3523 = vadd.f32 %v3362, %v3522
  %v3524 = vpop.f32.mrb[0].mxu0
  %v3525 = vadd.f32 %v3364, %v3524
  %v3526 = vpop.f32.mrb[0].mxu0
  %v3527 = vadd.f32 %v3366, %v3526
  %v3528 = vpop.f32.mrb[0].mxu0
  %v3529 = vadd.f32 %v3368, %v3528
  %3530 = vmatprep.mubr.bf16.mxu0 0
  %3531 = vmatmul.mubr.bf16.gmra.mrb[0].mxu0 %v3103
  %v3532 = vpop.f32.mrb[0].mxu0
  %v3533 = vpop.f32.mrb[0].mxu0
  %v3534 = vpop.f32.mrb[0].mxu0
  %v3535 = vpop.f32.mrb[0].mxu0
  %3536 = vmatprep.mubr.bf16.mxu0 0
  %3537 = vmatmul.mubr.bf16.gmra.mrb[0].mxu0 %v3106
  %v3538 = vpop.f32.mrb[0].mxu0
  %v3539 = vpop.f32.mrb[0].mxu0
  %v3540 = vpop.f32.mrb[0].mxu0
  %v3541 = vpop.f32.mrb[0].mxu0
  %3542 = vmatprep.mubr.bf16.mxu0 0
  %3543 = vmatmul.mubr.bf16.gmra.mrb[0].mxu0 %v3109
  %v3544 = vpop.f32.mrb[0].mxu0
  %v3545 = vpop.f32.mrb[0].mxu0
  %v3546 = vpop.f32.mrb[0].mxu0
  %v3547 = vpop.f32.mrb[0].mxu0
  %3548 = vmatprep.mubr.bf16.mxu0 0
  %3549 = vmatmul.mubr.bf16.gmra.mrb[0].mxu0 %v3109
  %v3550 = vpop.f32.mrb[0].mxu0
  %v3551 = vpop.f32.mrb[0].mxu0
  %v3552 = vpop.f32.mrb[0].mxu0
  %v3553 = vpop.f32.mrb[0].mxu0
  %3554 = vmatprep.mubr.bf16.mxu0 0
  %3555 = vmatmul.mubr.bf16.gmra.mrb[0].mxu0 %v3112
  %v3556 = vpop.f32.mrb[0].mxu0
  %v3557 = vadd.f32 %v3396, %v3556
  %v3558 = vpop.f32.mrb[0].mxu0
  %v3559 = vadd.f32 %v3398, %v3558
  %v3560 = vpop.f32.mrb[0].mxu0
  %v3561 = vadd.f32 %v3400, %v3560
  %v3562 = vpop.f32.mrb[0].mxu0
  %v3563 = vadd.f32 %v3402, %v3562
  %3564 = vmatprep.mubr.bf16.mxu0 0
  %3565 = vmatmul.mubr.bf16.gmra.mrb[0].mxu0 %v3115
  %v3566 = vpop.f32.mrb[0].mxu0
  %v3567 = vadd.f32 %v3406, %v3566
  %v3568 = vpop.f32.mrb[0].mxu0
  %v3569 = vadd.f32 %v3408, %v3568
  %v3570 = vpop.f32.mrb[0].mxu0
  %v3571 = vadd.f32 %v3410, %v3570
  %v3572 = vpop.f32.mrb[0].mxu0
  %v3573 = vadd.f32 %v3412, %v3572
  %3574 = vmatprep.mubr.bf16.mxu0 0
  %3575 = vmatmul.mubr.bf16.gmra.mrb[0].mxu0 %v3118
  %v3576 = vpop.f32.mrb[0].mxu0
  %v3577 = vadd.f32 %v3416, %v3576
  %v3578 = vpop.f32.mrb[0].mxu0
  %v3579 = vadd.f32 %v3418, %v3578
  %v3580 = vpop.f32.mrb[0].mxu0
  %v3581 = vadd.f32 %v3420, %v3580
  %v3582 = vpop.f32.mrb[0].mxu0
  %v3583 = vadd.f32 %v3422, %v3582
  %3584 = vmatprep.mubr.bf16.mxu0 0
  %3585 = vmatmul.mubr.bf16.gmra.mrb[0].mxu0 %v3121
  %v3586 = vpop.f32.mrb[0].mxu0
  %v3587 = vadd.f32 %v3426, %v3586
  %v3588 = vpop.f32.mrb[0].mxu0
  %v3589 = vadd.f32 %v3428, %v3588
  %v3590 = vpop.f32.mrb[0].mxu0
  %v3591 = vadd.f32 %v3430, %v3590
  %v3592 = vpop.f32.mrb[0].mxu0
  %v3593 = vadd.f32 %v3432, %v3592
  %3594 = vmatprep.mubr.bf16.mxu0 0
  %3595 = vmatmul.mubr.bf16.gmra.mrb[0].mxu0 %v3124
  %v3596 = vpop.f32.mrb[0].mxu0
  %v3597 = vpop.f32.mrb[0].mxu0
  %v3598 = vpop.f32.mrb[0].mxu0
  %v3599 = vpop.f32.mrb[0].mxu0
  %3600 = vmatprep.mubr.bf16.mxu0 0
  %3601 = vmatmul.mubr.bf16.gmra.mrb[0].mxu0 %v3127
  %v3602 = vpop.f32.mrb[0].mxu0
  %v3603 = vpop.f32.mrb[0].mxu0
  %v3604 = vpop.f32.mrb[0].mxu0
  %v3605 = vpop.f32.mrb[0].mxu0
  %3606 = vmatprep.mubr.bf16.mxu0 0
  %3607 = vmatmul.mubr.bf16.gmra.mrb[0].mxu0 %v3109
  %v3608 = vpop.f32.mrb[0].mxu0
  %v3609 = vpop.f32.mrb[0].mxu0
  %v3610 = vpop.f32.mrb[0].mxu0
  %v3611 = vpop.f32.mrb[0].mxu0
  %3612 = vmatprep.mubr.bf16.mxu0 0
  %3613 = vmatmul.mubr.bf16.gmra.mrb[0].mxu0 %v3109
  %v3614 = vpop.f32.mrb[0].mxu0
  %v3615 = vpop.f32.mrb[0].mxu0
  %v3616 = vpop.f32.mrb[0].mxu0
  %v3617 = vpop.f32.mrb[0].mxu0
  %3618 = vdwg.mxu0
  %3651 = vrot.lane.b32.xlu0 %v3493, 48
  %v3652 = vpop.permute.xlu0 %3651
  %3653 = vrot.lane.b32.xlu0 %v3495, 48
  %v3654 = vpop.permute.xlu0 %3653
  %3655 = vrot.lane.b32.xlu0 %v3497, 48
  %v3656 = vpop.permute.xlu0 %3655
  %3657 = vrot.lane.b32.xlu0 %v3499, 48
  %v3658 = vpop.permute.xlu0 %3657
  %3659 = vrot.lane.b32.xlu0 %v3503, 48
  %v3660 = vpop.permute.xlu0 %3659
  %3661 = vrot.lane.b32.xlu0 %v3505, 48
  %v3662 = vpop.permute.xlu0 %3661
  %3663 = vrot.lane.b32.xlu0 %v3507, 48
  %v3664 = vpop.permute.xlu0 %3663
  %3665 = vrot.lane.b32.xlu0 %v3509, 48
  %v3666 = vpop.permute.xlu0 %3665
  %3667 = vrot.lane.b32.xlu0 %v3513, 48
  %v3668 = vpop.permute.xlu0 %3667
  %3669 = vrot.lane.b32.xlu0 %v3515, 48
  %v3670 = vpop.permute.xlu0 %3669
  %3671 = vrot.lane.b32.xlu0 %v3517, 48
  %v3672 = vpop.permute.xlu0 %3671
  %3673 = vrot.lane.b32.xlu0 %v3519, 48
  %v3674 = vpop.permute.xlu0 %3673
  %3675 = vrot.lane.b32.xlu0 %v3523, 48
  %v3676 = vpop.permute.xlu0 %3675
  %3677 = vrot.lane.b32.xlu0 %v3525, 48
  %v3678 = vpop.permute.xlu0 %3677
  %3679 = vrot.lane.b32.xlu0 %v3527, 48
  %v3680 = vpop.permute.xlu0 %3679
  %3681 = vrot.lane.b32.xlu0 %v3529, 48
  %v3682 = vpop.permute.xlu0 %3681
  %3683 = vrot.lane.b32.xlu0 %v3557, 48
  %v3684 = vpop.permute.xlu0 %3683
  %3685 = vrot.lane.b32.xlu0 %v3559, 48
  %v3686 = vpop.permute.xlu0 %3685
  %3687 = vrot.lane.b32.xlu0 %v3561, 48
  %v3688 = vpop.permute.xlu0 %3687
  %3689 = vrot.lane.b32.xlu0 %v3563, 48
  %v3690 = vpop.permute.xlu0 %3689
  %3691 = vrot.lane.b32.xlu0 %v3567, 48
  %v3692 = vpop.permute.xlu0 %3691
  %3693 = vrot.lane.b32.xlu0 %v3569, 48
  %v3694 = vpop.permute.xlu0 %3693
  %3695 = vrot.lane.b32.xlu0 %v3571, 48
  %v3696 = vpop.permute.xlu0 %3695
  %3697 = vrot.lane.b32.xlu0 %v3573, 48
  %v3698 = vpop.permute.xlu0 %3697
  %3699 = vrot.lane.b32.xlu0 %v3577, 48
  %v3700 = vpop.permute.xlu0 %3699
  %3701 = vrot.lane.b32.xlu0 %v3579, 48
  %v3702 = vpop.permute.xlu0 %3701
  %3703 = vrot.lane.b32.xlu0 %v3581, 48
  %v3704 = vpop.permute.xlu0 %3703
  %3705 = vrot.lane.b32.xlu0 %v3583, 48
  %v3706 = vpop.permute.xlu0 %3705
  %3707 = vrot.lane.b32.xlu0 %v3587, 48
  %v3708 = vpop.permute.xlu0 %3707
  %3709 = vrot.lane.b32.xlu0 %v3589, 48
  %v3710 = vpop.permute.xlu0 %3709
  %3711 = vrot.lane.b32.xlu0 %v3591, 48
  %v3712 = vpop.permute.xlu0 %3711
  %3713 = vrot.lane.b32.xlu0 %v3593, 48
  %v3714 = vpop.permute.xlu0 %3713
  %vm3715 = vcmask 392192
  %v3716 = vsel %vm3715, %v3652, %v3654
  %v3717 = vsel %vm3715, %v3656, %v3658
  %v3718 = vsel %vm3715, %v3660, %v3662
  %v3719 = vsel %vm3715, %v3664, %v3666
  %v3720 = vsel %vm3715, %v3668, %v3670
  %v3721 = vsel %vm3715, %v3672, %v3674
  %v3722 = vsel %vm3715, %v3676, %v3678
  %v3723 = vsel %vm3715, %v3680, %v3682
  %v3724 = vsel %vm3715, %v3684, %v3686
  %v3725 = vsel %vm3715, %v3688, %v3690
  %v3726 = vsel %vm3715, %v3692, %v3694
  %v3727 = vsel %vm3715, %v3696, %v3698
  %v3728 = vsel %vm3715, %v3700, %v3702
  %v3729 = vsel %vm3715, %v3704, %v3706
  %v3730 = vsel %vm3715, %v3708, %v3710
  %v3731 = vsel %vm3715, %v3712, %v3714
  %v3748 = vmax.f32 %v3493, %v3716
  %v3749 = vmax.f32 %v3497, %v3717
  %v3750 = vmax.f32 %v3503, %v3718
  %v3751 = vmax.f32 %v3507, %v3719
  %v3752 = vmax.f32 %v3513, %v3720
  %v3753 = vmax.f32 %v3517, %v3721
  %v3754 = vmax.f32 %v3523, %v3722
  %v3755 = vmax.f32 %v3527, %v3723
  %v3756 = vmax.f32 %v3557, %v3724
  %v3757 = vmax.f32 %v3561, %v3725
  %v3758 = vmax.f32 %v3567, %v3726
  %v3759 = vmax.f32 %v3571, %v3727
  %v3760 = vmax.f32 %v3577, %v3728
  %v3761 = vmax.f32 %v3581, %v3729
  %v3762 = vmax.f32 %v3587, %v3730
  %v3763 = vmax.f32 %v3591, %v3731
  %v3764 = vmax.f32 %v3748, %v3756
  %v3765 = vmax.f32 %v3749, %v3757
  %v3766 = vmax.f32 %v3750, %v3758
  %v3767 = vmax.f32 %v3751, %v3759
  %v3768 = vmax.f32 %v3752, %v3760
  %v3769 = vmax.f32 %v3753, %v3761
  %v3770 = vmax.f32 %v3754, %v3762
  %v3771 = vmax.f32 %v3755, %v3763
  %v3772 = vld [vmem:[%s4] sm:$0x1]
  %v3774 = vlaneseq
  %v3775 = vshrl.u32 %v3774, 7
  %v3776 = vsub.s32 0, %v3775
  %v3777 = vrot.slane %v3772, %v3776
  %v3779 = vadd.f32 %v3764, %v3777
  %v3780 = vadd.f32 %v3765, %v3777
  %v3781 = vadd.f32 %v3766, %v3777
  %v3782 = vadd.f32 %v3767, %v3777
  %v3783 = vadd.f32 %v3768, %v3777
  %v3784 = vadd.f32 %v3769, %v3777
  %v3785 = vadd.f32 %v3770, %v3777
  %v3786 = vadd.f32 %v3771, %v3777
  %v3787 = vmax.f32 %v3779, 0.0
  %v3788 = vmax.f32 %v3780, 0.0
  %v3789 = vmax.f32 %v3781, 0.0
  %v3790 = vmax.f32 %v3782, 0.0
  %v3791 = vmax.f32 %v3783, 0.0
  %v3792 = vmax.f32 %v3784, 0.0
  %v3793 = vmax.f32 %v3785, 0.0
  %v3794 = vmax.f32 %v3786, 0.0
  %3797 = vrot.lane.b32.xlu0 %v3789, 80
  %v3798 = vpop.permute.xlu0 %3797
  %3799 = vrot.lane.b32.xlu0 %v3790, 80
  %v3800 = vpop.permute.xlu0 %3799
  %3805 = vrot.lane.b32.xlu0 %v3791, 32
  %v3806 = vpop.permute.xlu0 %3805
  %3807 = vrot.lane.b32.xlu0 %v3792, 32
  %v3808 = vpop.permute.xlu0 %3807
  %3813 = vrot.lane.b32.xlu0 %v3793, 112
  %v3814 = vpop.permute.xlu0 %3813
  %3815 = vrot.lane.b32.xlu0 %v3794, 112
  %v3816 = vpop.permute.xlu0 %3815
  %vm3819 = vcmask 654336
  %v3820 = vsel %vm3819, %v3787, %v3798
  %v3821 = vsel %vm3819, %v3788, %v3800
  %vm3822 = vcmask 261120
  %v3823 = vsel %vm3822, %v3798, %v3806
  %v3824 = vsel %vm3822, %v3800, %v3808
  %v3825 = vsel %vm393, %v3823, %v3814
  %v3826 = vsel %vm393, %v3824, %v3816
  %v3827 = vpack.c.bf16 %v3821, %v3820
  %v3828 = vpack.c.bf16 %v3826, %v3825
  %v3829 = vpack.c.bf16 %v3816, %v3814
  %v3830 = vld [vmem:[%s5] sm:$0xf]
  %v3831 = vld [vmem:[%s5 + $0x4] sm:$0xf]
  %v3832 = vld [vmem:[%s5 + $0x8] sm:$0xf]
  %v3833 = vld [vmem:[%s5 + $0xc] sm:$0xf]
  %v3834 = vld [vmem:[%s5 + $0x10] sm:$0xf]
  %v3835 = vld [vmem:[%s5 + $0x14] sm:$0xf]
  %v3836 = vld [vmem:[%s5 + $0x18] sm:$0xf]
  %v3837 = vld [vmem:[%s5 + $0x1c] sm:$0xf]
  %v3838 = vld [vmem:[%s5 + $0x20] sm:$0xf]
  %v3839 = vld [vmem:[%s5 + $0x24] sm:$0xf]
  %v3840 = vld [vmem:[%s5 + $0x28] sm:$0xf]
  %v3841 = vld [vmem:[%s5 + $0x2c] sm:$0xf]
  %v3842 = vld [vmem:[%s5 + $0x30] sm:$0xf]
  %v3843 = vld [vmem:[%s5 + $0x34] sm:$0xf]
  %v3844 = vld [vmem:[%s5 + $0x38] sm:$0xf]
  %v3845 = vld [vmem:[%s5 + $0x3c] sm:$0xf]
  %v3846 = vld [vmem:[%s5 + $0x40] sm:$0xf]
  %v3847 = vld [vmem:[%s5 + $0x44] sm:$0xf]
  %v3848 = vld [vmem:[%s5 + $0x48] sm:$0xf]
  %v3849 = vld [vmem:[%s5 + $0x4c] sm:$0xf]
  %v3850 = vld [vmem:[%s5 + $0x50] sm:$0xf]
  %v3851 = vld [vmem:[%s5 + $0x54] sm:$0xf]
  %v3852 = vld [vmem:[%s5 + $0x58] sm:$0xf]
  %v3853 = vld [vmem:[%s5 + $0x5c] sm:$0xf]
  %v3854 = vld [vmem:[%s5 + $0x60] sm:$0xf]
  %v3855 = vld [vmem:[%s5 + $0x64] sm:$0xf]
  %v3856 = vld [vmem:[%s5 + $0x68] sm:$0xf]
  %v3857 = vld [vmem:[%s5 + $0x6c] sm:$0xf]
  %v3858 = vld [vmem:[%s5 + $0x70] sm:$0xf]
  %v3859 = vld [vmem:[%s5 + $0x74] sm:$0xf]
  %v3860 = vld [vmem:[%s5 + $0x78] sm:$0xf]
  %v3861 = vld [vmem:[%s5 + $0x7c] sm:$0xf]
  %v3862 = vld [vmem:[%s5 + $0x80] sm:$0xf]
  %v3863 = vld [vmem:[%s5 + $0x84] sm:$0xf]
  %v3864 = vld [vmem:[%s5 + $0x88] sm:$0xf]
  %v3865 = vld [vmem:[%s5 + $0x8c] sm:$0xf]
  %v3866 = vld [vmem:[%s5 + $0x90] sm:$0xf]
  %v3867 = vld [vmem:[%s5 + $0x94] sm:$0xf]
  %v3868 = vld [vmem:[%s5 + $0x98] sm:$0xf]
  %v3869 = vld [vmem:[%s5 + $0x9c] sm:$0xf]
  %v3870 = vld [vmem:[%s6] sm:$0x1]
  %v3872 = vlaneseq
  %v3873 = vshrl.u32 %v3872, 7
  %v3874 = vsub.s32 0, %v3873
  %v3875 = vrot.slane %v3870, %v3874
  %v3917 = vunpack.c.l.b16 %v3830
  %v3918 = vunpack.c.l.b16 %v3831
  %v3919 = vunpack.c.l.b16 %v3832
  %v3920 = vunpack.c.l.b16 %v3833
  %v3921 = vunpack.c.l.b16 %v3834
  %v3922 = vunpack.c.l.b16 %v3835
  %v3923 = vunpack.c.l.b16 %v3836
  %v3924 = vunpack.c.l.b16 %v3837
  %v3925 = vunpack.c.l.b16 %v3838
  %v3926 = vunpack.c.l.b16 %v3839
  %v3927 = vunpack.c.l.b16 %v3840
  %v3928 = vunpack.c.l.b16 %v3841
  %v3929 = vunpack.c.l.b16 %v3842
  %v3930 = vunpack.c.l.b16 %v3843
  %v3931 = vunpack.c.l.b16 %v3844
  %v3932 = vunpack.c.l.b16 %v3845
  %v3933 = vunpack.c.l.b16 %v3846
  %v3934 = vunpack.c.l.b16 %v3847
  %v3935 = vunpack.c.l.b16 %v3848
  %v3936 = vunpack.c.l.b16 %v3849
  %v3937 = vunpack.c.l.b16 %v3850
  %v3938 = vunpack.c.l.b16 %v3851
  %v3939 = vunpack.c.l.b16 %v3852
  %v3940 = vunpack.c.l.b16 %v3853
  %v3941 = vunpack.c.l.b16 %v3854
  %v3942 = vunpack.c.l.b16 %v3855
  %v3943 = vunpack.c.l.b16 %v3856
  %v3944 = vunpack.c.l.b16 %v3857
  %v3945 = vunpack.c.l.b16 %v3858
  %v3946 = vunpack.c.l.b16 %v3859
  %v3947 = vunpack.c.l.b16 %v3860
  %v3948 = vunpack.c.l.b16 %v3861
  %v3949 = vunpack.c.l.b16 %v3862
  %v3950 = vunpack.c.l.b16 %v3863
  %v3951 = vunpack.c.l.b16 %v3864
  %v3952 = vunpack.c.l.b16 %v3865
  %v3953 = vunpack.c.l.b16 %v3866
  %v3954 = vunpack.c.l.b16 %v3867
  %v3955 = vunpack.c.l.b16 %v3868
  %v3956 = vunpack.c.l.b16 %v3869
  %v3957 = vpack.c.b16 %v3918, %v3917
  %v3958 = vpack.c.b16 %v3920, %v3919
  %v3959 = vpack.c.b16 %v3922, %v3921
  %v3960 = vpack.c.b16 %v3924, %v3923
  %v3961 = vpack.c.b16 %v3926, %v3925
  %v3962 = vpack.c.b16 %v3928, %v3927
  %v3963 = vpack.c.b16 %v3930, %v3929
  %v3964 = vpack.c.b16 %v3932, %v3931
  %v3965 = vpack.c.b16 %v3934, %v3933
  %v3966 = vpack.c.b16 %v3936, %v3935
  %v3967 = vpack.c.b16 %v3938, %v3937
  %v3968 = vpack.c.b16 %v3940, %v3939
  %v3969 = vpack.c.b16 %v3942, %v3941
  %v3970 = vpack.c.b16 %v3944, %v3943
  %v3971 = vpack.c.b16 %v3946, %v3945
  %v3972 = vpack.c.b16 %v3948, %v3947
  %v3973 = vpack.c.b16 %v3950, %v3949
  %v3974 = vpack.c.b16 %v3952, %v3951
  %v3975 = vpack.c.b16 %v3954, %v3953
  %v3976 = vpack.c.b16 %v3956, %v3955
  %vm3997 = vcmask 523264
  %v3999 = vsel %vm3997, %v3829, 0
  %4001 = vmatprep.subr.bf16.mxu0 0
  %4002 = vmatpush1.bf16.msra.mxu0 %v3957
  %4003 = vmatprep.subr.bf16.mxu0 0
  %4004 = vmatpush1.bf16.msra.mxu0 %v3958
  %4005 = vmatprep.subr.bf16.mxu0 0
  %4006 = vmatpush1.bf16.msra.mxu0 %v3959
  %4007 = vmatprep.subr.bf16.mxu0 0
  %4008 = vmatpush1.bf16.msra.mxu0 %v3960
  %4009 = vmatprep.subr.bf16.mxu0 0
  %4010 = vmatpush1.bf16.msra.mxu0 %v3961
  %4011 = vmatprep.subr.bf16.mxu0 0
  %4012 = vmatpush1.bf16.msra.mxu0 %v3962
  %4013 = vmatprep.subr.bf16.mxu0 0
  %4014 = vmatpush1.bf16.msra.mxu0 %v3963
  %4015 = vmatprep.subr.bf16.mxu0 0
  %4016 = vmatpush1.bf16.msra.mxu0 %v3964
  %4017 = vmatprep.subr.bf16.mxu0 0
  %4018 = vmatpush1.bf16.msra.mxu0 %v3965
  %4019 = vmatprep.subr.bf16.mxu0 0
  %4020 = vmatpush1.bf16.msra.mxu0 %v3966
  %4021 = vmatprep.subr.bf16.mxu0 0
  %4022 = vmatpush1.bf16.msra.mxu0 %v3967
  %4023 = vmatprep.subr.bf16.mxu0 0
  %4024 = vmatpush1.bf16.msra.mxu0 %v3968
  %4025 = vmatprep.subr.bf16.mxu0 0
  %4026 = vmatpush1.bf16.msra.mxu0 %v3969
  %4027 = vmatprep.subr.bf16.mxu0 0
  %4028 = vmatpush1.bf16.msra.mxu0 %v3970
  %4029 = vmatprep.subr.bf16.mxu0 0
  %4030 = vmatpush1.bf16.msra.mxu0 %v3971
  %4031 = vmatprep.subr.bf16.mxu0 0
  %4032 = vmatpush1.bf16.msra.mxu0 %v3972
  %4033 = vmatprep.mubr.bf16.mxu0 %v3828
  %4034 = vmatmul.mubr.bf16.gmra.mrb[0].mxu0 %v3827
  %v4035 = vpop.f32.mrb[0].mxu0
  %v4036 = vadd.f32 %v3875, %v4035
  %v4037 = vpop.f32.mrb[0].mxu0
  %v4038 = vpop.f32.mrb[0].mxu0
  %v4039 = vadd.f32 %v3875, %v4038
  %v4040 = vpop.f32.mrb[0].mxu0
  %4041 = vdwg.mxu0
  %4042 = vmatprep.subr.bf16.mxu0 0
  %4043 = vmatpush1.bf16.msra.mxu0 %v3973
  %4044 = vmatprep.subr.bf16.mxu0 0
  %4045 = vmatpush1.bf16.msra.mxu0 %v3974
  %4046 = vmatprep.subr.bf16.mxu0 0
  %4047 = vmatpush1.bf16.msra.mxu0 %v3975
  %4048 = vmatprep.subr.bf16.mxu0 0
  %4049 = vmatpush1.bf16.msra.mxu0 %v3976
  %4050 = vmatprep.subr.bf16.mxu0 0
  %4051 = vmatpush1.bf16.msra.mxu0 0
  %4052 = vmatprep.subr.bf16.mxu0 0
  %4053 = vmatpush1.bf16.msra.mxu0 0
  %4054 = vmatprep.subr.bf16.mxu0 0
  %4055 = vmatpush1.bf16.msra.mxu0 0
  %4056 = vmatprep.subr.bf16.mxu0 0
  %4057 = vmatpush1.bf16.msra.mxu0 0
  %4058 = vmatprep.subr.bf16.mxu0 0
  %4059 = vmatpush1.bf16.msra.mxu0 0
  %4060 = vmatprep.subr.bf16.mxu0 0
  %4061 = vmatpush1.bf16.msra.mxu0 0
  %4062 = vmatprep.subr.bf16.mxu0 0
  %4063 = vmatpush1.bf16.msra.mxu0 0
  %4064 = vmatprep.subr.bf16.mxu0 0
  %4065 = vmatpush1.bf16.msra.mxu0 0
  %4066 = vmatprep.subr.bf16.mxu0 0
  %4067 = vmatpush1.bf16.msra.mxu0 0
  %4068 = vmatprep.subr.bf16.mxu0 0
  %4069 = vmatpush1.bf16.msra.mxu0 0
  %4070 = vmatprep.subr.bf16.mxu0 0
  %4071 = vmatpush1.bf16.msra.mxu0 0
  %4072 = vmatprep.subr.bf16.mxu0 0
  %4073 = vmatpush1.bf16.msra.mxu0 0
  %4074 = vmatprep.mubr.bf16.mxu0 0
  %4075 = vmatmul.mubr.bf16.gmra.mrb[0].mxu0 %v3999
  %v4076 = vpop.f32.mrb[0].mxu0
  %v4077 = vadd.f32 %v4036, %v4076
  %v4078 = vpop.f32.mrb[0].mxu0
  %v4079 = vpop.f32.mrb[0].mxu0
  %v4080 = vadd.f32 %v4039, %v4079
  %v4081 = vpop.f32.mrb[0].mxu0
  %4082 = vdwg.mxu0
  %v4083 = vmax.f32 %v4077, 0.0
  %v4084 = vmax.f32 %v4080, 0.0
  %v4085 = vpack.c.bf16 %v4084, %v4083
  %v4086 = vld [vmem:[%s7] sm:$0xf]
  %v4087 = vld [vmem:[%s7 + $0x4] sm:$0xf]
  %v4088 = vld [vmem:[%s7 + $0x8] sm:$0xf]
  %v4089 = vld [vmem:[%s7 + $0xc] sm:$0xf]
  %v4090 = vld [vmem:[%s7 + $0x10] sm:$0xf]
  %v4091 = vld [vmem:[%s7 + $0x14] sm:$0xf]
  %v4092 = vld [vmem:[%s7 + $0x18] sm:$0x1]
  %v4093 = vld [vmem:[%s8] sm:$0x1]
  %v4095 = vlaneseq
  %v4096 = vshrl.u32 %v4095, 7
  %v4097 = vsub.s32 0, %v4096
  %v4098 = vrot.slane %v4093, %v4097
  %v4107 = vunpack.c.l.b16 %v4086
  %v4108 = vunpack.c.l.b16 %v4087
  %v4109 = vunpack.c.l.b16 %v4088
  %v4110 = vunpack.c.l.b16 %v4089
  %v4111 = vunpack.c.l.b16 %v4090
  %v4112 = vunpack.c.l.b16 %v4091
  %v4113 = vunpack.c.l.b16 %v4092
  %v4114 = vpack.c.b16 %v4108, %v4107
  %v4115 = vpack.c.b16 %v4110, %v4109
  %v4116 = vpack.c.b16 %v4112, %v4111
  %v4117 = vpack.c.b16 %v4113, %v4113
  %vm4121 = vcmask 408576
  %v4123 = vsel %vm4121, %v4085, 0
  %vm4125 = vcmask 1040384
  %v4127 = vsel %vm4125, %v4117, 0
  %4129 = vmatprep.subr.bf16.mxu0 0
  %4130 = vmatpush1.bf16.msra.mxu0 %v4114
  %4131 = vmatprep.subr.bf16.mxu0 0
  %4132 = vmatpush1.bf16.msra.mxu0 %v4115
  %4133 = vmatprep.subr.bf16.mxu0 0
  %4134 = vmatpush1.bf16.msra.mxu0 %v4116
  %4135 = vmatprep.subr.bf16.mxu0 0
  %4136 = vmatpush1.bf16.msra.mxu0 %v4127
  %4137 = vmatprep.subr.bf16.mxu0 0
  %4138 = vmatpush1.bf16.msra.mxu0 0
  %4139 = vmatprep.subr.bf16.mxu0 0
  %4140 = vmatpush1.bf16.msra.mxu0 0
  %4141 = vmatprep.subr.bf16.mxu0 0
  %4142 = vmatpush1.bf16.msra.mxu0 0
  %4143 = vmatprep.subr.bf16.mxu0 0
  %4144 = vmatpush1.bf16.msra.mxu0 0
  %4145 = vmatprep.subr.bf16.mxu0 0
  %4146 = vmatpush1.bf16.msra.mxu0 0
  %4147 = vmatprep.subr.bf16.mxu0 0
  %4148 = vmatpush1.bf16.msra.mxu0 0
  %4149 = vmatprep.subr.bf16.mxu0 0
  %4150 = vmatpush1.bf16.msra.mxu0 0
  %4151 = vmatprep.subr.bf16.mxu0 0
  %4152 = vmatpush1.bf16.msra.mxu0 0
  %4153 = vmatprep.subr.bf16.mxu0 0
  %4154 = vmatpush1.bf16.msra.mxu0 0
  %4155 = vmatprep.subr.bf16.mxu0 0
  %4156 = vmatpush1.bf16.msra.mxu0 0
  %4157 = vmatprep.subr.bf16.mxu0 0
  %4158 = vmatpush1.bf16.msra.mxu0 0
  %4159 = vmatprep.subr.bf16.mxu0 0
  %4160 = vmatpush1.bf16.msra.mxu0 0
  %4161 = vmatprep.mubr.bf16.mxu0 0
  %4162 = vmatmul.mubr.bf16.gmra.mrb[0].mxu0 %v4123
  %v4163 = vpop.f32.mrb[0].mxu0
  %v4164 = vadd.f32 %v4098, %v4163
  %v4165 = vpop.f32.mrb[0].mxu0
  %v4166 = vpop.f32.mrb[0].mxu0
  %v4167 = vadd.f32 %v4098, %v4166
  %v4168 = vpop.f32.mrb[0].mxu0
  %4169 = vdwg.mxu0
  %vm4170 = vcmask 80896
  %4171 = vst.msk [vmem:[%s9] sm:$0xff] %vm4170, %v4164
  %4172 = vst.msk [vmem:[%s9 + $0x8] sm:$0xff] %vm4170, %v4167
  // Predicated region
  $region38: #{lenet_forward.1} parent=0 // pred_check
    _
  $region39: #{lenet_forward.1} parent=0 // pred_check_branch
    %4174 = sbr.rel (0) target = $region41
  $region40: #{lenet_forward.1} parent=0 // pred_region
    _
  $region41: #{lenet_forward.1} parent=0 // pred_fallthru
    _
  // Predicated region
  $region42: #{lenet_forward.1} parent=0 // pred_check
    _
  $region43: #{lenet_forward.1} parent=0 // pred_check_branch
    %4176 = sbr.rel (0) target = $region45
  $region44: #{lenet_forward.1} parent=0 // pred_region
    _
  $region45: #{lenet_forward.1} parent=0 // pred_fallthru
    _

</llo_original>
